<compile_context>
chip_gen: v5e
topology: v5e:2x2
jax: 0.10.0
libtpu: 0.0.40
codegen_flags: <defaults>
</compile_context>

<pallas_src>
from functools import partial

import jax
import jax.numpy as jnp
import numpy as np
from jax import lax
from jax.experimental import pallas as pl
from jax.experimental.pallas import tpu as pltpu

EPS = 1e-5
LANE = 128


def _resblock_kernel(x_ref, w1_ref, w2_ref, out_ref, xpad_ref, patch_ref,
                     *, H, W, C, mm_dtype):
    """Fused ResnetBlock for one batch sample.

    x_ref:     (1, H, W, C)    activation block (NHWC, C padded to 128-mult)
    w1_ref:    (9*C, C)        conv1 weights, im2col layout, mm_dtype
    w2_ref:    (9*C, C)        conv2 weights, im2col layout, mm_dtype
    out_ref:   (1, H, W, C)
    xpad_ref:  (H+2, W+2, C)   VMEM scratch: reflect-padded conv input (f32)
    patch_ref: (H, W, 9*C)     VMEM scratch: im2col patches (mm_dtype)
    """

    def conv3x3_instnorm(v, w_ref):
        # v: (H, W, C) float32. Returns (H*W, C) float32, InstanceNorm'ed.
        # ---- reflect pad (pad=1) into VMEM scratch ----
        xpad_ref[1:H + 1, 1:W + 1, :] = v
        xpad_ref[0:1, 1:W + 1, :] = v[1:2]                      # top    = row 1
        xpad_ref[H + 1:H + 2, 1:W + 1, :] = v[H - 2:H - 1]      # bottom = row H-2
        xpad_ref[:, 0:1, :] = xpad_ref[:, 2:3, :]               # left   = col 1
        xpad_ref[:, W + 1:W + 2, :] = xpad_ref[:, W - 1:W, :]   # right  = col W-2

        # ---- im2col into (H, W, 9*C); lane offsets are 128-aligned ----
        for dy in range(3):
            for dx in range(3):
                k = dy * 3 + dx
                patch_ref[:, :, k * C:(k + 1) * C] = (
                    xpad_ref[dy:dy + H, dx:dx + W, :].astype(mm_dtype))

        # ---- single MXU matmul, K = 9*C, f32 accumulation ----
        p = patch_ref[...].reshape(H * W, 9 * C)
        y = jnp.dot(p, w_ref[...], preferred_element_type=jnp.float32)

        # ---- InstanceNorm2d (affine=False, biased var); conv bias cancels ----
        mean = jnp.mean(y, axis=0, keepdims=True)
        d = y - mean
        var = jnp.mean(d * d, axis=0, keepdims=True)
        return d * lax.rsqrt(var + EPS)

    x = x_ref[0].astype(jnp.float32)                        # (H, W, C)
    h = jnp.maximum(conv3x3_instnorm(x, w1_ref), 0.0)       # conv1 + IN + ReLU
    y = conv3x3_instnorm(h.reshape(H, W, C), w2_ref)        # conv2 + IN
    out = x + y.reshape(H, W, C)                            # residual
    out_ref[...] = out.reshape(1, H, W, C).astype(out_ref.dtype)


def _prep_weight(w_hwio, c_pad, dtype):
    """(3,3,C,C) HWIO -> zero-pad channels to c_pad -> (9*c_pad, c_pad)."""
    c = w_hwio.shape[-1]
    w = jnp.pad(w_hwio, ((0, 0), (0, 0), (0, c_pad - c), (0, c_pad - c)))
    return w.reshape(9 * c_pad, c_pad).astype(dtype)


@partial(jax.jit, static_argnames=("matmul_dtype",))
def resnet_block_nhwc(x, w1_hwio, w2_hwio, *, matmul_dtype=jnp.float32):
    """Fused ResnetBlock. x: (N,H,W,C) NHWC; weights HWIO (3,3,C,C).

    Conv biases are intentionally not taken: a bias before
    InstanceNorm(affine=False) is an exact algebraic no-op.
    """
    N, H, W, C = x.shape
    assert H >= 2 and W >= 2, "reflect pad of 1 needs spatial dims >= 2"
    Cp = ((C + LANE - 1) // LANE) * LANE            # lane-dense channel padding
    xp = x if Cp == C else jnp.pad(x, ((0, 0), (0, 0), (0, 0), (0, Cp - C)))
    w1 = _prep_weight(w1_hwio, Cp, matmul_dtype)
    w2 = _prep_weight(w2_hwio, Cp, matmul_dtype)

    # VMEM budget: double-buffered in/out blocks + weights + scratch + margin.
    mm_bytes = np.dtype(matmul_dtype).itemsize
    act_bytes = H * W * Cp * np.dtype(xp.dtype).itemsize
    w_bytes = 2 * (9 * Cp * Cp) * mm_bytes
    scratch_bytes = (H + 2) * (W + 2) * Cp * 4 + H * W * 9 * Cp * mm_bytes
    est = 4 * act_bytes + w_bytes + scratch_bytes + (4 << 20)
    vmem_limit = int(min(64 * 2**20, max(32 * 2**20, est)))

    out = pl.pallas_call(
        partial(_resblock_kernel, H=H, W=W, C=Cp, mm_dtype=matmul_dtype),
        out_shape=jax.ShapeDtypeStruct((N, H, W, Cp), x.dtype),
        grid=(N,),
        in_specs=[
            pl.BlockSpec((1, H, W, Cp), lambda n: (n, 0, 0, 0)),
            pl.BlockSpec((9 * Cp, Cp), lambda n: (0, 0)),
            pl.BlockSpec((9 * Cp, Cp), lambda n: (0, 0)),
        ],
        out_specs=pl.BlockSpec((1, H, W, Cp), lambda n: (n, 0, 0, 0)),
        scratch_shapes=[
            pltpu.VMEM((H + 2, W + 2, Cp), jnp.float32),      # padded input
            pltpu.VMEM((H, W, 9 * Cp), matmul_dtype),         # im2col patches
        ],
        compiler_params=pltpu.CompilerParams(
            dimension_semantics=("parallel",),
            vmem_limit_bytes=vmem_limit),
    )(xp, w1, w2)
    return out if Cp == C else out[..., :C]


@partial(jax.jit, static_argnames=("matmul_dtype",))
def resnet_block_nchw(x_nchw, w1_hwio, b1, w2_hwio, b2, *,
                      matmul_dtype=jnp.float32):
    """NCHW (PyTorch-layout) drop-in wrapper. Biases accepted but ignored —
    exact no-op under InstanceNorm(affine=False). Prefer the NHWC entry point
    to avoid the two full-tensor transposes."""
    del b1, b2
    x = jnp.transpose(x_nchw, (0, 2, 3, 1))
    y = resnet_block_nhwc(x, w1_hwio, w2_hwio, matmul_dtype=matmul_dtype)
    return jnp.transpose(y, (0, 3, 1, 2))


# ---------------------------------------------------------------------------
# Pure-JAX reference (NHWC, matching PyTorch semantics incl. biases).
# ---------------------------------------------------------------------------
def resnet_block_ref_nhwc(x, w1, b1, w2, b2):
    def conv_in(v, w, b, relu):
        vp = jnp.pad(v, ((0, 0), (1, 1), (1, 1), (0, 0)), mode="reflect")
        y = lax.conv_general_dilated(
            vp, w, window_strides=(1, 1), padding="VALID",
            dimension_numbers=("NHWC", "HWIO", "NHWC"))
        y = y + b[None, None, None, :]
        mean = jnp.mean(y, axis=(1, 2), keepdims=True)
        var = jnp.var(y, axis=(1, 2), keepdims=True)
        y = (y - mean) * lax.rsqrt(var + EPS)
        return jnp.maximum(y, 0.0) if relu else y

    h = conv_in(x, w1, b1, relu=True)
    return x + conv_in(h, w2, b2, relu=False)


if __name__ == "__main__":
    N, C, H, W = 2, 4, 16, 16
    key = jax.random.PRNGKey(0)
    kx, kw1, kb1, kw2, kb2 = jax.random.split(key, 5)

    x_nhwc = jax.random.normal(kx, (N, H, W, C), jnp.float32)
    fan_in = C * 3 * 3
    bound = 1.0 / np.sqrt(fan_in)
    w1 = jax.random.uniform(kw1, (3, 3, C, C), jnp.float32, -bound, bound)
    b1 = jax.random.uniform(kb1, (C,), jnp.float32, -bound, bound)
    w2 = jax.random.uniform(kw2, (3, 3, C, C), jnp.float32, -bound, bound)
    b2 = jax.random.uniform(kb2, (C,), jnp.float32, -bound, bound)

    ref = jax.block_until_ready(resnet_block_ref_nhwc(x_nhwc, w1, b1, w2, b2))

    # f32 matmul path: should match the reference tightly (bias drop is exact).
    out = jax.block_until_ready(
        resnet_block_nhwc(x_nhwc, w1, w2, matmul_dtype=jnp.float32))
    assert out.shape == (N, H, W, C)
    np.testing.assert_allclose(np.asarray(out), np.asarray(ref),
                               rtol=1e-4, atol=1e-4)

    # bf16 matmul operands / f32 accumulation & norm: loose sanity check.
    out_bf16 = jax.block_until_ready(
        resnet_block_nhwc(x_nhwc, w1, w2, matmul_dtype=jnp.bfloat16))
    np.testing.assert_allclose(np.asarray(out_bf16), np.asarray(ref),
                               rtol=1e-1, atol=1e-1)

    # NCHW drop-in wrapper (PyTorch layout).
    x_nchw = jnp.transpose(x_nhwc, (0, 3, 1, 2))
    out_nchw = jax.block_until_ready(
        resnet_block_nchw(x_nchw, w1, b1, w2, b2, matmul_dtype=jnp.float32))
    np.testing.assert_allclose(np.asarray(out_nchw),
                               np.asarray(jnp.transpose(ref, (0, 3, 1, 2))),
                               rtol=1e-4, atol=1e-4)

    print("KERNEL_OK")
</pallas_src>

<mosaic_0001>
module attributes {stable_mosaic.version = 11 : i64} {
  func.func @_resblock_kernel(%arg0: i32, %arg1: memref<1x16x16x128xf32, #tpu.memory_space<vmem>>, %arg2: memref<1152x128xf32, #tpu.memory_space<vmem>>, %arg3: memref<1152x128xf32, #tpu.memory_space<vmem>>, %arg4: memref<1x16x16x128xf32, #tpu.memory_space<vmem>>, %arg5: memref<18x18x128xf32, #tpu.memory_space<vmem>>, %arg6: memref<16x16x1152xf32, #tpu.memory_space<vmem>>) attributes {dimension_semantics = [#tpu.dimension_semantics<parallel>], iteration_bounds = array<i64: 2>, scalar_prefetch = 0 : i64, scratch_operands = 2 : i64, tpu.core_type = #tpu.core_type<tc>, window_params = [{transform_indices = @transform_0, window_bounds = array<i64: 1, 16, 16, 128>}, {pipeline_mode = #tpu.pipeline_mode<synchronous>, transform_indices = @transform_1, window_bounds = array<i64: 1152, 128>}, {pipeline_mode = #tpu.pipeline_mode<synchronous>, transform_indices = @transform_2, window_bounds = array<i64: 1152, 128>}, {transform_indices = @transform_3, window_bounds = array<i64: 1, 16, 16, 128>}]} {
    %c0 = arith.constant 0 : index
    %c0_0 = arith.constant 0 : index
    %c0_1 = arith.constant 0 : index
    %c0_2 = arith.constant 0 : index
    %0 = vector.load %arg1[%c0, %c0_0, %c0_1, %c0_2] : memref<1x16x16x128xf32, #tpu.memory_space<vmem>>, vector<1x16x16x128xf32>
    %1 = vector.shape_cast %0 : vector<1x16x16x128xf32> to vector<16x16x128xf32>
    %c1 = arith.constant 1 : index
    %c1_3 = arith.constant 1 : index
    %c0_4 = arith.constant 0 : index
    %2 = vector.load %arg5[%c1, %c1_3, %c0_4] : memref<18x18x128xf32, #tpu.memory_space<vmem>>, vector<16x16x128xf32>
    tpu.vector_store %arg5[%c1, %c1_3, %c0_4], %1 {strides = array<i32>} : memref<18x18x128xf32, #tpu.memory_space<vmem>>, vector<16x16x128xf32>,
    %3 = vector.extract_strided_slice %1 {offsets = [1, 0, 0], sizes = [1, 16, 128], strides = [1, 1, 1]} : vector<16x16x128xf32> to vector<1x16x128xf32>
    %c0_5 = arith.constant 0 : index
    %c1_6 = arith.constant 1 : index
    %c0_7 = arith.constant 0 : index
    %4 = vector.load %arg5[%c0_5, %c1_6, %c0_7] : memref<18x18x128xf32, #tpu.memory_space<vmem>>, vector<1x16x128xf32>
    tpu.vector_store %arg5[%c0_5, %c1_6, %c0_7], %3 {strides = array<i32>} : memref<18x18x128xf32, #tpu.memory_space<vmem>>, vector<1x16x128xf32>,
    %5 = vector.extract_strided_slice %1 {offsets = [14, 0, 0], sizes = [1, 16, 128], strides = [1, 1, 1]} : vector<16x16x128xf32> to vector<1x16x128xf32>
    %c17 = arith.constant 17 : index
    %c1_8 = arith.constant 1 : index
    %c0_9 = arith.constant 0 : index
    %6 = vector.load %arg5[%c17, %c1_8, %c0_9] : memref<18x18x128xf32, #tpu.memory_space<vmem>>, vector<1x16x128xf32>
    tpu.vector_store %arg5[%c17, %c1_8, %c0_9], %5 {strides = array<i32>} : memref<18x18x128xf32, #tpu.memory_space<vmem>>, vector<1x16x128xf32>,
    %c0_10 = arith.constant 0 : index
    %c2 = arith.constant 2 : index
    %c0_11 = arith.constant 0 : index
    %7 = vector.load %arg5[%c0_10, %c2, %c0_11] : memref<18x18x128xf32, #tpu.memory_space<vmem>>, vector<18x1x128xf32>
    %c0_12 = arith.constant 0 : index
    %c0_13 = arith.constant 0 : index
    %c0_14 = arith.constant 0 : index
    %8 = vector.load %arg5[%c0_12, %c0_13, %c0_14] : memref<18x18x128xf32, #tpu.memory_space<vmem>>, vector<18x1x128xf32>
    tpu.vector_store %arg5[%c0_12, %c0_13, %c0_14], %7 {strides = array<i32>} : memref<18x18x128xf32, #tpu.memory_space<vmem>>, vector<18x1x128xf32>,
    %c0_15 = arith.constant 0 : index
    %c15 = arith.constant 15 : index
    %c0_16 = arith.constant 0 : index
    %9 = vector.load %arg5[%c0_15, %c15, %c0_16] : memref<18x18x128xf32, #tpu.memory_space<vmem>>, vector<18x1x128xf32>
    %c0_17 = arith.constant 0 : index
    %c17_18 = arith.constant 17 : index
    %c0_19 = arith.constant 0 : index
    %10 = vector.load %arg5[%c0_17, %c17_18, %c0_19] : memref<18x18x128xf32, #tpu.memory_space<vmem>>, vector<18x1x128xf32>
    tpu.vector_store %arg5[%c0_17, %c17_18, %c0_19], %9 {strides = array<i32>} : memref<18x18x128xf32, #tpu.memory_space<vmem>>, vector<18x1x128xf32>,
    %c0_20 = arith.constant 0 : index
    %c0_21 = arith.constant 0 : index
    %c0_22 = arith.constant 0 : index
    %11 = vector.load %arg5[%c0_20, %c0_21, %c0_22] : memref<18x18x128xf32, #tpu.memory_space<vmem>>, vector<16x16x128xf32>
    %c0_23 = arith.constant 0 : index
    %c0_24 = arith.constant 0 : index
    %c0_25 = arith.constant 0 : index
    %12 = vector.load %arg6[%c0_23, %c0_24, %c0_25] : memref<16x16x1152xf32, #tpu.memory_space<vmem>>, vector<16x16x128xf32>
    tpu.vector_store %arg6[%c0_23, %c0_24, %c0_25], %11 {strides = array<i32>} : memref<16x16x1152xf32, #tpu.memory_space<vmem>>, vector<16x16x128xf32>,
    %c0_26 = arith.constant 0 : index
    %c1_27 = arith.constant 1 : index
    %c0_28 = arith.constant 0 : index
    %13 = vector.load %arg5[%c0_26, %c1_27, %c0_28] : memref<18x18x128xf32, #tpu.memory_space<vmem>>, vector<16x16x128xf32>
    %c0_29 = arith.constant 0 : index
    %c0_30 = arith.constant 0 : index
    %c128 = arith.constant 128 : index
    %14 = vector.load %arg6[%c0_29, %c0_30, %c128] : memref<16x16x1152xf32, #tpu.memory_space<vmem>>, vector<16x16x128xf32>
    tpu.vector_store %arg6[%c0_29, %c0_30, %c128], %13 {strides = array<i32>} : memref<16x16x1152xf32, #tpu.memory_space<vmem>>, vector<16x16x128xf32>,
    %c0_31 = arith.constant 0 : index
    %c2_32 = arith.constant 2 : index
    %c0_33 = arith.constant 0 : index
    %15 = vector.load %arg5[%c0_31, %c2_32, %c0_33] : memref<18x18x128xf32, #tpu.memory_space<vmem>>, vector<16x16x128xf32>
    %c0_34 = arith.constant 0 : index
    %c0_35 = arith.constant 0 : index
    %c256 = arith.constant 256 : index
    %16 = vector.load %arg6[%c0_34, %c0_35, %c256] : memref<16x16x1152xf32, #tpu.memory_space<vmem>>, vector<16x16x128xf32>
    tpu.vector_store %arg6[%c0_34, %c0_35, %c256], %15 {strides = array<i32>} : memref<16x16x1152xf32, #tpu.memory_space<vmem>>, vector<16x16x128xf32>,
    %c1_36 = arith.constant 1 : index
    %c0_37 = arith.constant 0 : index
    %c0_38 = arith.constant 0 : index
    %17 = vector.load %arg5[%c1_36, %c0_37, %c0_38] : memref<18x18x128xf32, #tpu.memory_space<vmem>>, vector<16x16x128xf32>
    %c0_39 = arith.constant 0 : index
    %c0_40 = arith.constant 0 : index
    %c384 = arith.constant 384 : index
    %18 = vector.load %arg6[%c0_39, %c0_40, %c384] : memref<16x16x1152xf32, #tpu.memory_space<vmem>>, vector<16x16x128xf32>
    tpu.vector_store %arg6[%c0_39, %c0_40, %c384], %17 {strides = array<i32>} : memref<16x16x1152xf32, #tpu.memory_space<vmem>>, vector<16x16x128xf32>,
    %c1_41 = arith.constant 1 : index
    %c1_42 = arith.constant 1 : index
    %c0_43 = arith.constant 0 : index
    %19 = vector.load %arg5[%c1_41, %c1_42, %c0_43] : memref<18x18x128xf32, #tpu.memory_space<vmem>>, vector<16x16x128xf32>
    %c0_44 = arith.constant 0 : index
    %c0_45 = arith.constant 0 : index
    %c512 = arith.constant 512 : index
    %20 = vector.load %arg6[%c0_44, %c0_45, %c512] : memref<16x16x1152xf32, #tpu.memory_space<vmem>>, vector<16x16x128xf32>
    tpu.vector_store %arg6[%c0_44, %c0_45, %c512], %19 {strides = array<i32>} : memref<16x16x1152xf32, #tpu.memory_space<vmem>>, vector<16x16x128xf32>,
    %c1_46 = arith.constant 1 : index
    %c2_47 = arith.constant 2 : index
    %c0_48 = arith.constant 0 : index
    %21 = vector.load %arg5[%c1_46, %c2_47, %c0_48] : memref<18x18x128xf32, #tpu.memory_space<vmem>>, vector<16x16x128xf32>
    %c0_49 = arith.constant 0 : index
    %c0_50 = arith.constant 0 : index
    %c640 = arith.constant 640 : index
    %22 = vector.load %arg6[%c0_49, %c0_50, %c640] : memref<16x16x1152xf32, #tpu.memory_space<vmem>>, vector<16x16x128xf32>
    tpu.vector_store %arg6[%c0_49, %c0_50, %c640], %21 {strides = array<i32>} : memref<16x16x1152xf32, #tpu.memory_space<vmem>>, vector<16x16x128xf32>,
    %c2_51 = arith.constant 2 : index
    %c0_52 = arith.constant 0 : index
    %c0_53 = arith.constant 0 : index
    %23 = vector.load %arg5[%c2_51, %c0_52, %c0_53] : memref<18x18x128xf32, #tpu.memory_space<vmem>>, vector<16x16x128xf32>
    %c0_54 = arith.constant 0 : index
    %c0_55 = arith.constant 0 : index
    %c768 = arith.constant 768 : index
    %24 = vector.load %arg6[%c0_54, %c0_55, %c768] : memref<16x16x1152xf32, #tpu.memory_space<vmem>>, vector<16x16x128xf32>
    tpu.vector_store %arg6[%c0_54, %c0_55, %c768], %23 {strides = array<i32>} : memref<16x16x1152xf32, #tpu.memory_space<vmem>>, vector<16x16x128xf32>,
    %c2_56 = arith.constant 2 : index
    %c1_57 = arith.constant 1 : index
    %c0_58 = arith.constant 0 : index
    %25 = vector.load %arg5[%c2_56, %c1_57, %c0_58] : memref<18x18x128xf32, #tpu.memory_space<vmem>>, vector<16x16x128xf32>
    %c0_59 = arith.constant 0 : index
    %c0_60 = arith.constant 0 : index
    %c896 = arith.constant 896 : index
    %26 = vector.load %arg6[%c0_59, %c0_60, %c896] : memref<16x16x1152xf32, #tpu.memory_space<vmem>>, vector<16x16x128xf32>
    tpu.vector_store %arg6[%c0_59, %c0_60, %c896], %25 {strides = array<i32>} : memref<16x16x1152xf32, #tpu.memory_space<vmem>>, vector<16x16x128xf32>,
    %c2_61 = arith.constant 2 : index
    %c2_62 = arith.constant 2 : index
    %c0_63 = arith.constant 0 : index
    %27 = vector.load %arg5[%c2_61, %c2_62, %c0_63] : memref<18x18x128xf32, #tpu.memory_space<vmem>>, vector<16x16x128xf32>
    %c0_64 = arith.constant 0 : index
    %c0_65 = arith.constant 0 : index
    %c1024 = arith.constant 1024 : index
    %28 = vector.load %arg6[%c0_64, %c0_65, %c1024] : memref<16x16x1152xf32, #tpu.memory_space<vmem>>, vector<16x16x128xf32>
    tpu.vector_store %arg6[%c0_64, %c0_65, %c1024], %27 {strides = array<i32>} : memref<16x16x1152xf32, #tpu.memory_space<vmem>>, vector<16x16x128xf32>,
    %c0_66 = arith.constant 0 : index
    %c0_67 = arith.constant 0 : index
    %c0_68 = arith.constant 0 : index
    %29 = vector.load %arg6[%c0_66, %c0_67, %c0_68] : memref<16x16x1152xf32, #tpu.memory_space<vmem>>, vector<16x16x1152xf32>
    %30 = vector.shape_cast %29 : vector<16x16x1152xf32> to vector<256x1152xf32>
    %c0_69 = arith.constant 0 : index
    %c0_70 = arith.constant 0 : index
    %31 = vector.load %arg2[%c0_69, %c0_70] : memref<1152x128xf32, #tpu.memory_space<vmem>>, vector<1152x128xf32>
    %cst = arith.constant dense<0.000000e+00> : vector<256x128xf32>
    %32 = tpu.matmul %30, %31, %cst {dimension_numbers = #tpu.dot_dimension_numbers<[1], [0], [0], [1], [0, 0, 1, 1], [], []>} : vector<256x1152xf32>, vector<1152x128xf32>, vector<256x128xf32> -> vector<256x128xf32>
    %cst_71 = arith.constant dense<0.000000e+00> : vector<128xf32>
    %33 = vector.multi_reduction <add>, %32, %cst_71 [0] : vector<256x128xf32> to vector<128xf32>
    %34 = vector.shape_cast %33 : vector<128xf32> to vector<1x128xf32>
    %cst_72 = arith.constant 2.560000e+02 : f32
    %35 = vector.broadcast %cst_72 : f32 to vector<1x128xf32>
    %36 = arith.divf %34, %35 : vector<1x128xf32>
    %37 = vector.broadcast %36 : vector<1x128xf32> to vector<256x128xf32>
    %38 = arith.subf %32, %37 : vector<256x128xf32>
    %39 = arith.mulf %38, %38 : vector<256x128xf32>
    %cst_73 = arith.constant dense<0.000000e+00> : vector<128xf32>
    %40 = vector.multi_reduction <add>, %39, %cst_73 [0] : vector<256x128xf32> to vector<128xf32>
    %41 = vector.shape_cast %40 : vector<128xf32> to vector<1x128xf32>
    %cst_74 = arith.constant 2.560000e+02 : f32
    %42 = vector.broadcast %cst_74 : f32 to vector<1x128xf32>
    %43 = arith.divf %41, %42 : vector<1x128xf32>
    %cst_75 = arith.constant 9.99999974E-6 : f32
    %44 = vector.broadcast %cst_75 : f32 to vector<1x128xf32>
    %45 = arith.addf %43, %44 : vector<1x128xf32>
    %46 = math.rsqrt %45 : vector<1x128xf32>
    %47 = vector.broadcast %46 : vector<1x128xf32> to vector<256x128xf32>
    %48 = arith.mulf %38, %47 : vector<256x128xf32>
    %cst_76 = arith.constant 0.000000e+00 : f32
    %49 = vector.broadcast %cst_76 : f32 to vector<256x128xf32>
    %50 = arith.maximumf %48, %49 : vector<256x128xf32>
    %51 = vector.shape_cast %50 : vector<256x128xf32> to vector<16x16x128xf32>
    %c1_77 = arith.constant 1 : index
    %c1_78 = arith.constant 1 : index
    %c0_79 = arith.constant 0 : index
    %52 = vector.load %arg5[%c1_77, %c1_78, %c0_79] : memref<18x18x128xf32, #tpu.memory_space<vmem>>, vector<16x16x128xf32>
    tpu.vector_store %arg5[%c1_77, %c1_78, %c0_79], %51 {strides = array<i32>} : memref<18x18x128xf32, #tpu.memory_space<vmem>>, vector<16x16x128xf32>,
    %53 = vector.extract_strided_slice %51 {offsets = [1, 0, 0], sizes = [1, 16, 128], strides = [1, 1, 1]} : vector<16x16x128xf32> to vector<1x16x128xf32>
    %c0_80 = arith.constant 0 : index
    %c1_81 = arith.constant 1 : index
    %c0_82 = arith.constant 0 : index
    %54 = vector.load %arg5[%c0_80, %c1_81, %c0_82] : memref<18x18x128xf32, #tpu.memory_space<vmem>>, vector<1x16x128xf32>
    tpu.vector_store %arg5[%c0_80, %c1_81, %c0_82], %53 {strides = array<i32>} : memref<18x18x128xf32, #tpu.memory_space<vmem>>, vector<1x16x128xf32>,
    %55 = vector.extract_strided_slice %51 {offsets = [14, 0, 0], sizes = [1, 16, 128], strides = [1, 1, 1]} : vector<16x16x128xf32> to vector<1x16x128xf32>
    %c17_83 = arith.constant 17 : index
    %c1_84 = arith.constant 1 : index
    %c0_85 = arith.constant 0 : index
    %56 = vector.load %arg5[%c17_83, %c1_84, %c0_85] : memref<18x18x128xf32, #tpu.memory_space<vmem>>, vector<1x16x128xf32>
    tpu.vector_store %arg5[%c17_83, %c1_84, %c0_85], %55 {strides = array<i32>} : memref<18x18x128xf32, #tpu.memory_space<vmem>>, vector<1x16x128xf32>,
    %c0_86 = arith.constant 0 : index
    %c2_87 = arith.constant 2 : index
    %c0_88 = arith.constant 0 : index
    %57 = vector.load %arg5[%c0_86, %c2_87, %c0_88] : memref<18x18x128xf32, #tpu.memory_space<vmem>>, vector<18x1x128xf32>
    %c0_89 = arith.constant 0 : index
    %c0_90 = arith.constant 0 : index
    %c0_91 = arith.constant 0 : index
    %58 = vector.load %arg5[%c0_89, %c0_90, %c0_91] : memref<18x18x128xf32, #tpu.memory_space<vmem>>, vector<18x1x128xf32>
    tpu.vector_store %arg5[%c0_89, %c0_90, %c0_91], %57 {strides = array<i32>} : memref<18x18x128xf32, #tpu.memory_space<vmem>>, vector<18x1x128xf32>,
    %c0_92 = arith.constant 0 : index
    %c15_93 = arith.constant 15 : index
    %c0_94 = arith.constant 0 : index
    %59 = vector.load %arg5[%c0_92, %c15_93, %c0_94] : memref<18x18x128xf32, #tpu.memory_space<vmem>>, vector<18x1x128xf32>
    %c0_95 = arith.constant 0 : index
    %c17_96 = arith.constant 17 : index
    %c0_97 = arith.constant 0 : index
    %60 = vector.load %arg5[%c0_95, %c17_96, %c0_97] : memref<18x18x128xf32, #tpu.memory_space<vmem>>, vector<18x1x128xf32>
    tpu.vector_store %arg5[%c0_95, %c17_96, %c0_97], %59 {strides = array<i32>} : memref<18x18x128xf32, #tpu.memory_space<vmem>>, vector<18x1x128xf32>,
    %c0_98 = arith.constant 0 : index
    %c0_99 = arith.constant 0 : index
    %c0_100 = arith.constant 0 : index
    %61 = vector.load %arg5[%c0_98, %c0_99, %c0_100] : memref<18x18x128xf32, #tpu.memory_space<vmem>>, vector<16x16x128xf32>
    %c0_101 = arith.constant 0 : index
    %c0_102 = arith.constant 0 : index
    %c0_103 = arith.constant 0 : index
    %62 = vector.load %arg6[%c0_101, %c0_102, %c0_103] : memref<16x16x1152xf32, #tpu.memory_space<vmem>>, vector<16x16x128xf32>
    tpu.vector_store %arg6[%c0_101, %c0_102, %c0_103], %61 {strides = array<i32>} : memref<16x16x1152xf32, #tpu.memory_space<vmem>>, vector<16x16x128xf32>,
    %c0_104 = arith.constant 0 : index
    %c1_105 = arith.constant 1 : index
    %c0_106 = arith.constant 0 : index
    %63 = vector.load %arg5[%c0_104, %c1_105, %c0_106] : memref<18x18x128xf32, #tpu.memory_space<vmem>>, vector<16x16x128xf32>
    %c0_107 = arith.constant 0 : index
    %c0_108 = arith.constant 0 : index
    %c128_109 = arith.constant 128 : index
    %64 = vector.load %arg6[%c0_107, %c0_108, %c128_109] : memref<16x16x1152xf32, #tpu.memory_space<vmem>>, vector<16x16x128xf32>
    tpu.vector_store %arg6[%c0_107, %c0_108, %c128_109], %63 {strides = array<i32>} : memref<16x16x1152xf32, #tpu.memory_space<vmem>>, vector<16x16x128xf32>,
    %c0_110 = arith.constant 0 : index
    %c2_111 = arith.constant 2 : index
    %c0_112 = arith.constant 0 : index
    %65 = vector.load %arg5[%c0_110, %c2_111, %c0_112] : memref<18x18x128xf32, #tpu.memory_space<vmem>>, vector<16x16x128xf32>
    %c0_113 = arith.constant 0 : index
    %c0_114 = arith.constant 0 : index
    %c256_115 = arith.constant 256 : index
    %66 = vector.load %arg6[%c0_113, %c0_114, %c256_115] : memref<16x16x1152xf32, #tpu.memory_space<vmem>>, vector<16x16x128xf32>
    tpu.vector_store %arg6[%c0_113, %c0_114, %c256_115], %65 {strides = array<i32>} : memref<16x16x1152xf32, #tpu.memory_space<vmem>>, vector<16x16x128xf32>,
    %c1_116 = arith.constant 1 : index
    %c0_117 = arith.constant 0 : index
    %c0_118 = arith.constant 0 : index
    %67 = vector.load %arg5[%c1_116, %c0_117, %c0_118] : memref<18x18x128xf32, #tpu.memory_space<vmem>>, vector<16x16x128xf32>
    %c0_119 = arith.constant 0 : index
    %c0_120 = arith.constant 0 : index
    %c384_121 = arith.constant 384 : index
    %68 = vector.load %arg6[%c0_119, %c0_120, %c384_121] : memref<16x16x1152xf32, #tpu.memory_space<vmem>>, vector<16x16x128xf32>
    tpu.vector_store %arg6[%c0_119, %c0_120, %c384_121], %67 {strides = array<i32>} : memref<16x16x1152xf32, #tpu.memory_space<vmem>>, vector<16x16x128xf32>,
    %c1_122 = arith.constant 1 : index
    %c1_123 = arith.constant 1 : index
    %c0_124 = arith.constant 0 : index
    %69 = vector.load %arg5[%c1_122, %c1_123, %c0_124] : memref<18x18x128xf32, #tpu.memory_space<vmem>>, vector<16x16x128xf32>
    %c0_125 = arith.constant 0 : index
    %c0_126 = arith.constant 0 : index
    %c512_127 = arith.constant 512 : index
    %70 = vector.load %arg6[%c0_125, %c0_126, %c512_127] : memref<16x16x1152xf32, #tpu.memory_space<vmem>>, vector<16x16x128xf32>
    tpu.vector_store %arg6[%c0_125, %c0_126, %c512_127], %69 {strides = array<i32>} : memref<16x16x1152xf32, #tpu.memory_space<vmem>>, vector<16x16x128xf32>,
    %c1_128 = arith.constant 1 : index
    %c2_129 = arith.constant 2 : index
    %c0_130 = arith.constant 0 : index
    %71 = vector.load %arg5[%c1_128, %c2_129, %c0_130] : memref<18x18x128xf32, #tpu.memory_space<vmem>>, vector<16x16x128xf32>
    %c0_131 = arith.constant 0 : index
    %c0_132 = arith.constant 0 : index
    %c640_133 = arith.constant 640 : index
    %72 = vector.load %arg6[%c0_131, %c0_132, %c640_133] : memref<16x16x1152xf32, #tpu.memory_space<vmem>>, vector<16x16x128xf32>
    tpu.vector_store %arg6[%c0_131, %c0_132, %c640_133], %71 {strides = array<i32>} : memref<16x16x1152xf32, #tpu.memory_space<vmem>>, vector<16x16x128xf32>,
    %c2_134 = arith.constant 2 : index
    %c0_135 = arith.constant 0 : index
    %c0_136 = arith.constant 0 : index
    %73 = vector.load %arg5[%c2_134, %c0_135, %c0_136] : memref<18x18x128xf32, #tpu.memory_space<vmem>>, vector<16x16x128xf32>
    %c0_137 = arith.constant 0 : index
    %c0_138 = arith.constant 0 : index
    %c768_139 = arith.constant 768 : index
    %74 = vector.load %arg6[%c0_137, %c0_138, %c768_139] : memref<16x16x1152xf32, #tpu.memory_space<vmem>>, vector<16x16x128xf32>
    tpu.vector_store %arg6[%c0_137, %c0_138, %c768_139], %73 {strides = array<i32>} : memref<16x16x1152xf32, #tpu.memory_space<vmem>>, vector<16x16x128xf32>,
    %c2_140 = arith.constant 2 : index
    %c1_141 = arith.constant 1 : index
    %c0_142 = arith.constant 0 : index
    %75 = vector.load %arg5[%c2_140, %c1_141, %c0_142] : memref<18x18x128xf32, #tpu.memory_space<vmem>>, vector<16x16x128xf32>
    %c0_143 = arith.constant 0 : index
    %c0_144 = arith.constant 0 : index
    %c896_145 = arith.constant 896 : index
    %76 = vector.load %arg6[%c0_143, %c0_144, %c896_145] : memref<16x16x1152xf32, #tpu.memory_space<vmem>>, vector<16x16x128xf32>
    tpu.vector_store %arg6[%c0_143, %c0_144, %c896_145], %75 {strides = array<i32>} : memref<16x16x1152xf32, #tpu.memory_space<vmem>>, vector<16x16x128xf32>,
    %c2_146 = arith.constant 2 : index
    %c2_147 = arith.constant 2 : index
    %c0_148 = arith.constant 0 : index
    %77 = vector.load %arg5[%c2_146, %c2_147, %c0_148] : memref<18x18x128xf32, #tpu.memory_space<vmem>>, vector<16x16x128xf32>
    %c0_149 = arith.constant 0 : index
    %c0_150 = arith.constant 0 : index
    %c1024_151 = arith.constant 1024 : index
    %78 = vector.load %arg6[%c0_149, %c0_150, %c1024_151] : memref<16x16x1152xf32, #tpu.memory_space<vmem>>, vector<16x16x128xf32>
    tpu.vector_store %arg6[%c0_149, %c0_150, %c1024_151], %77 {strides = array<i32>} : memref<16x16x1152xf32, #tpu.memory_space<vmem>>, vector<16x16x128xf32>,
    %c0_152 = arith.constant 0 : index
    %c0_153 = arith.constant 0 : index
    %c0_154 = arith.constant 0 : index
    %79 = vector.load %arg6[%c0_152, %c0_153, %c0_154] : memref<16x16x1152xf32, #tpu.memory_space<vmem>>, vector<16x16x1152xf32>
    %80 = vector.shape_cast %79 : vector<16x16x1152xf32> to vector<256x1152xf32>
    %c0_155 = arith.constant 0 : index
    %c0_156 = arith.constant 0 : index
    %81 = vector.load %arg3[%c0_155, %c0_156] : memref<1152x128xf32, #tpu.memory_space<vmem>>, vector<1152x128xf32>
    %cst_157 = arith.constant dense<0.000000e+00> : vector<256x128xf32>
    %82 = tpu.matmul %80, %81, %cst_157 {dimension_numbers = #tpu.dot_dimension_numbers<[1], [0], [0], [1], [0, 0, 1, 1], [], []>} : vector<256x1152xf32>, vector<1152x128xf32>, vector<256x128xf32> -> vector<256x128xf32>
    %cst_158 = arith.constant dense<0.000000e+00> : vector<128xf32>
    %83 = vector.multi_reduction <add>, %82, %cst_158 [0] : vector<256x128xf32> to vector<128xf32>
    %84 = vector.shape_cast %83 : vector<128xf32> to vector<1x128xf32>
    %cst_159 = arith.constant 2.560000e+02 : f32
    %85 = vector.broadcast %cst_159 : f32 to vector<1x128xf32>
    %86 = arith.divf %84, %85 : vector<1x128xf32>
    %87 = vector.broadcast %86 : vector<1x128xf32> to vector<256x128xf32>
    %88 = arith.subf %82, %87 : vector<256x128xf32>
    %89 = arith.mulf %88, %88 : vector<256x128xf32>
    %cst_160 = arith.constant dense<0.000000e+00> : vector<128xf32>
    %90 = vector.multi_reduction <add>, %89, %cst_160 [0] : vector<256x128xf32> to vector<128xf32>
    %91 = vector.shape_cast %90 : vector<128xf32> to vector<1x128xf32>
    %cst_161 = arith.constant 2.560000e+02 : f32
    %92 = vector.broadcast %cst_161 : f32 to vector<1x128xf32>
    %93 = arith.divf %91, %92 : vector<1x128xf32>
    %cst_162 = arith.constant 9.99999974E-6 : f32
    %94 = vector.broadcast %cst_162 : f32 to vector<1x128xf32>
    %95 = arith.addf %93, %94 : vector<1x128xf32>
    %96 = math.rsqrt %95 : vector<1x128xf32>
    %97 = vector.broadcast %96 : vector<1x128xf32> to vector<256x128xf32>
    %98 = arith.mulf %88, %97 : vector<256x128xf32>
    %99 = vector.shape_cast %98 : vector<256x128xf32> to vector<16x16x128xf32>
    %100 = arith.addf %1, %99 : vector<16x16x128xf32>
    %101 = vector.shape_cast %100 : vector<16x16x128xf32> to vector<1x16x16x128xf32>
    %c0_163 = arith.constant 0 : index
    %c0_164 = arith.constant 0 : index
    %c0_165 = arith.constant 0 : index
    %c0_166 = arith.constant 0 : index
    %102 = vector.load %arg4[%c0_163, %c0_164, %c0_165, %c0_166] : memref<1x16x16x128xf32, #tpu.memory_space<vmem>>, vector<1x16x16x128xf32>
    tpu.vector_store %arg4[%c0_163, %c0_164, %c0_165, %c0_166], %101 {strides = array<i32>} : memref<1x16x16x128xf32, #tpu.memory_space<vmem>>, vector<1x16x16x128xf32>,
    return
  }
  func.func @transform_0(%arg0: i32) -> (i32, i32, i32, i32) {
    %c0_i32 = arith.constant 0 : i32
    %c0_i32_0 = arith.constant 0 : i32
    %c0_i32_1 = arith.constant 0 : i32
    %c0_i32_2 = arith.constant 0 : i32
    return %arg0, %c0_i32, %c0_i32_0, %c0_i32_1 : i32, i32, i32, i32
  }
  func.func @transform_1(%arg0: i32) -> (i32, i32) {
    %c0_i32 = arith.constant 0 : i32
    %c0_i32_0 = arith.constant 0 : i32
    %c0_i32_1 = arith.constant 0 : i32
    return %c0_i32, %c0_i32_0 : i32, i32
  }
  func.func @transform_2(%arg0: i32) -> (i32, i32) {
    %c0_i32 = arith.constant 0 : i32
    %c0_i32_0 = arith.constant 0 : i32
    %c0_i32_1 = arith.constant 0 : i32
    return %c0_i32, %c0_i32_0 : i32, i32
  }
  func.func @transform_3(%arg0: i32) -> (i32, i32, i32, i32) {
    %c0_i32 = arith.constant 0 : i32
    %c0_i32_0 = arith.constant 0 : i32
    %c0_i32_1 = arith.constant 0 : i32
    %c0_i32_2 = arith.constant 0 : i32
    return %arg0, %c0_i32, %c0_i32_0, %c0_i32_1 : i32, i32, i32, i32
  }
}

</mosaic_0001>

<llo_original>
// kernel: resnet_block_nhwc.1
$region0: #{resnet_block_nhwc.1}
  #allocation0 [shape = 'u32[]', space=smem, size = 0x4, offset = 0x4, fixed_abs, tag = 'smem constant byte address 0x4 - core index']
  #allocation1 [shape = 'u32[72,128]{1,0:T(1,128)}', space=vmem, size = 0x9000, scoped, tag = 'internal scratch']
  #allocation2 [shape = 'f32[18,18,128]{2,1,0:T(8,128)}', space=vmem, size = 0x36000, scoped, tag = 'scratch operand']
  #allocation3 [shape = 'f32[16,16,1152]{2,1,0:T(8,128)}', space=vmem, size = 0x120000, scoped, tag = 'scratch operand']
  %s0 = inlined_call_operand.vmem [shape: f32[2,16,16,128], index: 0, kind: input, shape index: {}]
  %s1 = inlined_call_operand.vmem [shape: f32[1152,128], index: 1, kind: input, shape index: {}]
  %s2 = inlined_call_operand.vmem [shape: f32[1152,128], index: 2, kind: input, shape index: {}]
  %s3 = inlined_call_operand.vmem [shape: f32[2,16,16,128], index: 3, kind: output, shape index: {}]
  %s4 = sld [smem:[#allocation0]]
  $region45: #{resnet_block_nhwc.1} parent=0
    _
  %s6 = ssub.s32 1, %s4
  %s7 = scalar_select 0, %s6, %s4
  loop: start=0, step=1, limit=4
  $region2: #{resnet_block_nhwc.1} parent=0 // loop_pre_header
    _
  $region3: #{resnet_block_nhwc.1} parent=0 // loop_header
    %s9 = sphi 0, %s13
    %p10 = scmp.ge.s32.totalorder %s9, 4
    %s19 = sphi 0, %s21
    %s22 = sphi 0, %s19
    %s23 = sphi 0, %s22
    %s39 = sphi 0, %s23
    %s43 = sphi 0, %s43
    %s45 = sphi 0, %s43
    %s46 = sphi 0, %s45
    %s60 = sphi 0, %s46
    %s64 = sphi 0, %s64
    %s66 = sphi 0, %s64
    %s67 = sphi 0, %s66
    %s81 = sphi 0, %s67
    %s87 = sphi 0, %s89
    %s90 = sphi 0, %s87
    %s91 = sphi 0, %s90
    %s107 = sphi 0, %s91
  $region4: #{resnet_block_nhwc.1} parent=0 // loop_header_branch
    %12 = sbr.rel (%p10) target = $region8
  $region5: #{resnet_block_nhwc.1} parent=0 // loop_body
    %s14 = ssub.s32 %s9, 1
    %s15 = ssub.s32 %s9, 2
    %s16 = sadd.s32 %s9, 1
    %s17 = ssub.s32 %s9, %s16
    %p18 = scmp.eq.s32.totalorder %s17, 0
    %s20 = sadd.s32 %s19, 1
    %s21 = scalar_select %p18, %s19, %s20
    %p24 = pneg %p18
    %p25 = scmp.eq.s32.totalorder %s9, 1
    %p26 = por %p24, %p25
    %p27 = scmp.ne.s32.totalorder %s19, %s22
    %p28 = scmp.eq.s32.totalorder %s9, 0
    %p29 = por %p27, %p28
    %p30 = scmp.ne.s32.totalorder %s19, %s22
    %p31 = scmp.eq.s32.totalorder %s14, 1
    %p32 = por %p30, %p31
    %p33 = scmp.ne.s32.totalorder %s22, %s23
    %p34 = scmp.eq.s32.totalorder %s14, 0
    %p35 = por %p33, %p34
    %p36 = scmp.ne.s32.totalorder %s22, %s23
    %p37 = scmp.eq.s32.totalorder %s15, 1
    %p38 = por %p36, %p37
    %p40 = scmp.ne.s32.totalorder %s23, %s39
    %p41 = scmp.eq.s32.totalorder %s15, 0
    %p42 = por %p40, %p41
    %s44 = sadd.s32 %s43, 1
    %p47 = scmp.eq.s32.totalorder %s9, 1
    %p48 = scmp.ne.s32.totalorder %s43, %s45
    %p49 = scmp.eq.s32.totalorder %s9, 0
    %p50 = por %p48, %p49
    %p51 = scmp.ne.s32.totalorder %s43, %s45
    %p52 = scmp.eq.s32.totalorder %s14, 1
    %p53 = por %p51, %p52
    %p54 = scmp.ne.s32.totalorder %s45, %s46
    %p55 = scmp.eq.s32.totalorder %s14, 0
    %p56 = por %p54, %p55
    %p57 = scmp.ne.s32.totalorder %s45, %s46
    %p58 = scmp.eq.s32.totalorder %s15, 1
    %p59 = por %p57, %p58
    %p61 = scmp.ne.s32.totalorder %s46, %s60
    %p62 = scmp.eq.s32.totalorder %s15, 0
    %p63 = por %p61, %p62
    %s65 = sadd.s32 %s64, 1
    %p68 = scmp.eq.s32.totalorder %s9, 1
    %p69 = scmp.ne.s32.totalorder %s64, %s66
    %p70 = scmp.eq.s32.totalorder %s9, 0
    %p71 = por %p69, %p70
    %p72 = scmp.ne.s32.totalorder %s64, %s66
    %p73 = scmp.eq.s32.totalorder %s14, 1
    %p74 = por %p72, %p73
    %p75 = scmp.ne.s32.totalorder %s66, %s67
    %p76 = scmp.eq.s32.totalorder %s14, 0
    %p77 = por %p75, %p76
    %p78 = scmp.ne.s32.totalorder %s66, %s67
    %p79 = scmp.eq.s32.totalorder %s15, 1
    %p80 = por %p78, %p79
    %p82 = scmp.ne.s32.totalorder %s67, %s81
    %p83 = scmp.eq.s32.totalorder %s15, 0
    %p84 = por %p82, %p83
    %s85 = ssub.s32 %s9, %s16
    %p86 = scmp.eq.s32.totalorder %s85, 0
    %s88 = sadd.s32 %s87, 1
    %s89 = scalar_select %p86, %s87, %s88
    %p92 = pneg %p86
    %p93 = scmp.eq.s32.totalorder %s9, 1
    %p94 = por %p92, %p93
    %p95 = scmp.ne.s32.totalorder %s87, %s90
    %p96 = scmp.eq.s32.totalorder %s9, 0
    %p97 = por %p95, %p96
    %p98 = scmp.ne.s32.totalorder %s87, %s90
    %p99 = scmp.eq.s32.totalorder %s14, 1
    %p100 = por %p98, %p99
    %p101 = scmp.ne.s32.totalorder %s90, %s91
    %p102 = scmp.eq.s32.totalorder %s14, 0
    %p103 = por %p101, %p102
    %p104 = scmp.ne.s32.totalorder %s90, %s91
    %p105 = scmp.eq.s32.totalorder %s15, 1
    %p106 = por %p104, %p105
    %p108 = scmp.ne.s32.totalorder %s91, %s107
    %p109 = scmp.eq.s32.totalorder %s15, 0
    %p110 = por %p108, %p109
    %p111 = scmp.le.s32.totalorder 1, %s9
    %p112 = scmp.lt.s32.totalorder %s9, 3
    %p113 = pnand %p111, %p112
    %p114 = pneg %p113
    // Predicated region
    $region9: #{resnet_block_nhwc.1} parent=5 // pred_check
      _
    $region10: #{resnet_block_nhwc.1} parent=5 // pred_check_branch
      %116 = sbr.rel (%p113) target = $region12
    $region11: #{resnet_block_nhwc.1} parent=5 // pred_region
      %s117 = ssub.s32 %s9, 1
      // Predicated region
      $region13: #{resnet_block_nhwc.1} parent=11 // pred_check
        %p118 = pneg %p56
      $region14: #{resnet_block_nhwc.1} parent=11 // pred_check_branch
        %120 = sbr.rel (%p118) target = $region16
      $region15: #{resnet_block_nhwc.1} parent=11 // pred_region
        _
      $region16: #{resnet_block_nhwc.1} parent=11 // pred_fallthru
        _
      // Predicated region
      $region17: #{resnet_block_nhwc.1} parent=11 // pred_check
        %p121 = pneg %p77
      $region18: #{resnet_block_nhwc.1} parent=11 // pred_check_branch
        %123 = sbr.rel (%p121) target = $region20
      $region19: #{resnet_block_nhwc.1} parent=11 // pred_region
        _
      $region20: #{resnet_block_nhwc.1} parent=11 // pred_fallthru
        _
    $region12: #{resnet_block_nhwc.1} parent=5 // pred_fallthru
      _
    %p124 = scmp.lt.s32.totalorder %s9, 2
    // Predicated region
    $region21: #{resnet_block_nhwc.1} parent=5 // pred_check
      %p125 = pneg %p124
    $region22: #{resnet_block_nhwc.1} parent=5 // pred_check_branch
      %127 = sbr.rel (%p125) target = $region24
    $region23: #{resnet_block_nhwc.1} parent=5 // pred_region
      // Predicated region
      $region25: #{resnet_block_nhwc.1} parent=23 // pred_check
        %p128 = pneg %p29
      $region26: #{resnet_block_nhwc.1} parent=23 // pred_check_branch
        %130 = sbr.rel (%p128) target = $region28
      $region27: #{resnet_block_nhwc.1} parent=23 // pred_region
        %p131 = scmp.lt.s32.totalorder %s9, 1
        %s132 = scalar_select %p131, %s9, 1
        %s133 = smul.addr %s132, 32
        %s134 = smul.addr %s133, 8
        %s135 = scalar_lea.vmem %s0, %s134
      $region28: #{resnet_block_nhwc.1} parent=23 // pred_fallthru
        _
    $region24: #{resnet_block_nhwc.1} parent=5 // pred_fallthru
      _
    %p136 = scmp.le.s32.totalorder 1, %s9
    %p137 = scmp.lt.s32.totalorder %s9, 3
    %p138 = pnand %p136, %p137
    %p139 = pneg %p138
    // Predicated region
    $region29: #{resnet_block_nhwc.1} parent=5 // pred_check
      _
    $region30: #{resnet_block_nhwc.1} parent=5 // pred_check_branch
      %141 = sbr.rel (%p138) target = $region32
    $region31: #{resnet_block_nhwc.1} parent=5 // pred_region
      %s142 = ssub.s32 %s9, 1
      %p143 = scmp.lt.s32.totalorder %s14, 1
      %s144 = scalar_select %p143, %s14, 1
      %s145 = smul.addr %s144, 32
      %s146 = smul.addr %s145, 8
      %s147 = scalar_lea.vmem %s0, %s146
      %p148 = pneg %p35
      %p149 = pneg %p32
      %p150 = pneg %p56
      %p151 = pneg %p53
      %p152 = pneg %p77
      %p153 = pneg %p74
      %p154 = pneg %p103
      %p155 = pneg %p100
      %p156 = scmp.lt.s32.totalorder %s14, 1
      %s157 = scalar_select %p156, %s14, 1
      %s158 = smul.addr %s157, 32
      %s159 = smul.addr %s158, 8
      %s160 = scalar_lea.vmem %s3, %s159
      %p161 = scmp.lt.s32.totalorder %s14, 1
      %s162 = scalar_select %p161, %s14, 1
      %s163 = smul.addr %s162, 32
      %s164 = smul.addr %s163, 8
      %s165 = scalar_lea.vmem %s0, %s164
      %p166 = scmp.lt.s32.totalorder %s14, 1
      %s167 = scalar_select %p166, %s14, 1
      %s168 = smul.addr %s167, 32
      %s169 = smul.addr %s168, 8
      %s170 = scalar_lea.vmem %s3, %s169
      %v171 = vld [vmem:[%s165] sm:$0xff]
      %v172 = vld [vmem:[%s165 + $0x8] sm:$0xff]
      %v173 = vld [vmem:[%s165 + $0x10] sm:$0xff]
      %v174 = vld [vmem:[%s165 + $0x18] sm:$0xff]
      %v175 = vld [vmem:[%s165 + $0x20] sm:$0xff]
      %v176 = vld [vmem:[%s165 + $0x28] sm:$0xff]
      %v177 = vld [vmem:[%s165 + $0x30] sm:$0xff]
      %v178 = vld [vmem:[%s165 + $0x38] sm:$0xff]
      %v179 = vld [vmem:[%s165 + $0x40] sm:$0xff]
      %v180 = vld [vmem:[%s165 + $0x48] sm:$0xff]
      %v181 = vld [vmem:[%s165 + $0x50] sm:$0xff]
      %v182 = vld [vmem:[%s165 + $0x58] sm:$0xff]
      %v183 = vld [vmem:[%s165 + $0x60] sm:$0xff]
      %v184 = vld [vmem:[%s165 + $0x68] sm:$0xff]
      %v185 = vld [vmem:[%s165 + $0x70] sm:$0xff]
      %v186 = vld [vmem:[%s165 + $0x78] sm:$0xff]
      %v187 = vld [vmem:[%s165 + $0x80] sm:$0xff]
      %v188 = vld [vmem:[%s165 + $0x88] sm:$0xff]
      %v189 = vld [vmem:[%s165 + $0x90] sm:$0xff]
      %v190 = vld [vmem:[%s165 + $0x98] sm:$0xff]
      %v191 = vld [vmem:[%s165 + $0xa0] sm:$0xff]
      %v192 = vld [vmem:[%s165 + $0xa8] sm:$0xff]
      %v193 = vld [vmem:[%s165 + $0xb0] sm:$0xff]
      %v194 = vld [vmem:[%s165 + $0xb8] sm:$0xff]
      %v195 = vld [vmem:[%s165 + $0xc0] sm:$0xff]
      %v196 = vld [vmem:[%s165 + $0xc8] sm:$0xff]
      %v197 = vld [vmem:[%s165 + $0xd0] sm:$0xff]
      %v198 = vld [vmem:[%s165 + $0xd8] sm:$0xff]
      %v199 = vld [vmem:[%s165 + $0xe0] sm:$0xff]
      %v200 = vld [vmem:[%s165 + $0xe8] sm:$0xff]
      %v201 = vld [vmem:[%s165 + $0xf0] sm:$0xff]
      %v202 = vld [vmem:[%s165 + $0xf8] sm:$0xff]
      %s203 = scalar_lea.vmem [#allocation2], 24
      %204 = vst [vmem:[%s203 + $0x1] sm:$0xff] %v171
      %205 = vst [vmem:[%s203 + $0x9] sm:$0xff] %v172
      %206 = vst [vmem:[%s203 + $0x19] sm:$0xff] %v173
      %207 = vst [vmem:[%s203 + $0x21] sm:$0xff] %v174
      %208 = vst [vmem:[%s203 + $0x31] sm:$0xff] %v175
      %209 = vst [vmem:[%s203 + $0x39] sm:$0xff] %v176
      %210 = vst [vmem:[%s203 + $0x49] sm:$0xff] %v177
      %211 = vst [vmem:[%s203 + $0x51] sm:$0xff] %v178
      %212 = vst [vmem:[%s203 + $0x61] sm:$0xff] %v179
      %213 = vst [vmem:[%s203 + $0x69] sm:$0xff] %v180
      %214 = vst [vmem:[%s203 + $0x79] sm:$0xff] %v181
      %215 = vst [vmem:[%s203 + $0x81] sm:$0xff] %v182
      %216 = vst [vmem:[%s203 + $0x91] sm:$0xff] %v183
      %217 = vst [vmem:[%s203 + $0x99] sm:$0xff] %v184
      %218 = vst [vmem:[%s203 + $0xa9] sm:$0xff] %v185
      %219 = vst [vmem:[%s203 + $0xb1] sm:$0xff] %v186
      %220 = vst [vmem:[%s203 + $0xc1] sm:$0xff] %v187
      %221 = vst [vmem:[%s203 + $0xc9] sm:$0xff] %v188
      %222 = vst [vmem:[%s203 + $0xd9] sm:$0xff] %v189
      %223 = vst [vmem:[%s203 + $0xe1] sm:$0xff] %v190
      %224 = vst [vmem:[%s203 + $0xf1] sm:$0xff] %v191
      %225 = vst [vmem:[%s203 + $0xf9] sm:$0xff] %v192
      %226 = vst [vmem:[%s203 + $0x109] sm:$0xff] %v193
      %227 = vst [vmem:[%s203 + $0x111] sm:$0xff] %v194
      %228 = vst [vmem:[%s203 + $0x121] sm:$0xff] %v195
      %229 = vst [vmem:[%s203 + $0x129] sm:$0xff] %v196
      %230 = vst [vmem:[%s203 + $0x139] sm:$0xff] %v197
      %231 = vst [vmem:[%s203 + $0x141] sm:$0xff] %v198
      %232 = vst [vmem:[%s203 + $0x151] sm:$0xff] %v199
      %233 = vst [vmem:[%s203 + $0x159] sm:$0xff] %v200
      %234 = vst [vmem:[%s203 + $0x169] sm:$0xff] %v201
      %235 = vst [vmem:[%s203 + $0x171] sm:$0xff] %v202
      %236 = vst [vmem:[#allocation2 + $0x1] sm:$0xff] %v173
      %237 = vst [vmem:[#allocation2 + $0x9] sm:$0xff] %v174
      %s238 = scalar_lea.vmem [#allocation2], 408
      %239 = vst [vmem:[%s238 + $0x1] sm:$0xff] %v199
      %240 = vst [vmem:[%s238 + $0x9] sm:$0xff] %v200
      %v241 = vld [vmem:[#allocation2 + $0x2] sm:$0x1]
      %v242 = vld [vmem:[#allocation2 + $0x1a] sm:$0x1]
      %v243 = vld [vmem:[#allocation2 + $0x32] sm:$0x1]
      %v244 = vld [vmem:[#allocation2 + $0x4a] sm:$0x1]
      %v245 = vld [vmem:[#allocation2 + $0x62] sm:$0x1]
      %v246 = vld [vmem:[#allocation2 + $0x7a] sm:$0x1]
      %v247 = vld [vmem:[#allocation2 + $0x92] sm:$0x1]
      %v248 = vld [vmem:[#allocation2 + $0xaa] sm:$0x1]
      %v249 = vld [vmem:[#allocation2 + $0xc2] sm:$0x1]
      %v250 = vld [vmem:[#allocation2 + $0xda] sm:$0x1]
      %v251 = vld [vmem:[#allocation2 + $0xf2] sm:$0x1]
      %v252 = vld [vmem:[#allocation2 + $0x10a] sm:$0x1]
      %v253 = vld [vmem:[#allocation2 + $0x122] sm:$0x1]
      %v254 = vld [vmem:[#allocation2 + $0x13a] sm:$0x1]
      %v255 = vld [vmem:[#allocation2 + $0x152] sm:$0x1]
      %v256 = vld [vmem:[#allocation2 + $0x16a] sm:$0x1]
      %v257 = vld [vmem:[#allocation2 + $0x182] sm:$0x1]
      %v258 = vld [vmem:[#allocation2 + $0x19a] sm:$0x1]
      %259 = vst [vmem:[#allocation2] sm:$0x1] %v241
      %260 = vst [vmem:[#allocation2 + $0x18] sm:$0x1] %v242
      %261 = vst [vmem:[#allocation2 + $0x30] sm:$0x1] %v243
      %262 = vst [vmem:[#allocation2 + $0x48] sm:$0x1] %v244
      %263 = vst [vmem:[#allocation2 + $0x60] sm:$0x1] %v245
      %264 = vst [vmem:[#allocation2 + $0x78] sm:$0x1] %v246
      %265 = vst [vmem:[#allocation2 + $0x90] sm:$0x1] %v247
      %266 = vst [vmem:[#allocation2 + $0xa8] sm:$0x1] %v248
      %267 = vst [vmem:[#allocation2 + $0xc0] sm:$0x1] %v249
      %268 = vst [vmem:[#allocation2 + $0xd8] sm:$0x1] %v250
      %269 = vst [vmem:[#allocation2 + $0xf0] sm:$0x1] %v251
      %270 = vst [vmem:[#allocation2 + $0x108] sm:$0x1] %v252
      %271 = vst [vmem:[#allocation2 + $0x120] sm:$0x1] %v253
      %272 = vst [vmem:[#allocation2 + $0x138] sm:$0x1] %v254
      %273 = vst [vmem:[#allocation2 + $0x150] sm:$0x1] %v255
      %274 = vst [vmem:[#allocation2 + $0x168] sm:$0x1] %v256
      %275 = vst [vmem:[#allocation2 + $0x180] sm:$0x1] %v257
      %276 = vst [vmem:[#allocation2 + $0x198] sm:$0x1] %v258
      %v277 = vld [vmem:[#allocation2 + $0xf] sm:$0x1]
      %v278 = vld [vmem:[#allocation2 + $0x27] sm:$0x1]
      %v279 = vld [vmem:[#allocation2 + $0x3f] sm:$0x1]
      %v280 = vld [vmem:[#allocation2 + $0x57] sm:$0x1]
      %v281 = vld [vmem:[#allocation2 + $0x6f] sm:$0x1]
      %v282 = vld [vmem:[#allocation2 + $0x87] sm:$0x1]
      %v283 = vld [vmem:[#allocation2 + $0x9f] sm:$0x1]
      %v284 = vld [vmem:[#allocation2 + $0xb7] sm:$0x1]
      %v285 = vld [vmem:[#allocation2 + $0xcf] sm:$0x1]
      %v286 = vld [vmem:[#allocation2 + $0xe7] sm:$0x1]
      %v287 = vld [vmem:[#allocation2 + $0xff] sm:$0x1]
      %v288 = vld [vmem:[#allocation2 + $0x117] sm:$0x1]
      %v289 = vld [vmem:[#allocation2 + $0x12f] sm:$0x1]
      %v290 = vld [vmem:[#allocation2 + $0x147] sm:$0x1]
      %v291 = vld [vmem:[#allocation2 + $0x15f] sm:$0x1]
      %v292 = vld [vmem:[#allocation2 + $0x177] sm:$0x1]
      %v293 = vld [vmem:[#allocation2 + $0x18f] sm:$0x1]
      %v294 = vld [vmem:[#allocation2 + $0x1a7] sm:$0x1]
      %295 = vst [vmem:[#allocation2 + $0x11] sm:$0x1] %v277
      %296 = vst [vmem:[#allocation2 + $0x29] sm:$0x1] %v278
      %297 = vst [vmem:[#allocation2 + $0x41] sm:$0x1] %v279
      %298 = vst [vmem:[#allocation2 + $0x59] sm:$0x1] %v280
      %299 = vst [vmem:[#allocation2 + $0x71] sm:$0x1] %v281
      %300 = vst [vmem:[#allocation2 + $0x89] sm:$0x1] %v282
      %301 = vst [vmem:[#allocation2 + $0xa1] sm:$0x1] %v283
      %302 = vst [vmem:[#allocation2 + $0xb9] sm:$0x1] %v284
      %303 = vst [vmem:[#allocation2 + $0xd1] sm:$0x1] %v285
      %304 = vst [vmem:[#allocation2 + $0xe9] sm:$0x1] %v286
      %305 = vst [vmem:[#allocation2 + $0x101] sm:$0x1] %v287
      %306 = vst [vmem:[#allocation2 + $0x119] sm:$0x1] %v288
      %307 = vst [vmem:[#allocation2 + $0x131] sm:$0x1] %v289
      %308 = vst [vmem:[#allocation2 + $0x149] sm:$0x1] %v290
      %309 = vst [vmem:[#allocation2 + $0x161] sm:$0x1] %v291
      %310 = vst [vmem:[#allocation2 + $0x179] sm:$0x1] %v292
      %311 = vst [vmem:[#allocation2 + $0x191] sm:$0x1] %v293
      %312 = vst [vmem:[#allocation2 + $0x1a9] sm:$0x1] %v294
      %v313 = vld [vmem:[#allocation2] sm:$0xff]
      %v314 = vld [vmem:[#allocation2 + $0x8] sm:$0xff]
      %v315 = vld [vmem:[#allocation2 + $0x18] sm:$0xff]
      %v316 = vld [vmem:[#allocation2 + $0x20] sm:$0xff]
      %v317 = vld [vmem:[#allocation2 + $0x30] sm:$0xff]
      %v318 = vld [vmem:[#allocation2 + $0x38] sm:$0xff]
      %v319 = vld [vmem:[#allocation2 + $0x48] sm:$0xff]
      %v320 = vld [vmem:[#allocation2 + $0x50] sm:$0xff]
      %v321 = vld [vmem:[#allocation2 + $0x60] sm:$0xff]
      %v322 = vld [vmem:[#allocation2 + $0x68] sm:$0xff]
      %v323 = vld [vmem:[#allocation2 + $0x78] sm:$0xff]
      %v324 = vld [vmem:[#allocation2 + $0x80] sm:$0xff]
      %v325 = vld [vmem:[#allocation2 + $0x90] sm:$0xff]
      %v326 = vld [vmem:[#allocation2 + $0x98] sm:$0xff]
      %v327 = vld [vmem:[#allocation2 + $0xa8] sm:$0xff]
      %v328 = vld [vmem:[#allocation2 + $0xb0] sm:$0xff]
      %v329 = vld [vmem:[#allocation2 + $0xc0] sm:$0xff]
      %v330 = vld [vmem:[#allocation2 + $0xc8] sm:$0xff]
      %v331 = vld [vmem:[#allocation2 + $0xd8] sm:$0xff]
      %v332 = vld [vmem:[#allocation2 + $0xe0] sm:$0xff]
      %v333 = vld [vmem:[#allocation2 + $0xf0] sm:$0xff]
      %v334 = vld [vmem:[#allocation2 + $0xf8] sm:$0xff]
      %v335 = vld [vmem:[#allocation2 + $0x108] sm:$0xff]
      %v336 = vld [vmem:[#allocation2 + $0x110] sm:$0xff]
      %v337 = vld [vmem:[#allocation2 + $0x120] sm:$0xff]
      %v338 = vld [vmem:[#allocation2 + $0x128] sm:$0xff]
      %v339 = vld [vmem:[#allocation2 + $0x138] sm:$0xff]
      %v340 = vld [vmem:[#allocation2 + $0x140] sm:$0xff]
      %v341 = vld [vmem:[#allocation2 + $0x150] sm:$0xff]
      %v342 = vld [vmem:[#allocation2 + $0x158] sm:$0xff]
      %v343 = vld [vmem:[#allocation2 + $0x168] sm:$0xff]
      %v344 = vld [vmem:[#allocation2 + $0x170] sm:$0xff]
      %345 = vst [vmem:[#allocation3] sm:$0xff] %v313
      %346 = vst [vmem:[#allocation3 + $0x48] sm:$0xff] %v314
      %347 = vst [vmem:[#allocation3 + $0x90] sm:$0xff] %v315
      %348 = vst [vmem:[#allocation3 + $0xd8] sm:$0xff] %v316
      %349 = vst [vmem:[#allocation3 + $0x120] sm:$0xff] %v317
      %350 = vst [vmem:[#allocation3 + $0x168] sm:$0xff] %v318
      %351 = vst [vmem:[#allocation3 + $0x1b0] sm:$0xff] %v319
      %352 = vst [vmem:[#allocation3 + $0x1f8] sm:$0xff] %v320
      %353 = vst [vmem:[#allocation3 + $0x240] sm:$0xff] %v321
      %354 = vst [vmem:[#allocation3 + $0x288] sm:$0xff] %v322
      %355 = vst [vmem:[#allocation3 + $0x2d0] sm:$0xff] %v323
      %356 = vst [vmem:[#allocation3 + $0x318] sm:$0xff] %v324
      %357 = vst [vmem:[#allocation3 + $0x360] sm:$0xff] %v325
      %358 = vst [vmem:[#allocation3 + $0x3a8] sm:$0xff] %v326
      %359 = vst [vmem:[#allocation3 + $0x3f0] sm:$0xff] %v327
      %360 = vst [vmem:[#allocation3 + $0x438] sm:$0xff] %v328
      %361 = vst [vmem:[#allocation3 + $0x480] sm:$0xff] %v329
      %362 = vst [vmem:[#allocation3 + $0x4c8] sm:$0xff] %v330
      %363 = vst [vmem:[#allocation3 + $0x510] sm:$0xff] %v331
      %364 = vst [vmem:[#allocation3 + $0x558] sm:$0xff] %v332
      %365 = vst [vmem:[#allocation3 + $0x5a0] sm:$0xff] %v333
      %366 = vst [vmem:[#allocation3 + $0x5e8] sm:$0xff] %v334
      %367 = vst [vmem:[#allocation3 + $0x630] sm:$0xff] %v335
      %368 = vst [vmem:[#allocation3 + $0x678] sm:$0xff] %v336
      %369 = vst [vmem:[#allocation3 + $0x6c0] sm:$0xff] %v337
      %370 = vst [vmem:[#allocation3 + $0x708] sm:$0xff] %v338
      %371 = vst [vmem:[#allocation3 + $0x750] sm:$0xff] %v339
      %372 = vst [vmem:[#allocation3 + $0x798] sm:$0xff] %v340
      %373 = vst [vmem:[#allocation3 + $0x7e0] sm:$0xff] %v341
      %374 = vst [vmem:[#allocation3 + $0x828] sm:$0xff] %v342
      %375 = vst [vmem:[#allocation3 + $0x870] sm:$0xff] %v343
      %376 = vst [vmem:[#allocation3 + $0x8b8] sm:$0xff] %v344
      %v377 = vld [vmem:[#allocation2 + $0x1] sm:$0xff]
      %v378 = vld [vmem:[#allocation2 + $0x9] sm:$0xff]
      %v379 = vld [vmem:[#allocation2 + $0x19] sm:$0xff]
      %v380 = vld [vmem:[#allocation2 + $0x21] sm:$0xff]
      %v381 = vld [vmem:[#allocation2 + $0x31] sm:$0xff]
      %v382 = vld [vmem:[#allocation2 + $0x39] sm:$0xff]
      %v383 = vld [vmem:[#allocation2 + $0x49] sm:$0xff]
      %v384 = vld [vmem:[#allocation2 + $0x51] sm:$0xff]
      %v385 = vld [vmem:[#allocation2 + $0x61] sm:$0xff]
      %v386 = vld [vmem:[#allocation2 + $0x69] sm:$0xff]
      %v387 = vld [vmem:[#allocation2 + $0x79] sm:$0xff]
      %v388 = vld [vmem:[#allocation2 + $0x81] sm:$0xff]
      %v389 = vld [vmem:[#allocation2 + $0x91] sm:$0xff]
      %v390 = vld [vmem:[#allocation2 + $0x99] sm:$0xff]
      %v391 = vld [vmem:[#allocation2 + $0xa9] sm:$0xff]
      %v392 = vld [vmem:[#allocation2 + $0xb1] sm:$0xff]
      %v393 = vld [vmem:[#allocation2 + $0xc1] sm:$0xff]
      %v394 = vld [vmem:[#allocation2 + $0xc9] sm:$0xff]
      %v395 = vld [vmem:[#allocation2 + $0xd9] sm:$0xff]
      %v396 = vld [vmem:[#allocation2 + $0xe1] sm:$0xff]
      %v397 = vld [vmem:[#allocation2 + $0xf1] sm:$0xff]
      %v398 = vld [vmem:[#allocation2 + $0xf9] sm:$0xff]
      %v399 = vld [vmem:[#allocation2 + $0x109] sm:$0xff]
      %v400 = vld [vmem:[#allocation2 + $0x111] sm:$0xff]
      %v401 = vld [vmem:[#allocation2 + $0x121] sm:$0xff]
      %v402 = vld [vmem:[#allocation2 + $0x129] sm:$0xff]
      %v403 = vld [vmem:[#allocation2 + $0x139] sm:$0xff]
      %v404 = vld [vmem:[#allocation2 + $0x141] sm:$0xff]
      %v405 = vld [vmem:[#allocation2 + $0x151] sm:$0xff]
      %v406 = vld [vmem:[#allocation2 + $0x159] sm:$0xff]
      %v407 = vld [vmem:[#allocation2 + $0x169] sm:$0xff]
      %v408 = vld [vmem:[#allocation2 + $0x171] sm:$0xff]
      %409 = vst [vmem:[#allocation3 + $0x8] sm:$0xff] %v377
      %410 = vst [vmem:[#allocation3 + $0x50] sm:$0xff] %v378
      %411 = vst [vmem:[#allocation3 + $0x98] sm:$0xff] %v379
      %412 = vst [vmem:[#allocation3 + $0xe0] sm:$0xff] %v380
      %413 = vst [vmem:[#allocation3 + $0x128] sm:$0xff] %v381
      %414 = vst [vmem:[#allocation3 + $0x170] sm:$0xff] %v382
      %415 = vst [vmem:[#allocation3 + $0x1b8] sm:$0xff] %v383
      %416 = vst [vmem:[#allocation3 + $0x200] sm:$0xff] %v384
      %417 = vst [vmem:[#allocation3 + $0x248] sm:$0xff] %v385
      %418 = vst [vmem:[#allocation3 + $0x290] sm:$0xff] %v386
      %419 = vst [vmem:[#allocation3 + $0x2d8] sm:$0xff] %v387
      %420 = vst [vmem:[#allocation3 + $0x320] sm:$0xff] %v388
      %421 = vst [vmem:[#allocation3 + $0x368] sm:$0xff] %v389
      %422 = vst [vmem:[#allocation3 + $0x3b0] sm:$0xff] %v390
      %423 = vst [vmem:[#allocation3 + $0x3f8] sm:$0xff] %v391
      %424 = vst [vmem:[#allocation3 + $0x440] sm:$0xff] %v392
      %425 = vst [vmem:[#allocation3 + $0x488] sm:$0xff] %v393
      %426 = vst [vmem:[#allocation3 + $0x4d0] sm:$0xff] %v394
      %427 = vst [vmem:[#allocation3 + $0x518] sm:$0xff] %v395
      %428 = vst [vmem:[#allocation3 + $0x560] sm:$0xff] %v396
      %429 = vst [vmem:[#allocation3 + $0x5a8] sm:$0xff] %v397
      %430 = vst [vmem:[#allocation3 + $0x5f0] sm:$0xff] %v398
      %431 = vst [vmem:[#allocation3 + $0x638] sm:$0xff] %v399
      %432 = vst [vmem:[#allocation3 + $0x680] sm:$0xff] %v400
      %433 = vst [vmem:[#allocation3 + $0x6c8] sm:$0xff] %v401
      %434 = vst [vmem:[#allocation3 + $0x710] sm:$0xff] %v402
      %435 = vst [vmem:[#allocation3 + $0x758] sm:$0xff] %v403
      %436 = vst [vmem:[#allocation3 + $0x7a0] sm:$0xff] %v404
      %437 = vst [vmem:[#allocation3 + $0x7e8] sm:$0xff] %v405
      %438 = vst [vmem:[#allocation3 + $0x830] sm:$0xff] %v406
      %439 = vst [vmem:[#allocation3 + $0x878] sm:$0xff] %v407
      %440 = vst [vmem:[#allocation3 + $0x8c0] sm:$0xff] %v408
      %v441 = vld [vmem:[#allocation2 + $0x2] sm:$0xff]
      %v442 = vld [vmem:[#allocation2 + $0xa] sm:$0xff]
      %v443 = vld [vmem:[#allocation2 + $0x1a] sm:$0xff]
      %v444 = vld [vmem:[#allocation2 + $0x22] sm:$0xff]
      %v445 = vld [vmem:[#allocation2 + $0x32] sm:$0xff]
      %v446 = vld [vmem:[#allocation2 + $0x3a] sm:$0xff]
      %v447 = vld [vmem:[#allocation2 + $0x4a] sm:$0xff]
      %v448 = vld [vmem:[#allocation2 + $0x52] sm:$0xff]
      %v449 = vld [vmem:[#allocation2 + $0x62] sm:$0xff]
      %v450 = vld [vmem:[#allocation2 + $0x6a] sm:$0xff]
      %v451 = vld [vmem:[#allocation2 + $0x7a] sm:$0xff]
      %v452 = vld [vmem:[#allocation2 + $0x82] sm:$0xff]
      %v453 = vld [vmem:[#allocation2 + $0x92] sm:$0xff]
      %v454 = vld [vmem:[#allocation2 + $0x9a] sm:$0xff]
      %v455 = vld [vmem:[#allocation2 + $0xaa] sm:$0xff]
      %v456 = vld [vmem:[#allocation2 + $0xb2] sm:$0xff]
      %v457 = vld [vmem:[#allocation2 + $0xc2] sm:$0xff]
      %v458 = vld [vmem:[#allocation2 + $0xca] sm:$0xff]
      %v459 = vld [vmem:[#allocation2 + $0xda] sm:$0xff]
      %v460 = vld [vmem:[#allocation2 + $0xe2] sm:$0xff]
      %v461 = vld [vmem:[#allocation2 + $0xf2] sm:$0xff]
      %v462 = vld [vmem:[#allocation2 + $0xfa] sm:$0xff]
      %v463 = vld [vmem:[#allocation2 + $0x10a] sm:$0xff]
      %v464 = vld [vmem:[#allocation2 + $0x112] sm:$0xff]
      %v465 = vld [vmem:[#allocation2 + $0x122] sm:$0xff]
      %v466 = vld [vmem:[#allocation2 + $0x12a] sm:$0xff]
      %v467 = vld [vmem:[#allocation2 + $0x13a] sm:$0xff]
      %v468 = vld [vmem:[#allocation2 + $0x142] sm:$0xff]
      %v469 = vld [vmem:[#allocation2 + $0x152] sm:$0xff]
      %v470 = vld [vmem:[#allocation2 + $0x15a] sm:$0xff]
      %v471 = vld [vmem:[#allocation2 + $0x16a] sm:$0xff]
      %v472 = vld [vmem:[#allocation2 + $0x172] sm:$0xff]
      %473 = vst [vmem:[#allocation3 + $0x10] sm:$0xff] %v441
      %474 = vst [vmem:[#allocation3 + $0x58] sm:$0xff] %v442
      %475 = vst [vmem:[#allocation3 + $0xa0] sm:$0xff] %v443
      %476 = vst [vmem:[#allocation3 + $0xe8] sm:$0xff] %v444
      %477 = vst [vmem:[#allocation3 + $0x130] sm:$0xff] %v445
      %478 = vst [vmem:[#allocation3 + $0x178] sm:$0xff] %v446
      %479 = vst [vmem:[#allocation3 + $0x1c0] sm:$0xff] %v447
      %480 = vst [vmem:[#allocation3 + $0x208] sm:$0xff] %v448
      %481 = vst [vmem:[#allocation3 + $0x250] sm:$0xff] %v449
      %482 = vst [vmem:[#allocation3 + $0x298] sm:$0xff] %v450
      %483 = vst [vmem:[#allocation3 + $0x2e0] sm:$0xff] %v451
      %484 = vst [vmem:[#allocation3 + $0x328] sm:$0xff] %v452
      %485 = vst [vmem:[#allocation3 + $0x370] sm:$0xff] %v453
      %486 = vst [vmem:[#allocation3 + $0x3b8] sm:$0xff] %v454
      %487 = vst [vmem:[#allocation3 + $0x400] sm:$0xff] %v455
      %488 = vst [vmem:[#allocation3 + $0x448] sm:$0xff] %v456
      %489 = vst [vmem:[#allocation3 + $0x490] sm:$0xff] %v457
      %490 = vst [vmem:[#allocation3 + $0x4d8] sm:$0xff] %v458
      %491 = vst [vmem:[#allocation3 + $0x520] sm:$0xff] %v459
      %492 = vst [vmem:[#allocation3 + $0x568] sm:$0xff] %v460
      %493 = vst [vmem:[#allocation3 + $0x5b0] sm:$0xff] %v461
      %494 = vst [vmem:[#allocation3 + $0x5f8] sm:$0xff] %v462
      %495 = vst [vmem:[#allocation3 + $0x640] sm:$0xff] %v463
      %496 = vst [vmem:[#allocation3 + $0x688] sm:$0xff] %v464
      %497 = vst [vmem:[#allocation3 + $0x6d0] sm:$0xff] %v465
      %498 = vst [vmem:[#allocation3 + $0x718] sm:$0xff] %v466
      %499 = vst [vmem:[#allocation3 + $0x760] sm:$0xff] %v467
      %500 = vst [vmem:[#allocation3 + $0x7a8] sm:$0xff] %v468
      %501 = vst [vmem:[#allocation3 + $0x7f0] sm:$0xff] %v469
      %502 = vst [vmem:[#allocation3 + $0x838] sm:$0xff] %v470
      %503 = vst [vmem:[#allocation3 + $0x880] sm:$0xff] %v471
      %504 = vst [vmem:[#allocation3 + $0x8c8] sm:$0xff] %v472
      %v505 = vld [vmem:[%s203] sm:$0xff]
      %v506 = vld [vmem:[%s203 + $0x8] sm:$0xff]
      %v507 = vld [vmem:[%s203 + $0x18] sm:$0xff]
      %v508 = vld [vmem:[%s203 + $0x20] sm:$0xff]
      %v509 = vld [vmem:[%s203 + $0x30] sm:$0xff]
      %v510 = vld [vmem:[%s203 + $0x38] sm:$0xff]
      %v511 = vld [vmem:[%s203 + $0x48] sm:$0xff]
      %v512 = vld [vmem:[%s203 + $0x50] sm:$0xff]
      %v513 = vld [vmem:[%s203 + $0x60] sm:$0xff]
      %v514 = vld [vmem:[%s203 + $0x68] sm:$0xff]
      %v515 = vld [vmem:[%s203 + $0x78] sm:$0xff]
      %v516 = vld [vmem:[%s203 + $0x80] sm:$0xff]
      %v517 = vld [vmem:[%s203 + $0x90] sm:$0xff]
      %v518 = vld [vmem:[%s203 + $0x98] sm:$0xff]
      %v519 = vld [vmem:[%s203 + $0xa8] sm:$0xff]
      %v520 = vld [vmem:[%s203 + $0xb0] sm:$0xff]
      %v521 = vld [vmem:[%s203 + $0xc0] sm:$0xff]
      %v522 = vld [vmem:[%s203 + $0xc8] sm:$0xff]
      %v523 = vld [vmem:[%s203 + $0xd8] sm:$0xff]
      %v524 = vld [vmem:[%s203 + $0xe0] sm:$0xff]
      %v525 = vld [vmem:[%s203 + $0xf0] sm:$0xff]
      %v526 = vld [vmem:[%s203 + $0xf8] sm:$0xff]
      %v527 = vld [vmem:[%s203 + $0x108] sm:$0xff]
      %v528 = vld [vmem:[%s203 + $0x110] sm:$0xff]
      %v529 = vld [vmem:[%s203 + $0x120] sm:$0xff]
      %v530 = vld [vmem:[%s203 + $0x128] sm:$0xff]
      %v531 = vld [vmem:[%s203 + $0x138] sm:$0xff]
      %v532 = vld [vmem:[%s203 + $0x140] sm:$0xff]
      %v533 = vld [vmem:[%s203 + $0x150] sm:$0xff]
      %v534 = vld [vmem:[%s203 + $0x158] sm:$0xff]
      %v535 = vld [vmem:[%s203 + $0x168] sm:$0xff]
      %v536 = vld [vmem:[%s203 + $0x170] sm:$0xff]
      %537 = vst [vmem:[#allocation3 + $0x18] sm:$0xff] %v505
      %538 = vst [vmem:[#allocation3 + $0x60] sm:$0xff] %v506
      %539 = vst [vmem:[#allocation3 + $0xa8] sm:$0xff] %v507
      %540 = vst [vmem:[#allocation3 + $0xf0] sm:$0xff] %v508
      %541 = vst [vmem:[#allocation3 + $0x138] sm:$0xff] %v509
      %542 = vst [vmem:[#allocation3 + $0x180] sm:$0xff] %v510
      %543 = vst [vmem:[#allocation3 + $0x1c8] sm:$0xff] %v511
      %544 = vst [vmem:[#allocation3 + $0x210] sm:$0xff] %v512
      %545 = vst [vmem:[#allocation3 + $0x258] sm:$0xff] %v513
      %546 = vst [vmem:[#allocation3 + $0x2a0] sm:$0xff] %v514
      %547 = vst [vmem:[#allocation3 + $0x2e8] sm:$0xff] %v515
      %548 = vst [vmem:[#allocation3 + $0x330] sm:$0xff] %v516
      %549 = vst [vmem:[#allocation3 + $0x378] sm:$0xff] %v517
      %550 = vst [vmem:[#allocation3 + $0x3c0] sm:$0xff] %v518
      %551 = vst [vmem:[#allocation3 + $0x408] sm:$0xff] %v519
      %552 = vst [vmem:[#allocation3 + $0x450] sm:$0xff] %v520
      %553 = vst [vmem:[#allocation3 + $0x498] sm:$0xff] %v521
      %554 = vst [vmem:[#allocation3 + $0x4e0] sm:$0xff] %v522
      %555 = vst [vmem:[#allocation3 + $0x528] sm:$0xff] %v523
      %556 = vst [vmem:[#allocation3 + $0x570] sm:$0xff] %v524
      %557 = vst [vmem:[#allocation3 + $0x5b8] sm:$0xff] %v525
      %558 = vst [vmem:[#allocation3 + $0x600] sm:$0xff] %v526
      %559 = vst [vmem:[#allocation3 + $0x648] sm:$0xff] %v527
      %560 = vst [vmem:[#allocation3 + $0x690] sm:$0xff] %v528
      %561 = vst [vmem:[#allocation3 + $0x6d8] sm:$0xff] %v529
      %562 = vst [vmem:[#allocation3 + $0x720] sm:$0xff] %v530
      %563 = vst [vmem:[#allocation3 + $0x768] sm:$0xff] %v531
      %564 = vst [vmem:[#allocation3 + $0x7b0] sm:$0xff] %v532
      %565 = vst [vmem:[#allocation3 + $0x7f8] sm:$0xff] %v533
      %566 = vst [vmem:[#allocation3 + $0x840] sm:$0xff] %v534
      %567 = vst [vmem:[#allocation3 + $0x888] sm:$0xff] %v535
      %568 = vst [vmem:[#allocation3 + $0x8d0] sm:$0xff] %v536
      %v569 = vld [vmem:[%s203 + $0x1] sm:$0xff]
      %v570 = vld [vmem:[%s203 + $0x9] sm:$0xff]
      %v571 = vld [vmem:[%s203 + $0x19] sm:$0xff]
      %v572 = vld [vmem:[%s203 + $0x21] sm:$0xff]
      %v573 = vld [vmem:[%s203 + $0x31] sm:$0xff]
      %v574 = vld [vmem:[%s203 + $0x39] sm:$0xff]
      %v575 = vld [vmem:[%s203 + $0x49] sm:$0xff]
      %v576 = vld [vmem:[%s203 + $0x51] sm:$0xff]
      %v577 = vld [vmem:[%s203 + $0x61] sm:$0xff]
      %v578 = vld [vmem:[%s203 + $0x69] sm:$0xff]
      %v579 = vld [vmem:[%s203 + $0x79] sm:$0xff]
      %v580 = vld [vmem:[%s203 + $0x81] sm:$0xff]
      %v581 = vld [vmem:[%s203 + $0x91] sm:$0xff]
      %v582 = vld [vmem:[%s203 + $0x99] sm:$0xff]
      %v583 = vld [vmem:[%s203 + $0xa9] sm:$0xff]
      %v584 = vld [vmem:[%s203 + $0xb1] sm:$0xff]
      %v585 = vld [vmem:[%s203 + $0xc1] sm:$0xff]
      %v586 = vld [vmem:[%s203 + $0xc9] sm:$0xff]
      %v587 = vld [vmem:[%s203 + $0xd9] sm:$0xff]
      %v588 = vld [vmem:[%s203 + $0xe1] sm:$0xff]
      %v589 = vld [vmem:[%s203 + $0xf1] sm:$0xff]
      %v590 = vld [vmem:[%s203 + $0xf9] sm:$0xff]
      %v591 = vld [vmem:[%s203 + $0x109] sm:$0xff]
      %v592 = vld [vmem:[%s203 + $0x111] sm:$0xff]
      %v593 = vld [vmem:[%s203 + $0x121] sm:$0xff]
      %v594 = vld [vmem:[%s203 + $0x129] sm:$0xff]
      %v595 = vld [vmem:[%s203 + $0x139] sm:$0xff]
      %v596 = vld [vmem:[%s203 + $0x141] sm:$0xff]
      %v597 = vld [vmem:[%s203 + $0x151] sm:$0xff]
      %v598 = vld [vmem:[%s203 + $0x159] sm:$0xff]
      %v599 = vld [vmem:[%s203 + $0x169] sm:$0xff]
      %v600 = vld [vmem:[%s203 + $0x171] sm:$0xff]
      %601 = vst [vmem:[#allocation3 + $0x20] sm:$0xff] %v569
      %602 = vst [vmem:[#allocation3 + $0x68] sm:$0xff] %v570
      %603 = vst [vmem:[#allocation3 + $0xb0] sm:$0xff] %v571
      %604 = vst [vmem:[#allocation3 + $0xf8] sm:$0xff] %v572
      %605 = vst [vmem:[#allocation3 + $0x140] sm:$0xff] %v573
      %606 = vst [vmem:[#allocation3 + $0x188] sm:$0xff] %v574
      %607 = vst [vmem:[#allocation3 + $0x1d0] sm:$0xff] %v575
      %608 = vst [vmem:[#allocation3 + $0x218] sm:$0xff] %v576
      %609 = vst [vmem:[#allocation3 + $0x260] sm:$0xff] %v577
      %610 = vst [vmem:[#allocation3 + $0x2a8] sm:$0xff] %v578
      %611 = vst [vmem:[#allocation3 + $0x2f0] sm:$0xff] %v579
      %612 = vst [vmem:[#allocation3 + $0x338] sm:$0xff] %v580
      %613 = vst [vmem:[#allocation3 + $0x380] sm:$0xff] %v581
      %614 = vst [vmem:[#allocation3 + $0x3c8] sm:$0xff] %v582
      %615 = vst [vmem:[#allocation3 + $0x410] sm:$0xff] %v583
      %616 = vst [vmem:[#allocation3 + $0x458] sm:$0xff] %v584
      %617 = vst [vmem:[#allocation3 + $0x4a0] sm:$0xff] %v585
      %618 = vst [vmem:[#allocation3 + $0x4e8] sm:$0xff] %v586
      %619 = vst [vmem:[#allocation3 + $0x530] sm:$0xff] %v587
      %620 = vst [vmem:[#allocation3 + $0x578] sm:$0xff] %v588
      %621 = vst [vmem:[#allocation3 + $0x5c0] sm:$0xff] %v589
      %622 = vst [vmem:[#allocation3 + $0x608] sm:$0xff] %v590
      %623 = vst [vmem:[#allocation3 + $0x650] sm:$0xff] %v591
      %624 = vst [vmem:[#allocation3 + $0x698] sm:$0xff] %v592
      %625 = vst [vmem:[#allocation3 + $0x6e0] sm:$0xff] %v593
      %626 = vst [vmem:[#allocation3 + $0x728] sm:$0xff] %v594
      %627 = vst [vmem:[#allocation3 + $0x770] sm:$0xff] %v595
      %628 = vst [vmem:[#allocation3 + $0x7b8] sm:$0xff] %v596
      %629 = vst [vmem:[#allocation3 + $0x800] sm:$0xff] %v597
      %630 = vst [vmem:[#allocation3 + $0x848] sm:$0xff] %v598
      %631 = vst [vmem:[#allocation3 + $0x890] sm:$0xff] %v599
      %632 = vst [vmem:[#allocation3 + $0x8d8] sm:$0xff] %v600
      %v633 = vld [vmem:[%s203 + $0x2] sm:$0xff]
      %v634 = vld [vmem:[%s203 + $0xa] sm:$0xff]
      %v635 = vld [vmem:[%s203 + $0x1a] sm:$0xff]
      %v636 = vld [vmem:[%s203 + $0x22] sm:$0xff]
      %v637 = vld [vmem:[%s203 + $0x32] sm:$0xff]
      %v638 = vld [vmem:[%s203 + $0x3a] sm:$0xff]
      %v639 = vld [vmem:[%s203 + $0x4a] sm:$0xff]
      %v640 = vld [vmem:[%s203 + $0x52] sm:$0xff]
      %v641 = vld [vmem:[%s203 + $0x62] sm:$0xff]
      %v642 = vld [vmem:[%s203 + $0x6a] sm:$0xff]
      %v643 = vld [vmem:[%s203 + $0x7a] sm:$0xff]
      %v644 = vld [vmem:[%s203 + $0x82] sm:$0xff]
      %v645 = vld [vmem:[%s203 + $0x92] sm:$0xff]
      %v646 = vld [vmem:[%s203 + $0x9a] sm:$0xff]
      %v647 = vld [vmem:[%s203 + $0xaa] sm:$0xff]
      %v648 = vld [vmem:[%s203 + $0xb2] sm:$0xff]
      %v649 = vld [vmem:[%s203 + $0xc2] sm:$0xff]
      %v650 = vld [vmem:[%s203 + $0xca] sm:$0xff]
      %v651 = vld [vmem:[%s203 + $0xda] sm:$0xff]
      %v652 = vld [vmem:[%s203 + $0xe2] sm:$0xff]
      %v653 = vld [vmem:[%s203 + $0xf2] sm:$0xff]
      %v654 = vld [vmem:[%s203 + $0xfa] sm:$0xff]
      %v655 = vld [vmem:[%s203 + $0x10a] sm:$0xff]
      %v656 = vld [vmem:[%s203 + $0x112] sm:$0xff]
      %v657 = vld [vmem:[%s203 + $0x122] sm:$0xff]
      %v658 = vld [vmem:[%s203 + $0x12a] sm:$0xff]
      %v659 = vld [vmem:[%s203 + $0x13a] sm:$0xff]
      %v660 = vld [vmem:[%s203 + $0x142] sm:$0xff]
      %v661 = vld [vmem:[%s203 + $0x152] sm:$0xff]
      %v662 = vld [vmem:[%s203 + $0x15a] sm:$0xff]
      %v663 = vld [vmem:[%s203 + $0x16a] sm:$0xff]
      %v664 = vld [vmem:[%s203 + $0x172] sm:$0xff]
      %665 = vst [vmem:[#allocation3 + $0x28] sm:$0xff] %v633
      %666 = vst [vmem:[#allocation3 + $0x70] sm:$0xff] %v634
      %667 = vst [vmem:[#allocation3 + $0xb8] sm:$0xff] %v635
      %668 = vst [vmem:[#allocation3 + $0x100] sm:$0xff] %v636
      %669 = vst [vmem:[#allocation3 + $0x148] sm:$0xff] %v637
      %670 = vst [vmem:[#allocation3 + $0x190] sm:$0xff] %v638
      %671 = vst [vmem:[#allocation3 + $0x1d8] sm:$0xff] %v639
      %672 = vst [vmem:[#allocation3 + $0x220] sm:$0xff] %v640
      %673 = vst [vmem:[#allocation3 + $0x268] sm:$0xff] %v641
      %674 = vst [vmem:[#allocation3 + $0x2b0] sm:$0xff] %v642
      %675 = vst [vmem:[#allocation3 + $0x2f8] sm:$0xff] %v643
      %676 = vst [vmem:[#allocation3 + $0x340] sm:$0xff] %v644
      %677 = vst [vmem:[#allocation3 + $0x388] sm:$0xff] %v645
      %678 = vst [vmem:[#allocation3 + $0x3d0] sm:$0xff] %v646
      %679 = vst [vmem:[#allocation3 + $0x418] sm:$0xff] %v647
      %680 = vst [vmem:[#allocation3 + $0x460] sm:$0xff] %v648
      %681 = vst [vmem:[#allocation3 + $0x4a8] sm:$0xff] %v649
      %682 = vst [vmem:[#allocation3 + $0x4f0] sm:$0xff] %v650
      %683 = vst [vmem:[#allocation3 + $0x538] sm:$0xff] %v651
      %684 = vst [vmem:[#allocation3 + $0x580] sm:$0xff] %v652
      %685 = vst [vmem:[#allocation3 + $0x5c8] sm:$0xff] %v653
      %686 = vst [vmem:[#allocation3 + $0x610] sm:$0xff] %v654
      %687 = vst [vmem:[#allocation3 + $0x658] sm:$0xff] %v655
      %688 = vst [vmem:[#allocation3 + $0x6a0] sm:$0xff] %v656
      %689 = vst [vmem:[#allocation3 + $0x6e8] sm:$0xff] %v657
      %690 = vst [vmem:[#allocation3 + $0x730] sm:$0xff] %v658
      %691 = vst [vmem:[#allocation3 + $0x778] sm:$0xff] %v659
      %692 = vst [vmem:[#allocation3 + $0x7c0] sm:$0xff] %v660
      %693 = vst [vmem:[#allocation3 + $0x808] sm:$0xff] %v661
      %694 = vst [vmem:[#allocation3 + $0x850] sm:$0xff] %v662
      %695 = vst [vmem:[#allocation3 + $0x898] sm:$0xff] %v663
      %696 = vst [vmem:[#allocation3 + $0x8e0] sm:$0xff] %v664
      %s697 = scalar_lea.vmem [#allocation2], 48
      %v698 = vld [vmem:[%s697] sm:$0xff]
      %v699 = vld [vmem:[%s697 + $0x8] sm:$0xff]
      %v700 = vld [vmem:[%s697 + $0x18] sm:$0xff]
      %v701 = vld [vmem:[%s697 + $0x20] sm:$0xff]
      %v702 = vld [vmem:[%s697 + $0x30] sm:$0xff]
      %v703 = vld [vmem:[%s697 + $0x38] sm:$0xff]
      %v704 = vld [vmem:[%s697 + $0x48] sm:$0xff]
      %v705 = vld [vmem:[%s697 + $0x50] sm:$0xff]
      %v706 = vld [vmem:[%s697 + $0x60] sm:$0xff]
      %v707 = vld [vmem:[%s697 + $0x68] sm:$0xff]
      %v708 = vld [vmem:[%s697 + $0x78] sm:$0xff]
      %v709 = vld [vmem:[%s697 + $0x80] sm:$0xff]
      %v710 = vld [vmem:[%s697 + $0x90] sm:$0xff]
      %v711 = vld [vmem:[%s697 + $0x98] sm:$0xff]
      %v712 = vld [vmem:[%s697 + $0xa8] sm:$0xff]
      %v713 = vld [vmem:[%s697 + $0xb0] sm:$0xff]
      %v714 = vld [vmem:[%s697 + $0xc0] sm:$0xff]
      %v715 = vld [vmem:[%s697 + $0xc8] sm:$0xff]
      %v716 = vld [vmem:[%s697 + $0xd8] sm:$0xff]
      %v717 = vld [vmem:[%s697 + $0xe0] sm:$0xff]
      %v718 = vld [vmem:[%s697 + $0xf0] sm:$0xff]
      %v719 = vld [vmem:[%s697 + $0xf8] sm:$0xff]
      %v720 = vld [vmem:[%s697 + $0x108] sm:$0xff]
      %v721 = vld [vmem:[%s697 + $0x110] sm:$0xff]
      %v722 = vld [vmem:[%s697 + $0x120] sm:$0xff]
      %v723 = vld [vmem:[%s697 + $0x128] sm:$0xff]
      %v724 = vld [vmem:[%s697 + $0x138] sm:$0xff]
      %v725 = vld [vmem:[%s697 + $0x140] sm:$0xff]
      %v726 = vld [vmem:[%s697 + $0x150] sm:$0xff]
      %v727 = vld [vmem:[%s697 + $0x158] sm:$0xff]
      %v728 = vld [vmem:[%s697 + $0x168] sm:$0xff]
      %v729 = vld [vmem:[%s697 + $0x170] sm:$0xff]
      %730 = vst [vmem:[#allocation3 + $0x30] sm:$0xff] %v698
      %731 = vst [vmem:[#allocation3 + $0x78] sm:$0xff] %v699
      %732 = vst [vmem:[#allocation3 + $0xc0] sm:$0xff] %v700
      %733 = vst [vmem:[#allocation3 + $0x108] sm:$0xff] %v701
      %734 = vst [vmem:[#allocation3 + $0x150] sm:$0xff] %v702
      %735 = vst [vmem:[#allocation3 + $0x198] sm:$0xff] %v703
      %736 = vst [vmem:[#allocation3 + $0x1e0] sm:$0xff] %v704
      %737 = vst [vmem:[#allocation3 + $0x228] sm:$0xff] %v705
      %738 = vst [vmem:[#allocation3 + $0x270] sm:$0xff] %v706
      %739 = vst [vmem:[#allocation3 + $0x2b8] sm:$0xff] %v707
      %740 = vst [vmem:[#allocation3 + $0x300] sm:$0xff] %v708
      %741 = vst [vmem:[#allocation3 + $0x348] sm:$0xff] %v709
      %742 = vst [vmem:[#allocation3 + $0x390] sm:$0xff] %v710
      %743 = vst [vmem:[#allocation3 + $0x3d8] sm:$0xff] %v711
      %744 = vst [vmem:[#allocation3 + $0x420] sm:$0xff] %v712
      %745 = vst [vmem:[#allocation3 + $0x468] sm:$0xff] %v713
      %746 = vst [vmem:[#allocation3 + $0x4b0] sm:$0xff] %v714
      %747 = vst [vmem:[#allocation3 + $0x4f8] sm:$0xff] %v715
      %748 = vst [vmem:[#allocation3 + $0x540] sm:$0xff] %v716
      %749 = vst [vmem:[#allocation3 + $0x588] sm:$0xff] %v717
      %750 = vst [vmem:[#allocation3 + $0x5d0] sm:$0xff] %v718
      %751 = vst [vmem:[#allocation3 + $0x618] sm:$0xff] %v719
      %752 = vst [vmem:[#allocation3 + $0x660] sm:$0xff] %v720
      %753 = vst [vmem:[#allocation3 + $0x6a8] sm:$0xff] %v721
      %754 = vst [vmem:[#allocation3 + $0x6f0] sm:$0xff] %v722
      %755 = vst [vmem:[#allocation3 + $0x738] sm:$0xff] %v723
      %756 = vst [vmem:[#allocation3 + $0x780] sm:$0xff] %v724
      %757 = vst [vmem:[#allocation3 + $0x7c8] sm:$0xff] %v725
      %758 = vst [vmem:[#allocation3 + $0x810] sm:$0xff] %v726
      %759 = vst [vmem:[#allocation3 + $0x858] sm:$0xff] %v727
      %760 = vst [vmem:[#allocation3 + $0x8a0] sm:$0xff] %v728
      %761 = vst [vmem:[#allocation3 + $0x8e8] sm:$0xff] %v729
      %v762 = vld [vmem:[%s697 + $0x1] sm:$0xff]
      %v763 = vld [vmem:[%s697 + $0x9] sm:$0xff]
      %v764 = vld [vmem:[%s697 + $0x19] sm:$0xff]
      %v765 = vld [vmem:[%s697 + $0x21] sm:$0xff]
      %v766 = vld [vmem:[%s697 + $0x31] sm:$0xff]
      %v767 = vld [vmem:[%s697 + $0x39] sm:$0xff]
      %v768 = vld [vmem:[%s697 + $0x49] sm:$0xff]
      %v769 = vld [vmem:[%s697 + $0x51] sm:$0xff]
      %v770 = vld [vmem:[%s697 + $0x61] sm:$0xff]
      %v771 = vld [vmem:[%s697 + $0x69] sm:$0xff]
      %v772 = vld [vmem:[%s697 + $0x79] sm:$0xff]
      %v773 = vld [vmem:[%s697 + $0x81] sm:$0xff]
      %v774 = vld [vmem:[%s697 + $0x91] sm:$0xff]
      %v775 = vld [vmem:[%s697 + $0x99] sm:$0xff]
      %v776 = vld [vmem:[%s697 + $0xa9] sm:$0xff]
      %v777 = vld [vmem:[%s697 + $0xb1] sm:$0xff]
      %v778 = vld [vmem:[%s697 + $0xc1] sm:$0xff]
      %v779 = vld [vmem:[%s697 + $0xc9] sm:$0xff]
      %v780 = vld [vmem:[%s697 + $0xd9] sm:$0xff]
      %v781 = vld [vmem:[%s697 + $0xe1] sm:$0xff]
      %v782 = vld [vmem:[%s697 + $0xf1] sm:$0xff]
      %v783 = vld [vmem:[%s697 + $0xf9] sm:$0xff]
      %v784 = vld [vmem:[%s697 + $0x109] sm:$0xff]
      %v785 = vld [vmem:[%s697 + $0x111] sm:$0xff]
      %v786 = vld [vmem:[%s697 + $0x121] sm:$0xff]
      %v787 = vld [vmem:[%s697 + $0x129] sm:$0xff]
      %v788 = vld [vmem:[%s697 + $0x139] sm:$0xff]
      %v789 = vld [vmem:[%s697 + $0x141] sm:$0xff]
      %v790 = vld [vmem:[%s697 + $0x151] sm:$0xff]
      %v791 = vld [vmem:[%s697 + $0x159] sm:$0xff]
      %v792 = vld [vmem:[%s697 + $0x169] sm:$0xff]
      %v793 = vld [vmem:[%s697 + $0x171] sm:$0xff]
      %794 = vst [vmem:[#allocation3 + $0x38] sm:$0xff] %v762
      %795 = vst [vmem:[#allocation3 + $0x80] sm:$0xff] %v763
      %796 = vst [vmem:[#allocation3 + $0xc8] sm:$0xff] %v764
      %797 = vst [vmem:[#allocation3 + $0x110] sm:$0xff] %v765
      %798 = vst [vmem:[#allocation3 + $0x158] sm:$0xff] %v766
      %799 = vst [vmem:[#allocation3 + $0x1a0] sm:$0xff] %v767
      %800 = vst [vmem:[#allocation3 + $0x1e8] sm:$0xff] %v768
      %801 = vst [vmem:[#allocation3 + $0x230] sm:$0xff] %v769
      %802 = vst [vmem:[#allocation3 + $0x278] sm:$0xff] %v770
      %803 = vst [vmem:[#allocation3 + $0x2c0] sm:$0xff] %v771
      %804 = vst [vmem:[#allocation3 + $0x308] sm:$0xff] %v772
      %805 = vst [vmem:[#allocation3 + $0x350] sm:$0xff] %v773
      %806 = vst [vmem:[#allocation3 + $0x398] sm:$0xff] %v774
      %807 = vst [vmem:[#allocation3 + $0x3e0] sm:$0xff] %v775
      %808 = vst [vmem:[#allocation3 + $0x428] sm:$0xff] %v776
      %809 = vst [vmem:[#allocation3 + $0x470] sm:$0xff] %v777
      %810 = vst [vmem:[#allocation3 + $0x4b8] sm:$0xff] %v778
      %811 = vst [vmem:[#allocation3 + $0x500] sm:$0xff] %v779
      %812 = vst [vmem:[#allocation3 + $0x548] sm:$0xff] %v780
      %813 = vst [vmem:[#allocation3 + $0x590] sm:$0xff] %v781
      %814 = vst [vmem:[#allocation3 + $0x5d8] sm:$0xff] %v782
      %815 = vst [vmem:[#allocation3 + $0x620] sm:$0xff] %v783
      %816 = vst [vmem:[#allocation3 + $0x668] sm:$0xff] %v784
      %817 = vst [vmem:[#allocation3 + $0x6b0] sm:$0xff] %v785
      %818 = vst [vmem:[#allocation3 + $0x6f8] sm:$0xff] %v786
      %819 = vst [vmem:[#allocation3 + $0x740] sm:$0xff] %v787
      %820 = vst [vmem:[#allocation3 + $0x788] sm:$0xff] %v788
      %821 = vst [vmem:[#allocation3 + $0x7d0] sm:$0xff] %v789
      %822 = vst [vmem:[#allocation3 + $0x818] sm:$0xff] %v790
      %823 = vst [vmem:[#allocation3 + $0x860] sm:$0xff] %v791
      %824 = vst [vmem:[#allocation3 + $0x8a8] sm:$0xff] %v792
      %825 = vst [vmem:[#allocation3 + $0x8f0] sm:$0xff] %v793
      %v826 = vld [vmem:[%s697 + $0x2] sm:$0xff]
      %v827 = vld [vmem:[%s697 + $0xa] sm:$0xff]
      %v828 = vld [vmem:[%s697 + $0x1a] sm:$0xff]
      %v829 = vld [vmem:[%s697 + $0x22] sm:$0xff]
      %v830 = vld [vmem:[%s697 + $0x32] sm:$0xff]
      %v831 = vld [vmem:[%s697 + $0x3a] sm:$0xff]
      %v832 = vld [vmem:[%s697 + $0x4a] sm:$0xff]
      %v833 = vld [vmem:[%s697 + $0x52] sm:$0xff]
      %v834 = vld [vmem:[%s697 + $0x62] sm:$0xff]
      %v835 = vld [vmem:[%s697 + $0x6a] sm:$0xff]
      %v836 = vld [vmem:[%s697 + $0x7a] sm:$0xff]
      %v837 = vld [vmem:[%s697 + $0x82] sm:$0xff]
      %v838 = vld [vmem:[%s697 + $0x92] sm:$0xff]
      %v839 = vld [vmem:[%s697 + $0x9a] sm:$0xff]
      %v840 = vld [vmem:[%s697 + $0xaa] sm:$0xff]
      %v841 = vld [vmem:[%s697 + $0xb2] sm:$0xff]
      %v842 = vld [vmem:[%s697 + $0xc2] sm:$0xff]
      %v843 = vld [vmem:[%s697 + $0xca] sm:$0xff]
      %v844 = vld [vmem:[%s697 + $0xda] sm:$0xff]
      %v845 = vld [vmem:[%s697 + $0xe2] sm:$0xff]
      %v846 = vld [vmem:[%s697 + $0xf2] sm:$0xff]
      %v847 = vld [vmem:[%s697 + $0xfa] sm:$0xff]
      %v848 = vld [vmem:[%s697 + $0x10a] sm:$0xff]
      %v849 = vld [vmem:[%s697 + $0x112] sm:$0xff]
      %v850 = vld [vmem:[%s697 + $0x122] sm:$0xff]
      %v851 = vld [vmem:[%s697 + $0x12a] sm:$0xff]
      %v852 = vld [vmem:[%s697 + $0x13a] sm:$0xff]
      %v853 = vld [vmem:[%s697 + $0x142] sm:$0xff]
      %v854 = vld [vmem:[%s697 + $0x152] sm:$0xff]
      %v855 = vld [vmem:[%s697 + $0x15a] sm:$0xff]
      %v856 = vld [vmem:[%s697 + $0x16a] sm:$0xff]
      %v857 = vld [vmem:[%s697 + $0x172] sm:$0xff]
      %858 = vst [vmem:[#allocation3 + $0x40] sm:$0xff] %v826
      %859 = vst [vmem:[#allocation3 + $0x88] sm:$0xff] %v827
      %860 = vst [vmem:[#allocation3 + $0xd0] sm:$0xff] %v828
      %861 = vst [vmem:[#allocation3 + $0x118] sm:$0xff] %v829
      %862 = vst [vmem:[#allocation3 + $0x160] sm:$0xff] %v830
      %863 = vst [vmem:[#allocation3 + $0x1a8] sm:$0xff] %v831
      %864 = vst [vmem:[#allocation3 + $0x1f0] sm:$0xff] %v832
      %865 = vst [vmem:[#allocation3 + $0x238] sm:$0xff] %v833
      %866 = vst [vmem:[#allocation3 + $0x280] sm:$0xff] %v834
      %867 = vst [vmem:[#allocation3 + $0x2c8] sm:$0xff] %v835
      %868 = vst [vmem:[#allocation3 + $0x310] sm:$0xff] %v836
      %869 = vst [vmem:[#allocation3 + $0x358] sm:$0xff] %v837
      %870 = vst [vmem:[#allocation3 + $0x3a0] sm:$0xff] %v838
      %871 = vst [vmem:[#allocation3 + $0x3e8] sm:$0xff] %v839
      %872 = vst [vmem:[#allocation3 + $0x430] sm:$0xff] %v840
      %873 = vst [vmem:[#allocation3 + $0x478] sm:$0xff] %v841
      %874 = vst [vmem:[#allocation3 + $0x4c0] sm:$0xff] %v842
      %875 = vst [vmem:[#allocation3 + $0x508] sm:$0xff] %v843
      %876 = vst [vmem:[#allocation3 + $0x550] sm:$0xff] %v844
      %877 = vst [vmem:[#allocation3 + $0x598] sm:$0xff] %v845
      %878 = vst [vmem:[#allocation3 + $0x5e0] sm:$0xff] %v846
      %879 = vst [vmem:[#allocation3 + $0x628] sm:$0xff] %v847
      %880 = vst [vmem:[#allocation3 + $0x670] sm:$0xff] %v848
      %881 = vst [vmem:[#allocation3 + $0x6b8] sm:$0xff] %v849
      %882 = vst [vmem:[#allocation3 + $0x700] sm:$0xff] %v850
      %883 = vst [vmem:[#allocation3 + $0x748] sm:$0xff] %v851
      %884 = vst [vmem:[#allocation3 + $0x790] sm:$0xff] %v852
      %885 = vst [vmem:[#allocation3 + $0x7d8] sm:$0xff] %v853
      %886 = vst [vmem:[#allocation3 + $0x820] sm:$0xff] %v854
      %887 = vst [vmem:[#allocation3 + $0x868] sm:$0xff] %v855
      %888 = vst [vmem:[#allocation3 + $0x8b0] sm:$0xff] %v856
      %889 = vst [vmem:[#allocation3 + $0x8f8] sm:$0xff] %v857
      %v890 = vld [vmem:[#allocation3] sm:$0xff]
      %v891 = vld [vmem:[#allocation3 + $0x8] sm:$0xff]
      %v892 = vld [vmem:[#allocation3 + $0x10] sm:$0xff]
      %v893 = vld [vmem:[#allocation3 + $0x18] sm:$0xff]
      %v894 = vld [vmem:[#allocation3 + $0x20] sm:$0xff]
      %v895 = vld [vmem:[#allocation3 + $0x28] sm:$0xff]
      %v896 = vld [vmem:[#allocation3 + $0x30] sm:$0xff]
      %v897 = vld [vmem:[#allocation3 + $0x38] sm:$0xff]
      %v898 = vld [vmem:[#allocation3 + $0x40] sm:$0xff]
      %v899 = vld [vmem:[#allocation3 + $0x48] sm:$0xff]
      %v900 = vld [vmem:[#allocation3 + $0x50] sm:$0xff]
      %v901 = vld [vmem:[#allocation3 + $0x58] sm:$0xff]
      %v902 = vld [vmem:[#allocation3 + $0x60] sm:$0xff]
      %v903 = vld [vmem:[#allocation3 + $0x68] sm:$0xff]
      %v904 = vld [vmem:[#allocation3 + $0x70] sm:$0xff]
      %v905 = vld [vmem:[#allocation3 + $0x78] sm:$0xff]
      %v906 = vld [vmem:[#allocation3 + $0x80] sm:$0xff]
      %v907 = vld [vmem:[#allocation3 + $0x88] sm:$0xff]
      %v908 = vld [vmem:[#allocation3 + $0x90] sm:$0xff]
      %v909 = vld [vmem:[#allocation3 + $0x98] sm:$0xff]
      %v910 = vld [vmem:[#allocation3 + $0xa0] sm:$0xff]
      %v911 = vld [vmem:[#allocation3 + $0xa8] sm:$0xff]
      %v912 = vld [vmem:[#allocation3 + $0xb0] sm:$0xff]
      %v913 = vld [vmem:[#allocation3 + $0xb8] sm:$0xff]
      %v914 = vld [vmem:[#allocation3 + $0xc0] sm:$0xff]
      %v915 = vld [vmem:[#allocation3 + $0xc8] sm:$0xff]
      %v916 = vld [vmem:[#allocation3 + $0xd0] sm:$0xff]
      %v917 = vld [vmem:[#allocation3 + $0xd8] sm:$0xff]
      %v918 = vld [vmem:[#allocation3 + $0xe0] sm:$0xff]
      %v919 = vld [vmem:[#allocation3 + $0xe8] sm:$0xff]
      %v920 = vld [vmem:[#allocation3 + $0xf0] sm:$0xff]
      %v921 = vld [vmem:[#allocation3 + $0xf8] sm:$0xff]
      %v922 = vld [vmem:[#allocation3 + $0x100] sm:$0xff]
      %v923 = vld [vmem:[#allocation3 + $0x108] sm:$0xff]
      %v924 = vld [vmem:[#allocation3 + $0x110] sm:$0xff]
      %v925 = vld [vmem:[#allocation3 + $0x118] sm:$0xff]
      %v926 = vld [vmem:[#allocation3 + $0x120] sm:$0xff]
      %v927 = vld [vmem:[#allocation3 + $0x128] sm:$0xff]
      %v928 = vld [vmem:[#allocation3 + $0x130] sm:$0xff]
      %v929 = vld [vmem:[#allocation3 + $0x138] sm:$0xff]
      %v930 = vld [vmem:[#allocation3 + $0x140] sm:$0xff]
      %v931 = vld [vmem:[#allocation3 + $0x148] sm:$0xff]
      %v932 = vld [vmem:[#allocation3 + $0x150] sm:$0xff]
      %v933 = vld [vmem:[#allocation3 + $0x158] sm:$0xff]
      %v934 = vld [vmem:[#allocation3 + $0x160] sm:$0xff]
      %v935 = vld [vmem:[#allocation3 + $0x168] sm:$0xff]
      %v936 = vld [vmem:[#allocation3 + $0x170] sm:$0xff]
      %v937 = vld [vmem:[#allocation3 + $0x178] sm:$0xff]
      %v938 = vld [vmem:[#allocation3 + $0x180] sm:$0xff]
      %v939 = vld [vmem:[#allocation3 + $0x188] sm:$0xff]
      %v940 = vld [vmem:[#allocation3 + $0x190] sm:$0xff]
      %v941 = vld [vmem:[#allocation3 + $0x198] sm:$0xff]
      %v942 = vld [vmem:[#allocation3 + $0x1a0] sm:$0xff]
      %v943 = vld [vmem:[#allocation3 + $0x1a8] sm:$0xff]
      %v944 = vld [vmem:[#allocation3 + $0x1b0] sm:$0xff]
      %v945 = vld [vmem:[#allocation3 + $0x1b8] sm:$0xff]
      %v946 = vld [vmem:[#allocation3 + $0x1c0] sm:$0xff]
      %v947 = vld [vmem:[#allocation3 + $0x1c8] sm:$0xff]
      %v948 = vld [vmem:[#allocation3 + $0x1d0] sm:$0xff]
      %v949 = vld [vmem:[#allocation3 + $0x1d8] sm:$0xff]
      %v950 = vld [vmem:[#allocation3 + $0x1e0] sm:$0xff]
      %v951 = vld [vmem:[#allocation3 + $0x1e8] sm:$0xff]
      %v952 = vld [vmem:[#allocation3 + $0x1f0] sm:$0xff]
      %v953 = vld [vmem:[#allocation3 + $0x1f8] sm:$0xff]
      %v954 = vld [vmem:[#allocation3 + $0x200] sm:$0xff]
      %v955 = vld [vmem:[#allocation3 + $0x208] sm:$0xff]
      %v956 = vld [vmem:[#allocation3 + $0x210] sm:$0xff]
      %v957 = vld [vmem:[#allocation3 + $0x218] sm:$0xff]
      %v958 = vld [vmem:[#allocation3 + $0x220] sm:$0xff]
      %v959 = vld [vmem:[#allocation3 + $0x228] sm:$0xff]
      %v960 = vld [vmem:[#allocation3 + $0x230] sm:$0xff]
      %v961 = vld [vmem:[#allocation3 + $0x238] sm:$0xff]
      %v962 = vld [vmem:[#allocation3 + $0x240] sm:$0xff]
      %v963 = vld [vmem:[#allocation3 + $0x248] sm:$0xff]
      %v964 = vld [vmem:[#allocation3 + $0x250] sm:$0xff]
      %v965 = vld [vmem:[#allocation3 + $0x258] sm:$0xff]
      %v966 = vld [vmem:[#allocation3 + $0x260] sm:$0xff]
      %v967 = vld [vmem:[#allocation3 + $0x268] sm:$0xff]
      %v968 = vld [vmem:[#allocation3 + $0x270] sm:$0xff]
      %v969 = vld [vmem:[#allocation3 + $0x278] sm:$0xff]
      %v970 = vld [vmem:[#allocation3 + $0x280] sm:$0xff]
      %v971 = vld [vmem:[#allocation3 + $0x288] sm:$0xff]
      %v972 = vld [vmem:[#allocation3 + $0x290] sm:$0xff]
      %v973 = vld [vmem:[#allocation3 + $0x298] sm:$0xff]
      %v974 = vld [vmem:[#allocation3 + $0x2a0] sm:$0xff]
      %v975 = vld [vmem:[#allocation3 + $0x2a8] sm:$0xff]
      %v976 = vld [vmem:[#allocation3 + $0x2b0] sm:$0xff]
      %v977 = vld [vmem:[#allocation3 + $0x2b8] sm:$0xff]
      %v978 = vld [vmem:[#allocation3 + $0x2c0] sm:$0xff]
      %v979 = vld [vmem:[#allocation3 + $0x2c8] sm:$0xff]
      %v980 = vld [vmem:[#allocation3 + $0x2d0] sm:$0xff]
      %v981 = vld [vmem:[#allocation3 + $0x2d8] sm:$0xff]
      %v982 = vld [vmem:[#allocation3 + $0x2e0] sm:$0xff]
      %v983 = vld [vmem:[#allocation3 + $0x2e8] sm:$0xff]
      %v984 = vld [vmem:[#allocation3 + $0x2f0] sm:$0xff]
      %v985 = vld [vmem:[#allocation3 + $0x2f8] sm:$0xff]
      %v986 = vld [vmem:[#allocation3 + $0x300] sm:$0xff]
      %v987 = vld [vmem:[#allocation3 + $0x308] sm:$0xff]
      %v988 = vld [vmem:[#allocation3 + $0x310] sm:$0xff]
      %v989 = vld [vmem:[#allocation3 + $0x318] sm:$0xff]
      %v990 = vld [vmem:[#allocation3 + $0x320] sm:$0xff]
      %v991 = vld [vmem:[#allocation3 + $0x328] sm:$0xff]
      %v992 = vld [vmem:[#allocation3 + $0x330] sm:$0xff]
      %v993 = vld [vmem:[#allocation3 + $0x338] sm:$0xff]
      %v994 = vld [vmem:[#allocation3 + $0x340] sm:$0xff]
      %v995 = vld [vmem:[#allocation3 + $0x348] sm:$0xff]
      %v996 = vld [vmem:[#allocation3 + $0x350] sm:$0xff]
      %v997 = vld [vmem:[#allocation3 + $0x358] sm:$0xff]
      %v998 = vld [vmem:[#allocation3 + $0x360] sm:$0xff]
      %v999 = vld [vmem:[#allocation3 + $0x368] sm:$0xff]
      %v1000 = vld [vmem:[#allocation3 + $0x370] sm:$0xff]
      %v1001 = vld [vmem:[#allocation3 + $0x378] sm:$0xff]
      %v1002 = vld [vmem:[#allocation3 + $0x380] sm:$0xff]
      %v1003 = vld [vmem:[#allocation3 + $0x388] sm:$0xff]
      %v1004 = vld [vmem:[#allocation3 + $0x390] sm:$0xff]
      %v1005 = vld [vmem:[#allocation3 + $0x398] sm:$0xff]
      %v1006 = vld [vmem:[#allocation3 + $0x3a0] sm:$0xff]
      %v1007 = vld [vmem:[#allocation3 + $0x3a8] sm:$0xff]
      %v1008 = vld [vmem:[#allocation3 + $0x3b0] sm:$0xff]
      %v1009 = vld [vmem:[#allocation3 + $0x3b8] sm:$0xff]
      %v1010 = vld [vmem:[#allocation3 + $0x3c0] sm:$0xff]
      %v1011 = vld [vmem:[#allocation3 + $0x3c8] sm:$0xff]
      %v1012 = vld [vmem:[#allocation3 + $0x3d0] sm:$0xff]
      %v1013 = vld [vmem:[#allocation3 + $0x3d8] sm:$0xff]
      %v1014 = vld [vmem:[#allocation3 + $0x3e0] sm:$0xff]
      %v1015 = vld [vmem:[#allocation3 + $0x3e8] sm:$0xff]
      %v1016 = vld [vmem:[#allocation3 + $0x3f0] sm:$0xff]
      %v1017 = vld [vmem:[#allocation3 + $0x3f8] sm:$0xff]
      %v1018 = vld [vmem:[#allocation3 + $0x400] sm:$0xff]
      %v1019 = vld [vmem:[#allocation3 + $0x408] sm:$0xff]
      %v1020 = vld [vmem:[#allocation3 + $0x410] sm:$0xff]
      %v1021 = vld [vmem:[#allocation3 + $0x418] sm:$0xff]
      %v1022 = vld [vmem:[#allocation3 + $0x420] sm:$0xff]
      %v1023 = vld [vmem:[#allocation3 + $0x428] sm:$0xff]
      %v1024 = vld [vmem:[#allocation3 + $0x430] sm:$0xff]
      %v1025 = vld [vmem:[#allocation3 + $0x438] sm:$0xff]
      %v1026 = vld [vmem:[#allocation3 + $0x440] sm:$0xff]
      %v1027 = vld [vmem:[#allocation3 + $0x448] sm:$0xff]
      %v1028 = vld [vmem:[#allocation3 + $0x450] sm:$0xff]
      %v1029 = vld [vmem:[#allocation3 + $0x458] sm:$0xff]
      %v1030 = vld [vmem:[#allocation3 + $0x460] sm:$0xff]
      %v1031 = vld [vmem:[#allocation3 + $0x468] sm:$0xff]
      %v1032 = vld [vmem:[#allocation3 + $0x470] sm:$0xff]
      %v1033 = vld [vmem:[#allocation3 + $0x478] sm:$0xff]
      %v1034 = vld [vmem:[#allocation3 + $0x480] sm:$0xff]
      %v1035 = vld [vmem:[#allocation3 + $0x488] sm:$0xff]
      %v1036 = vld [vmem:[#allocation3 + $0x490] sm:$0xff]
      %v1037 = vld [vmem:[#allocation3 + $0x498] sm:$0xff]
      %v1038 = vld [vmem:[#allocation3 + $0x4a0] sm:$0xff]
      %v1039 = vld [vmem:[#allocation3 + $0x4a8] sm:$0xff]
      %v1040 = vld [vmem:[#allocation3 + $0x4b0] sm:$0xff]
      %v1041 = vld [vmem:[#allocation3 + $0x4b8] sm:$0xff]
      %v1042 = vld [vmem:[#allocation3 + $0x4c0] sm:$0xff]
      %v1043 = vld [vmem:[#allocation3 + $0x4c8] sm:$0xff]
      %v1044 = vld [vmem:[#allocation3 + $0x4d0] sm:$0xff]
      %v1045 = vld [vmem:[#allocation3 + $0x4d8] sm:$0xff]
      %v1046 = vld [vmem:[#allocation3 + $0x4e0] sm:$0xff]
      %v1047 = vld [vmem:[#allocation3 + $0x4e8] sm:$0xff]
      %v1048 = vld [vmem:[#allocation3 + $0x4f0] sm:$0xff]
      %v1049 = vld [vmem:[#allocation3 + $0x4f8] sm:$0xff]
      %v1050 = vld [vmem:[#allocation3 + $0x500] sm:$0xff]
      %v1051 = vld [vmem:[#allocation3 + $0x508] sm:$0xff]
      %v1052 = vld [vmem:[#allocation3 + $0x510] sm:$0xff]
      %v1053 = vld [vmem:[#allocation3 + $0x518] sm:$0xff]
      %v1054 = vld [vmem:[#allocation3 + $0x520] sm:$0xff]
      %v1055 = vld [vmem:[#allocation3 + $0x528] sm:$0xff]
      %v1056 = vld [vmem:[#allocation3 + $0x530] sm:$0xff]
      %v1057 = vld [vmem:[#allocation3 + $0x538] sm:$0xff]
      %v1058 = vld [vmem:[#allocation3 + $0x540] sm:$0xff]
      %v1059 = vld [vmem:[#allocation3 + $0x548] sm:$0xff]
      %v1060 = vld [vmem:[#allocation3 + $0x550] sm:$0xff]
      %v1061 = vld [vmem:[#allocation3 + $0x558] sm:$0xff]
      %v1062 = vld [vmem:[#allocation3 + $0x560] sm:$0xff]
      %v1063 = vld [vmem:[#allocation3 + $0x568] sm:$0xff]
      %v1064 = vld [vmem:[#allocation3 + $0x570] sm:$0xff]
      %v1065 = vld [vmem:[#allocation3 + $0x578] sm:$0xff]
      %v1066 = vld [vmem:[#allocation3 + $0x580] sm:$0xff]
      %v1067 = vld [vmem:[#allocation3 + $0x588] sm:$0xff]
      %v1068 = vld [vmem:[#allocation3 + $0x590] sm:$0xff]
      %v1069 = vld [vmem:[#allocation3 + $0x598] sm:$0xff]
      %v1070 = vld [vmem:[#allocation3 + $0x5a0] sm:$0xff]
      %v1071 = vld [vmem:[#allocation3 + $0x5a8] sm:$0xff]
      %v1072 = vld [vmem:[#allocation3 + $0x5b0] sm:$0xff]
      %v1073 = vld [vmem:[#allocation3 + $0x5b8] sm:$0xff]
      %v1074 = vld [vmem:[#allocation3 + $0x5c0] sm:$0xff]
      %v1075 = vld [vmem:[#allocation3 + $0x5c8] sm:$0xff]
      %v1076 = vld [vmem:[#allocation3 + $0x5d0] sm:$0xff]
      %v1077 = vld [vmem:[#allocation3 + $0x5d8] sm:$0xff]
      %v1078 = vld [vmem:[#allocation3 + $0x5e0] sm:$0xff]
      %v1079 = vld [vmem:[#allocation3 + $0x5e8] sm:$0xff]
      %v1080 = vld [vmem:[#allocation3 + $0x5f0] sm:$0xff]
      %v1081 = vld [vmem:[#allocation3 + $0x5f8] sm:$0xff]
      %v1082 = vld [vmem:[#allocation3 + $0x600] sm:$0xff]
      %v1083 = vld [vmem:[#allocation3 + $0x608] sm:$0xff]
      %v1084 = vld [vmem:[#allocation3 + $0x610] sm:$0xff]
      %v1085 = vld [vmem:[#allocation3 + $0x618] sm:$0xff]
      %v1086 = vld [vmem:[#allocation3 + $0x620] sm:$0xff]
      %v1087 = vld [vmem:[#allocation3 + $0x628] sm:$0xff]
      %v1088 = vld [vmem:[#allocation3 + $0x630] sm:$0xff]
      %v1089 = vld [vmem:[#allocation3 + $0x638] sm:$0xff]
      %v1090 = vld [vmem:[#allocation3 + $0x640] sm:$0xff]
      %v1091 = vld [vmem:[#allocation3 + $0x648] sm:$0xff]
      %v1092 = vld [vmem:[#allocation3 + $0x650] sm:$0xff]
      %v1093 = vld [vmem:[#allocation3 + $0x658] sm:$0xff]
      %v1094 = vld [vmem:[#allocation3 + $0x660] sm:$0xff]
      %v1095 = vld [vmem:[#allocation3 + $0x668] sm:$0xff]
      %v1096 = vld [vmem:[#allocation3 + $0x670] sm:$0xff]
      %v1097 = vld [vmem:[#allocation3 + $0x678] sm:$0xff]
      %v1098 = vld [vmem:[#allocation3 + $0x680] sm:$0xff]
      %v1099 = vld [vmem:[#allocation3 + $0x688] sm:$0xff]
      %v1100 = vld [vmem:[#allocation3 + $0x690] sm:$0xff]
      %v1101 = vld [vmem:[#allocation3 + $0x698] sm:$0xff]
      %v1102 = vld [vmem:[#allocation3 + $0x6a0] sm:$0xff]
      %v1103 = vld [vmem:[#allocation3 + $0x6a8] sm:$0xff]
      %v1104 = vld [vmem:[#allocation3 + $0x6b0] sm:$0xff]
      %v1105 = vld [vmem:[#allocation3 + $0x6b8] sm:$0xff]
      %v1106 = vld [vmem:[#allocation3 + $0x6c0] sm:$0xff]
      %v1107 = vld [vmem:[#allocation3 + $0x6c8] sm:$0xff]
      %v1108 = vld [vmem:[#allocation3 + $0x6d0] sm:$0xff]
      %v1109 = vld [vmem:[#allocation3 + $0x6d8] sm:$0xff]
      %v1110 = vld [vmem:[#allocation3 + $0x6e0] sm:$0xff]
      %v1111 = vld [vmem:[#allocation3 + $0x6e8] sm:$0xff]
      %v1112 = vld [vmem:[#allocation3 + $0x6f0] sm:$0xff]
      %v1113 = vld [vmem:[#allocation3 + $0x6f8] sm:$0xff]
      %v1114 = vld [vmem:[#allocation3 + $0x700] sm:$0xff]
      %v1115 = vld [vmem:[#allocation3 + $0x708] sm:$0xff]
      %v1116 = vld [vmem:[#allocation3 + $0x710] sm:$0xff]
      %v1117 = vld [vmem:[#allocation3 + $0x718] sm:$0xff]
      %v1118 = vld [vmem:[#allocation3 + $0x720] sm:$0xff]
      %v1119 = vld [vmem:[#allocation3 + $0x728] sm:$0xff]
      %v1120 = vld [vmem:[#allocation3 + $0x730] sm:$0xff]
      %v1121 = vld [vmem:[#allocation3 + $0x738] sm:$0xff]
      %v1122 = vld [vmem:[#allocation3 + $0x740] sm:$0xff]
      %v1123 = vld [vmem:[#allocation3 + $0x748] sm:$0xff]
      %v1124 = vld [vmem:[#allocation3 + $0x750] sm:$0xff]
      %v1125 = vld [vmem:[#allocation3 + $0x758] sm:$0xff]
      %v1126 = vld [vmem:[#allocation3 + $0x760] sm:$0xff]
      %v1127 = vld [vmem:[#allocation3 + $0x768] sm:$0xff]
      %v1128 = vld [vmem:[#allocation3 + $0x770] sm:$0xff]
      %v1129 = vld [vmem:[#allocation3 + $0x778] sm:$0xff]
      %v1130 = vld [vmem:[#allocation3 + $0x780] sm:$0xff]
      %v1131 = vld [vmem:[#allocation3 + $0x788] sm:$0xff]
      %v1132 = vld [vmem:[#allocation3 + $0x790] sm:$0xff]
      %v1133 = vld [vmem:[#allocation3 + $0x798] sm:$0xff]
      %v1134 = vld [vmem:[#allocation3 + $0x7a0] sm:$0xff]
      %v1135 = vld [vmem:[#allocation3 + $0x7a8] sm:$0xff]
      %v1136 = vld [vmem:[#allocation3 + $0x7b0] sm:$0xff]
      %v1137 = vld [vmem:[#allocation3 + $0x7b8] sm:$0xff]
      %v1138 = vld [vmem:[#allocation3 + $0x7c0] sm:$0xff]
      %v1139 = vld [vmem:[#allocation3 + $0x7c8] sm:$0xff]
      %v1140 = vld [vmem:[#allocation3 + $0x7d0] sm:$0xff]
      %v1141 = vld [vmem:[#allocation3 + $0x7d8] sm:$0xff]
      %v1142 = vld [vmem:[#allocation3 + $0x7e0] sm:$0xff]
      %v1143 = vld [vmem:[#allocation3 + $0x7e8] sm:$0xff]
      %v1144 = vld [vmem:[#allocation3 + $0x7f0] sm:$0xff]
      %v1145 = vld [vmem:[#allocation3 + $0x7f8] sm:$0xff]
      %v1146 = vld [vmem:[#allocation3 + $0x800] sm:$0xff]
      %v1147 = vld [vmem:[#allocation3 + $0x808] sm:$0xff]
      %v1148 = vld [vmem:[#allocation3 + $0x810] sm:$0xff]
      %v1149 = vld [vmem:[#allocation3 + $0x818] sm:$0xff]
      %v1150 = vld [vmem:[#allocation3 + $0x820] sm:$0xff]
      %v1151 = vld [vmem:[#allocation3 + $0x828] sm:$0xff]
      %v1152 = vld [vmem:[#allocation3 + $0x830] sm:$0xff]
      %v1153 = vld [vmem:[#allocation3 + $0x838] sm:$0xff]
      %v1154 = vld [vmem:[#allocation3 + $0x840] sm:$0xff]
      %v1155 = vld [vmem:[#allocation3 + $0x848] sm:$0xff]
      %v1156 = vld [vmem:[#allocation3 + $0x850] sm:$0xff]
      %v1157 = vld [vmem:[#allocation3 + $0x858] sm:$0xff]
      %v1158 = vld [vmem:[#allocation3 + $0x860] sm:$0xff]
      %v1159 = vld [vmem:[#allocation3 + $0x868] sm:$0xff]
      %v1160 = vld [vmem:[#allocation3 + $0x870] sm:$0xff]
      %v1161 = vld [vmem:[#allocation3 + $0x878] sm:$0xff]
      %v1162 = vld [vmem:[#allocation3 + $0x880] sm:$0xff]
      %v1163 = vld [vmem:[#allocation3 + $0x888] sm:$0xff]
      %v1164 = vld [vmem:[#allocation3 + $0x890] sm:$0xff]
      %v1165 = vld [vmem:[#allocation3 + $0x898] sm:$0xff]
      %v1166 = vld [vmem:[#allocation3 + $0x8a0] sm:$0xff]
      %v1167 = vld [vmem:[#allocation3 + $0x8a8] sm:$0xff]
      %v1168 = vld [vmem:[#allocation3 + $0x8b0] sm:$0xff]
      %v1169 = vld [vmem:[#allocation3 + $0x8b8] sm:$0xff]
      %v1170 = vld [vmem:[#allocation3 + $0x8c0] sm:$0xff]
      %v1171 = vld [vmem:[#allocation3 + $0x8c8] sm:$0xff]
      %v1172 = vld [vmem:[#allocation3 + $0x8d0] sm:$0xff]
      %v1173 = vld [vmem:[#allocation3 + $0x8d8] sm:$0xff]
      %v1174 = vld [vmem:[#allocation3 + $0x8e0] sm:$0xff]
      %v1175 = vld [vmem:[#allocation3 + $0x8e8] sm:$0xff]
      %v1176 = vld [vmem:[#allocation3 + $0x8f0] sm:$0xff]
      %v1177 = vld [vmem:[#allocation3 + $0x8f8] sm:$0xff]
      %v1178 = vld [vmem:[%s1] sm:$0xff]
      %v1179 = vld [vmem:[%s1 + $0x8] sm:$0xff]
      %v1180 = vld [vmem:[%s1 + $0x10] sm:$0xff]
      %v1181 = vld [vmem:[%s1 + $0x18] sm:$0xff]
      %v1182 = vld [vmem:[%s1 + $0x20] sm:$0xff]
      %v1183 = vld [vmem:[%s1 + $0x28] sm:$0xff]
      %v1184 = vld [vmem:[%s1 + $0x30] sm:$0xff]
      %v1185 = vld [vmem:[%s1 + $0x38] sm:$0xff]
      %v1186 = vld [vmem:[%s1 + $0x40] sm:$0xff]
      %v1187 = vld [vmem:[%s1 + $0x48] sm:$0xff]
      %v1188 = vld [vmem:[%s1 + $0x50] sm:$0xff]
      %v1189 = vld [vmem:[%s1 + $0x58] sm:$0xff]
      %v1190 = vld [vmem:[%s1 + $0x60] sm:$0xff]
      %v1191 = vld [vmem:[%s1 + $0x68] sm:$0xff]
      %v1192 = vld [vmem:[%s1 + $0x70] sm:$0xff]
      %v1193 = vld [vmem:[%s1 + $0x78] sm:$0xff]
      %v1194 = vld [vmem:[%s1 + $0x80] sm:$0xff]
      %v1195 = vld [vmem:[%s1 + $0x88] sm:$0xff]
      %v1196 = vld [vmem:[%s1 + $0x90] sm:$0xff]
      %v1197 = vld [vmem:[%s1 + $0x98] sm:$0xff]
      %v1198 = vld [vmem:[%s1 + $0xa0] sm:$0xff]
      %v1199 = vld [vmem:[%s1 + $0xa8] sm:$0xff]
      %v1200 = vld [vmem:[%s1 + $0xb0] sm:$0xff]
      %v1201 = vld [vmem:[%s1 + $0xb8] sm:$0xff]
      %v1202 = vld [vmem:[%s1 + $0xc0] sm:$0xff]
      %v1203 = vld [vmem:[%s1 + $0xc8] sm:$0xff]
      %v1204 = vld [vmem:[%s1 + $0xd0] sm:$0xff]
      %v1205 = vld [vmem:[%s1 + $0xd8] sm:$0xff]
      %v1206 = vld [vmem:[%s1 + $0xe0] sm:$0xff]
      %v1207 = vld [vmem:[%s1 + $0xe8] sm:$0xff]
      %v1208 = vld [vmem:[%s1 + $0xf0] sm:$0xff]
      %v1209 = vld [vmem:[%s1 + $0xf8] sm:$0xff]
      %v1210 = vld [vmem:[%s1 + $0x100] sm:$0xff]
      %v1211 = vld [vmem:[%s1 + $0x108] sm:$0xff]
      %v1212 = vld [vmem:[%s1 + $0x110] sm:$0xff]
      %v1213 = vld [vmem:[%s1 + $0x118] sm:$0xff]
      %v1214 = vld [vmem:[%s1 + $0x120] sm:$0xff]
      %v1215 = vld [vmem:[%s1 + $0x128] sm:$0xff]
      %v1216 = vld [vmem:[%s1 + $0x130] sm:$0xff]
      %v1217 = vld [vmem:[%s1 + $0x138] sm:$0xff]
      %v1218 = vld [vmem:[%s1 + $0x140] sm:$0xff]
      %v1219 = vld [vmem:[%s1 + $0x148] sm:$0xff]
      %v1220 = vld [vmem:[%s1 + $0x150] sm:$0xff]
      %v1221 = vld [vmem:[%s1 + $0x158] sm:$0xff]
      %v1222 = vld [vmem:[%s1 + $0x160] sm:$0xff]
      %v1223 = vld [vmem:[%s1 + $0x168] sm:$0xff]
      %v1224 = vld [vmem:[%s1 + $0x170] sm:$0xff]
      %v1225 = vld [vmem:[%s1 + $0x178] sm:$0xff]
      %v1226 = vld [vmem:[%s1 + $0x180] sm:$0xff]
      %v1227 = vld [vmem:[%s1 + $0x188] sm:$0xff]
      %v1228 = vld [vmem:[%s1 + $0x190] sm:$0xff]
      %v1229 = vld [vmem:[%s1 + $0x198] sm:$0xff]
      %v1230 = vld [vmem:[%s1 + $0x1a0] sm:$0xff]
      %v1231 = vld [vmem:[%s1 + $0x1a8] sm:$0xff]
      %v1232 = vld [vmem:[%s1 + $0x1b0] sm:$0xff]
      %v1233 = vld [vmem:[%s1 + $0x1b8] sm:$0xff]
      %v1234 = vld [vmem:[%s1 + $0x1c0] sm:$0xff]
      %v1235 = vld [vmem:[%s1 + $0x1c8] sm:$0xff]
      %v1236 = vld [vmem:[%s1 + $0x1d0] sm:$0xff]
      %v1237 = vld [vmem:[%s1 + $0x1d8] sm:$0xff]
      %v1238 = vld [vmem:[%s1 + $0x1e0] sm:$0xff]
      %v1239 = vld [vmem:[%s1 + $0x1e8] sm:$0xff]
      %v1240 = vld [vmem:[%s1 + $0x1f0] sm:$0xff]
      %v1241 = vld [vmem:[%s1 + $0x1f8] sm:$0xff]
      %v1242 = vld [vmem:[%s1 + $0x200] sm:$0xff]
      %v1243 = vld [vmem:[%s1 + $0x208] sm:$0xff]
      %v1244 = vld [vmem:[%s1 + $0x210] sm:$0xff]
      %v1245 = vld [vmem:[%s1 + $0x218] sm:$0xff]
      %v1246 = vld [vmem:[%s1 + $0x220] sm:$0xff]
      %v1247 = vld [vmem:[%s1 + $0x228] sm:$0xff]
      %v1248 = vld [vmem:[%s1 + $0x230] sm:$0xff]
      %v1249 = vld [vmem:[%s1 + $0x238] sm:$0xff]
      %v1250 = vld [vmem:[%s1 + $0x240] sm:$0xff]
      %v1251 = vld [vmem:[%s1 + $0x248] sm:$0xff]
      %v1252 = vld [vmem:[%s1 + $0x250] sm:$0xff]
      %v1253 = vld [vmem:[%s1 + $0x258] sm:$0xff]
      %v1254 = vld [vmem:[%s1 + $0x260] sm:$0xff]
      %v1255 = vld [vmem:[%s1 + $0x268] sm:$0xff]
      %v1256 = vld [vmem:[%s1 + $0x270] sm:$0xff]
      %v1257 = vld [vmem:[%s1 + $0x278] sm:$0xff]
      %v1258 = vld [vmem:[%s1 + $0x280] sm:$0xff]
      %v1259 = vld [vmem:[%s1 + $0x288] sm:$0xff]
      %v1260 = vld [vmem:[%s1 + $0x290] sm:$0xff]
      %v1261 = vld [vmem:[%s1 + $0x298] sm:$0xff]
      %v1262 = vld [vmem:[%s1 + $0x2a0] sm:$0xff]
      %v1263 = vld [vmem:[%s1 + $0x2a8] sm:$0xff]
      %v1264 = vld [vmem:[%s1 + $0x2b0] sm:$0xff]
      %v1265 = vld [vmem:[%s1 + $0x2b8] sm:$0xff]
      %v1266 = vld [vmem:[%s1 + $0x2c0] sm:$0xff]
      %v1267 = vld [vmem:[%s1 + $0x2c8] sm:$0xff]
      %v1268 = vld [vmem:[%s1 + $0x2d0] sm:$0xff]
      %v1269 = vld [vmem:[%s1 + $0x2d8] sm:$0xff]
      %v1270 = vld [vmem:[%s1 + $0x2e0] sm:$0xff]
      %v1271 = vld [vmem:[%s1 + $0x2e8] sm:$0xff]
      %v1272 = vld [vmem:[%s1 + $0x2f0] sm:$0xff]
      %v1273 = vld [vmem:[%s1 + $0x2f8] sm:$0xff]
      %v1274 = vld [vmem:[%s1 + $0x300] sm:$0xff]
      %v1275 = vld [vmem:[%s1 + $0x308] sm:$0xff]
      %v1276 = vld [vmem:[%s1 + $0x310] sm:$0xff]
      %v1277 = vld [vmem:[%s1 + $0x318] sm:$0xff]
      %v1278 = vld [vmem:[%s1 + $0x320] sm:$0xff]
      %v1279 = vld [vmem:[%s1 + $0x328] sm:$0xff]
      %v1280 = vld [vmem:[%s1 + $0x330] sm:$0xff]
      %v1281 = vld [vmem:[%s1 + $0x338] sm:$0xff]
      %v1282 = vld [vmem:[%s1 + $0x340] sm:$0xff]
      %v1283 = vld [vmem:[%s1 + $0x348] sm:$0xff]
      %v1284 = vld [vmem:[%s1 + $0x350] sm:$0xff]
      %v1285 = vld [vmem:[%s1 + $0x358] sm:$0xff]
      %v1286 = vld [vmem:[%s1 + $0x360] sm:$0xff]
      %v1287 = vld [vmem:[%s1 + $0x368] sm:$0xff]
      %v1288 = vld [vmem:[%s1 + $0x370] sm:$0xff]
      %v1289 = vld [vmem:[%s1 + $0x378] sm:$0xff]
      %v1290 = vld [vmem:[%s1 + $0x380] sm:$0xff]
      %v1291 = vld [vmem:[%s1 + $0x388] sm:$0xff]
      %v1292 = vld [vmem:[%s1 + $0x390] sm:$0xff]
      %v1293 = vld [vmem:[%s1 + $0x398] sm:$0xff]
      %v1294 = vld [vmem:[%s1 + $0x3a0] sm:$0xff]
      %v1295 = vld [vmem:[%s1 + $0x3a8] sm:$0xff]
      %v1296 = vld [vmem:[%s1 + $0x3b0] sm:$0xff]
      %v1297 = vld [vmem:[%s1 + $0x3b8] sm:$0xff]
      %v1298 = vld [vmem:[%s1 + $0x3c0] sm:$0xff]
      %v1299 = vld [vmem:[%s1 + $0x3c8] sm:$0xff]
      %v1300 = vld [vmem:[%s1 + $0x3d0] sm:$0xff]
      %v1301 = vld [vmem:[%s1 + $0x3d8] sm:$0xff]
      %v1302 = vld [vmem:[%s1 + $0x3e0] sm:$0xff]
      %v1303 = vld [vmem:[%s1 + $0x3e8] sm:$0xff]
      %v1304 = vld [vmem:[%s1 + $0x3f0] sm:$0xff]
      %v1305 = vld [vmem:[%s1 + $0x3f8] sm:$0xff]
      %v1306 = vld [vmem:[%s1 + $0x400] sm:$0xff]
      %v1307 = vld [vmem:[%s1 + $0x408] sm:$0xff]
      %v1308 = vld [vmem:[%s1 + $0x410] sm:$0xff]
      %v1309 = vld [vmem:[%s1 + $0x418] sm:$0xff]
      %v1310 = vld [vmem:[%s1 + $0x420] sm:$0xff]
      %v1311 = vld [vmem:[%s1 + $0x428] sm:$0xff]
      %v1312 = vld [vmem:[%s1 + $0x430] sm:$0xff]
      %v1313 = vld [vmem:[%s1 + $0x438] sm:$0xff]
      %v1314 = vld [vmem:[%s1 + $0x440] sm:$0xff]
      %v1315 = vld [vmem:[%s1 + $0x448] sm:$0xff]
      %v1316 = vld [vmem:[%s1 + $0x450] sm:$0xff]
      %v1317 = vld [vmem:[%s1 + $0x458] sm:$0xff]
      %v1318 = vld [vmem:[%s1 + $0x460] sm:$0xff]
      %v1319 = vld [vmem:[%s1 + $0x468] sm:$0xff]
      %v1320 = vld [vmem:[%s1 + $0x470] sm:$0xff]
      %v1321 = vld [vmem:[%s1 + $0x478] sm:$0xff]
      %1322 = vmatpush.msra.mxu0 %v1193
      %1323 = vmatpush.msra.mxu0 %v1192
      %1324 = vmatpush.msra.mxu0 %v1191
      %1325 = vmatpush.msra.mxu0 %v1190
      %1326 = vmatpush.msra.mxu0 %v1189
      %1327 = vmatpush.msra.mxu0 %v1188
      %1328 = vmatpush.msra.mxu0 %v1187
      %1329 = vmatpush.msra.mxu0 %v1186
      %1330 = vmatpush.msra.mxu0 %v1185
      %1331 = vmatpush.msra.mxu0 %v1184
      %1332 = vmatpush.msra.mxu0 %v1183
      %1333 = vmatpush.msra.mxu0 %v1182
      %1334 = vmatpush.msra.mxu0 %v1181
      %1335 = vmatpush.msra.mxu0 %v1180
      %1336 = vmatpush.msra.mxu0 %v1179
      %1337 = vmatpush.msra.mxu0 %v1178
      %1338 = vmatmul.f32.gmra.mxu0 %v890
      %v1339 = vpop.f32.mrf.mxu0
      %v1340 = vadd.f32 0.0, %v1339
      %1341 = vmatmul.f32.gmra.mxu0 %v899
      %v1342 = vpop.f32.mrf.mxu0
      %v1343 = vadd.f32 0.0, %v1342
      %1344 = vmatmul.f32.gmra.mxu0 %v908
      %v1345 = vpop.f32.mrf.mxu0
      %v1346 = vadd.f32 0.0, %v1345
      %1347 = vmatmul.f32.gmra.mxu0 %v917
      %v1348 = vpop.f32.mrf.mxu0
      %v1349 = vadd.f32 0.0, %v1348
      %1350 = vmatmul.f32.gmra.mxu0 %v926
      %v1351 = vpop.f32.mrf.mxu0
      %v1352 = vadd.f32 0.0, %v1351
      %1353 = vmatmul.f32.gmra.mxu0 %v935
      %v1354 = vpop.f32.mrf.mxu0
      %v1355 = vadd.f32 0.0, %v1354
      %1356 = vmatmul.f32.gmra.mxu0 %v944
      %v1357 = vpop.f32.mrf.mxu0
      %v1358 = vadd.f32 0.0, %v1357
      %1359 = vmatmul.f32.gmra.mxu0 %v953
      %v1360 = vpop.f32.mrf.mxu0
      %v1361 = vadd.f32 0.0, %v1360
      %1362 = vmatmul.f32.gmra.mxu0 %v962
      %v1363 = vpop.f32.mrf.mxu0
      %v1364 = vadd.f32 0.0, %v1363
      %1365 = vmatmul.f32.gmra.mxu0 %v971
      %v1366 = vpop.f32.mrf.mxu0
      %v1367 = vadd.f32 0.0, %v1366
      %1368 = vmatmul.f32.gmra.mxu0 %v980
      %v1369 = vpop.f32.mrf.mxu0
      %v1370 = vadd.f32 0.0, %v1369
      %1371 = vmatmul.f32.gmra.mxu0 %v989
      %v1372 = vpop.f32.mrf.mxu0
      %v1373 = vadd.f32 0.0, %v1372
      %1374 = vmatmul.f32.gmra.mxu0 %v998
      %v1375 = vpop.f32.mrf.mxu0
      %v1376 = vadd.f32 0.0, %v1375
      %1377 = vmatmul.f32.gmra.mxu0 %v1007
      %v1378 = vpop.f32.mrf.mxu0
      %v1379 = vadd.f32 0.0, %v1378
      %1380 = vmatmul.f32.gmra.mxu0 %v1016
      %v1381 = vpop.f32.mrf.mxu0
      %v1382 = vadd.f32 0.0, %v1381
      %1383 = vmatmul.f32.gmra.mxu0 %v1025
      %v1384 = vpop.f32.mrf.mxu0
      %v1385 = vadd.f32 0.0, %v1384
      %1386 = vmatmul.f32.gmra.mxu0 %v1034
      %v1387 = vpop.f32.mrf.mxu0
      %v1388 = vadd.f32 0.0, %v1387
      %1389 = vmatmul.f32.gmra.mxu0 %v1043
      %v1390 = vpop.f32.mrf.mxu0
      %v1391 = vadd.f32 0.0, %v1390
      %1392 = vmatmul.f32.gmra.mxu0 %v1052
      %v1393 = vpop.f32.mrf.mxu0
      %v1394 = vadd.f32 0.0, %v1393
      %1395 = vmatmul.f32.gmra.mxu0 %v1061
      %v1396 = vpop.f32.mrf.mxu0
      %v1397 = vadd.f32 0.0, %v1396
      %1398 = vmatmul.f32.gmra.mxu0 %v1070
      %v1399 = vpop.f32.mrf.mxu0
      %v1400 = vadd.f32 0.0, %v1399
      %1401 = vmatmul.f32.gmra.mxu0 %v1079
      %v1402 = vpop.f32.mrf.mxu0
      %v1403 = vadd.f32 0.0, %v1402
      %1404 = vmatmul.f32.gmra.mxu0 %v1088
      %v1405 = vpop.f32.mrf.mxu0
      %v1406 = vadd.f32 0.0, %v1405
      %1407 = vmatmul.f32.gmra.mxu0 %v1097
      %v1408 = vpop.f32.mrf.mxu0
      %v1409 = vadd.f32 0.0, %v1408
      %1410 = vmatmul.f32.gmra.mxu0 %v1106
      %v1411 = vpop.f32.mrf.mxu0
      %v1412 = vadd.f32 0.0, %v1411
      %1413 = vmatmul.f32.gmra.mxu0 %v1115
      %v1414 = vpop.f32.mrf.mxu0
      %v1415 = vadd.f32 0.0, %v1414
      %1416 = vmatmul.f32.gmra.mxu0 %v1124
      %v1417 = vpop.f32.mrf.mxu0
      %v1418 = vadd.f32 0.0, %v1417
      %1419 = vmatmul.f32.gmra.mxu0 %v1133
      %v1420 = vpop.f32.mrf.mxu0
      %v1421 = vadd.f32 0.0, %v1420
      %1422 = vmatmul.f32.gmra.mxu0 %v1142
      %v1423 = vpop.f32.mrf.mxu0
      %v1424 = vadd.f32 0.0, %v1423
      %1425 = vmatmul.f32.gmra.mxu0 %v1151
      %v1426 = vpop.f32.mrf.mxu0
      %v1427 = vadd.f32 0.0, %v1426
      %1428 = vmatmul.f32.gmra.mxu0 %v1160
      %v1429 = vpop.f32.mrf.mxu0
      %v1430 = vadd.f32 0.0, %v1429
      %1431 = vmatmul.f32.gmra.mxu0 %v1169
      %v1432 = vpop.f32.mrf.mxu0
      %v1433 = vadd.f32 0.0, %v1432
      %1434 = vdwg.mxu0
      %1435 = vmatpush.msra.mxu0 %v1209
      %1436 = vmatpush.msra.mxu0 %v1208
      %1437 = vmatpush.msra.mxu0 %v1207
      %1438 = vmatpush.msra.mxu0 %v1206
      %1439 = vmatpush.msra.mxu0 %v1205
      %1440 = vmatpush.msra.mxu0 %v1204
      %1441 = vmatpush.msra.mxu0 %v1203
      %1442 = vmatpush.msra.mxu0 %v1202
      %1443 = vmatpush.msra.mxu0 %v1201
      %1444 = vmatpush.msra.mxu0 %v1200
      %1445 = vmatpush.msra.mxu0 %v1199
      %1446 = vmatpush.msra.mxu0 %v1198
      %1447 = vmatpush.msra.mxu0 %v1197
      %1448 = vmatpush.msra.mxu0 %v1196
      %1449 = vmatpush.msra.mxu0 %v1195
      %1450 = vmatpush.msra.mxu0 %v1194
      %1451 = vmatmul.f32.gmra.mxu0 %v891
      %v1452 = vpop.f32.mrf.mxu0
      %v1453 = vadd.f32 %v1340, %v1452
      %1454 = vmatmul.f32.gmra.mxu0 %v900
      %v1455 = vpop.f32.mrf.mxu0
      %v1456 = vadd.f32 %v1343, %v1455
      %1457 = vmatmul.f32.gmra.mxu0 %v909
      %v1458 = vpop.f32.mrf.mxu0
      %v1459 = vadd.f32 %v1346, %v1458
      %1460 = vmatmul.f32.gmra.mxu0 %v918
      %v1461 = vpop.f32.mrf.mxu0
      %v1462 = vadd.f32 %v1349, %v1461
      %1463 = vmatmul.f32.gmra.mxu0 %v927
      %v1464 = vpop.f32.mrf.mxu0
      %v1465 = vadd.f32 %v1352, %v1464
      %1466 = vmatmul.f32.gmra.mxu0 %v936
      %v1467 = vpop.f32.mrf.mxu0
      %v1468 = vadd.f32 %v1355, %v1467
      %1469 = vmatmul.f32.gmra.mxu0 %v945
      %v1470 = vpop.f32.mrf.mxu0
      %v1471 = vadd.f32 %v1358, %v1470
      %1472 = vmatmul.f32.gmra.mxu0 %v954
      %v1473 = vpop.f32.mrf.mxu0
      %v1474 = vadd.f32 %v1361, %v1473
      %1475 = vmatmul.f32.gmra.mxu0 %v963
      %v1476 = vpop.f32.mrf.mxu0
      %v1477 = vadd.f32 %v1364, %v1476
      %1478 = vmatmul.f32.gmra.mxu0 %v972
      %v1479 = vpop.f32.mrf.mxu0
      %v1480 = vadd.f32 %v1367, %v1479
      %1481 = vmatmul.f32.gmra.mxu0 %v981
      %v1482 = vpop.f32.mrf.mxu0
      %v1483 = vadd.f32 %v1370, %v1482
      %1484 = vmatmul.f32.gmra.mxu0 %v990
      %v1485 = vpop.f32.mrf.mxu0
      %v1486 = vadd.f32 %v1373, %v1485
      %1487 = vmatmul.f32.gmra.mxu0 %v999
      %v1488 = vpop.f32.mrf.mxu0
      %v1489 = vadd.f32 %v1376, %v1488
      %1490 = vmatmul.f32.gmra.mxu0 %v1008
      %v1491 = vpop.f32.mrf.mxu0
      %v1492 = vadd.f32 %v1379, %v1491
      %1493 = vmatmul.f32.gmra.mxu0 %v1017
      %v1494 = vpop.f32.mrf.mxu0
      %v1495 = vadd.f32 %v1382, %v1494
      %1496 = vmatmul.f32.gmra.mxu0 %v1026
      %v1497 = vpop.f32.mrf.mxu0
      %v1498 = vadd.f32 %v1385, %v1497
      %1499 = vmatmul.f32.gmra.mxu0 %v1035
      %v1500 = vpop.f32.mrf.mxu0
      %v1501 = vadd.f32 %v1388, %v1500
      %1502 = vmatmul.f32.gmra.mxu0 %v1044
      %v1503 = vpop.f32.mrf.mxu0
      %v1504 = vadd.f32 %v1391, %v1503
      %1505 = vmatmul.f32.gmra.mxu0 %v1053
      %v1506 = vpop.f32.mrf.mxu0
      %v1507 = vadd.f32 %v1394, %v1506
      %1508 = vmatmul.f32.gmra.mxu0 %v1062
      %v1509 = vpop.f32.mrf.mxu0
      %v1510 = vadd.f32 %v1397, %v1509
      %1511 = vmatmul.f32.gmra.mxu0 %v1071
      %v1512 = vpop.f32.mrf.mxu0
      %v1513 = vadd.f32 %v1400, %v1512
      %1514 = vmatmul.f32.gmra.mxu0 %v1080
      %v1515 = vpop.f32.mrf.mxu0
      %v1516 = vadd.f32 %v1403, %v1515
      %1517 = vmatmul.f32.gmra.mxu0 %v1089
      %v1518 = vpop.f32.mrf.mxu0
      %v1519 = vadd.f32 %v1406, %v1518
      %1520 = vmatmul.f32.gmra.mxu0 %v1098
      %v1521 = vpop.f32.mrf.mxu0
      %v1522 = vadd.f32 %v1409, %v1521
      %1523 = vmatmul.f32.gmra.mxu0 %v1107
      %v1524 = vpop.f32.mrf.mxu0
      %v1525 = vadd.f32 %v1412, %v1524
      %1526 = vmatmul.f32.gmra.mxu0 %v1116
      %v1527 = vpop.f32.mrf.mxu0
      %v1528 = vadd.f32 %v1415, %v1527
      %1529 = vmatmul.f32.gmra.mxu0 %v1125
      %v1530 = vpop.f32.mrf.mxu0
      %v1531 = vadd.f32 %v1418, %v1530
      %1532 = vmatmul.f32.gmra.mxu0 %v1134
      %v1533 = vpop.f32.mrf.mxu0
      %v1534 = vadd.f32 %v1421, %v1533
      %1535 = vmatmul.f32.gmra.mxu0 %v1143
      %v1536 = vpop.f32.mrf.mxu0
      %v1537 = vadd.f32 %v1424, %v1536
      %1538 = vmatmul.f32.gmra.mxu0 %v1152
      %v1539 = vpop.f32.mrf.mxu0
      %v1540 = vadd.f32 %v1427, %v1539
      %1541 = vmatmul.f32.gmra.mxu0 %v1161
      %v1542 = vpop.f32.mrf.mxu0
      %v1543 = vadd.f32 %v1430, %v1542
      %1544 = vmatmul.f32.gmra.mxu0 %v1170
      %v1545 = vpop.f32.mrf.mxu0
      %v1546 = vadd.f32 %v1433, %v1545
      %1547 = vdwg.mxu0
      %1548 = vmatpush.msra.mxu0 %v1225
      %1549 = vmatpush.msra.mxu0 %v1224
      %1550 = vmatpush.msra.mxu0 %v1223
      %1551 = vmatpush.msra.mxu0 %v1222
      %1552 = vmatpush.msra.mxu0 %v1221
      %1553 = vmatpush.msra.mxu0 %v1220
      %1554 = vmatpush.msra.mxu0 %v1219
      %1555 = vmatpush.msra.mxu0 %v1218
      %1556 = vmatpush.msra.mxu0 %v1217
      %1557 = vmatpush.msra.mxu0 %v1216
      %1558 = vmatpush.msra.mxu0 %v1215
      %1559 = vmatpush.msra.mxu0 %v1214
      %1560 = vmatpush.msra.mxu0 %v1213
      %1561 = vmatpush.msra.mxu0 %v1212
      %1562 = vmatpush.msra.mxu0 %v1211
      %1563 = vmatpush.msra.mxu0 %v1210
      %1564 = vmatmul.f32.gmra.mxu0 %v892
      %v1565 = vpop.f32.mrf.mxu0
      %v1566 = vadd.f32 %v1453, %v1565
      %1567 = vmatmul.f32.gmra.mxu0 %v901
      %v1568 = vpop.f32.mrf.mxu0
      %v1569 = vadd.f32 %v1456, %v1568
      %1570 = vmatmul.f32.gmra.mxu0 %v910
      %v1571 = vpop.f32.mrf.mxu0
      %v1572 = vadd.f32 %v1459, %v1571
      %1573 = vmatmul.f32.gmra.mxu0 %v919
      %v1574 = vpop.f32.mrf.mxu0
      %v1575 = vadd.f32 %v1462, %v1574
      %1576 = vmatmul.f32.gmra.mxu0 %v928
      %v1577 = vpop.f32.mrf.mxu0
      %v1578 = vadd.f32 %v1465, %v1577
      %1579 = vmatmul.f32.gmra.mxu0 %v937
      %v1580 = vpop.f32.mrf.mxu0
      %v1581 = vadd.f32 %v1468, %v1580
      %1582 = vmatmul.f32.gmra.mxu0 %v946
      %v1583 = vpop.f32.mrf.mxu0
      %v1584 = vadd.f32 %v1471, %v1583
      %1585 = vmatmul.f32.gmra.mxu0 %v955
      %v1586 = vpop.f32.mrf.mxu0
      %v1587 = vadd.f32 %v1474, %v1586
      %1588 = vmatmul.f32.gmra.mxu0 %v964
      %v1589 = vpop.f32.mrf.mxu0
      %v1590 = vadd.f32 %v1477, %v1589
      %1591 = vmatmul.f32.gmra.mxu0 %v973
      %v1592 = vpop.f32.mrf.mxu0
      %v1593 = vadd.f32 %v1480, %v1592
      %1594 = vmatmul.f32.gmra.mxu0 %v982
      %v1595 = vpop.f32.mrf.mxu0
      %v1596 = vadd.f32 %v1483, %v1595
      %1597 = vmatmul.f32.gmra.mxu0 %v991
      %v1598 = vpop.f32.mrf.mxu0
      %v1599 = vadd.f32 %v1486, %v1598
      %1600 = vmatmul.f32.gmra.mxu0 %v1000
      %v1601 = vpop.f32.mrf.mxu0
      %v1602 = vadd.f32 %v1489, %v1601
      %1603 = vmatmul.f32.gmra.mxu0 %v1009
      %v1604 = vpop.f32.mrf.mxu0
      %v1605 = vadd.f32 %v1492, %v1604
      %1606 = vmatmul.f32.gmra.mxu0 %v1018
      %v1607 = vpop.f32.mrf.mxu0
      %v1608 = vadd.f32 %v1495, %v1607
      %1609 = vmatmul.f32.gmra.mxu0 %v1027
      %v1610 = vpop.f32.mrf.mxu0
      %v1611 = vadd.f32 %v1498, %v1610
      %1612 = vmatmul.f32.gmra.mxu0 %v1036
      %v1613 = vpop.f32.mrf.mxu0
      %v1614 = vadd.f32 %v1501, %v1613
      %1615 = vmatmul.f32.gmra.mxu0 %v1045
      %v1616 = vpop.f32.mrf.mxu0
      %v1617 = vadd.f32 %v1504, %v1616
      %1618 = vmatmul.f32.gmra.mxu0 %v1054
      %v1619 = vpop.f32.mrf.mxu0
      %v1620 = vadd.f32 %v1507, %v1619
      %1621 = vmatmul.f32.gmra.mxu0 %v1063
      %v1622 = vpop.f32.mrf.mxu0
      %v1623 = vadd.f32 %v1510, %v1622
      %1624 = vmatmul.f32.gmra.mxu0 %v1072
      %v1625 = vpop.f32.mrf.mxu0
      %v1626 = vadd.f32 %v1513, %v1625
      %1627 = vmatmul.f32.gmra.mxu0 %v1081
      %v1628 = vpop.f32.mrf.mxu0
      %v1629 = vadd.f32 %v1516, %v1628
      %1630 = vmatmul.f32.gmra.mxu0 %v1090
      %v1631 = vpop.f32.mrf.mxu0
      %v1632 = vadd.f32 %v1519, %v1631
      %1633 = vmatmul.f32.gmra.mxu0 %v1099
      %v1634 = vpop.f32.mrf.mxu0
      %v1635 = vadd.f32 %v1522, %v1634
      %1636 = vmatmul.f32.gmra.mxu0 %v1108
      %v1637 = vpop.f32.mrf.mxu0
      %v1638 = vadd.f32 %v1525, %v1637
      %1639 = vmatmul.f32.gmra.mxu0 %v1117
      %v1640 = vpop.f32.mrf.mxu0
      %v1641 = vadd.f32 %v1528, %v1640
      %1642 = vmatmul.f32.gmra.mxu0 %v1126
      %v1643 = vpop.f32.mrf.mxu0
      %v1644 = vadd.f32 %v1531, %v1643
      %1645 = vmatmul.f32.gmra.mxu0 %v1135
      %v1646 = vpop.f32.mrf.mxu0
      %v1647 = vadd.f32 %v1534, %v1646
      %1648 = vmatmul.f32.gmra.mxu0 %v1144
      %v1649 = vpop.f32.mrf.mxu0
      %v1650 = vadd.f32 %v1537, %v1649
      %1651 = vmatmul.f32.gmra.mxu0 %v1153
      %v1652 = vpop.f32.mrf.mxu0
      %v1653 = vadd.f32 %v1540, %v1652
      %1654 = vmatmul.f32.gmra.mxu0 %v1162
      %v1655 = vpop.f32.mrf.mxu0
      %v1656 = vadd.f32 %v1543, %v1655
      %1657 = vmatmul.f32.gmra.mxu0 %v1171
      %v1658 = vpop.f32.mrf.mxu0
      %v1659 = vadd.f32 %v1546, %v1658
      %1660 = vdwg.mxu0
      %1661 = vmatpush.msra.mxu0 %v1241
      %1662 = vmatpush.msra.mxu0 %v1240
      %1663 = vmatpush.msra.mxu0 %v1239
      %1664 = vmatpush.msra.mxu0 %v1238
      %1665 = vmatpush.msra.mxu0 %v1237
      %1666 = vmatpush.msra.mxu0 %v1236
      %1667 = vmatpush.msra.mxu0 %v1235
      %1668 = vmatpush.msra.mxu0 %v1234
      %1669 = vmatpush.msra.mxu0 %v1233
      %1670 = vmatpush.msra.mxu0 %v1232
      %1671 = vmatpush.msra.mxu0 %v1231
      %1672 = vmatpush.msra.mxu0 %v1230
      %1673 = vmatpush.msra.mxu0 %v1229
      %1674 = vmatpush.msra.mxu0 %v1228
      %1675 = vmatpush.msra.mxu0 %v1227
      %1676 = vmatpush.msra.mxu0 %v1226
      %1677 = vmatmul.f32.gmra.mxu0 %v893
      %v1678 = vpop.f32.mrf.mxu0
      %v1679 = vadd.f32 %v1566, %v1678
      %1680 = vmatmul.f32.gmra.mxu0 %v902
      %v1681 = vpop.f32.mrf.mxu0
      %v1682 = vadd.f32 %v1569, %v1681
      %1683 = vmatmul.f32.gmra.mxu0 %v911
      %v1684 = vpop.f32.mrf.mxu0
      %v1685 = vadd.f32 %v1572, %v1684
      %1686 = vmatmul.f32.gmra.mxu0 %v920
      %v1687 = vpop.f32.mrf.mxu0
      %v1688 = vadd.f32 %v1575, %v1687
      %1689 = vmatmul.f32.gmra.mxu0 %v929
      %v1690 = vpop.f32.mrf.mxu0
      %v1691 = vadd.f32 %v1578, %v1690
      %1692 = vmatmul.f32.gmra.mxu0 %v938
      %v1693 = vpop.f32.mrf.mxu0
      %v1694 = vadd.f32 %v1581, %v1693
      %1695 = vmatmul.f32.gmra.mxu0 %v947
      %v1696 = vpop.f32.mrf.mxu0
      %v1697 = vadd.f32 %v1584, %v1696
      %1698 = vmatmul.f32.gmra.mxu0 %v956
      %v1699 = vpop.f32.mrf.mxu0
      %v1700 = vadd.f32 %v1587, %v1699
      %1701 = vmatmul.f32.gmra.mxu0 %v965
      %v1702 = vpop.f32.mrf.mxu0
      %v1703 = vadd.f32 %v1590, %v1702
      %1704 = vmatmul.f32.gmra.mxu0 %v974
      %v1705 = vpop.f32.mrf.mxu0
      %v1706 = vadd.f32 %v1593, %v1705
      %1707 = vmatmul.f32.gmra.mxu0 %v983
      %v1708 = vpop.f32.mrf.mxu0
      %v1709 = vadd.f32 %v1596, %v1708
      %1710 = vmatmul.f32.gmra.mxu0 %v992
      %v1711 = vpop.f32.mrf.mxu0
      %v1712 = vadd.f32 %v1599, %v1711
      %1713 = vmatmul.f32.gmra.mxu0 %v1001
      %v1714 = vpop.f32.mrf.mxu0
      %v1715 = vadd.f32 %v1602, %v1714
      %1716 = vmatmul.f32.gmra.mxu0 %v1010
      %v1717 = vpop.f32.mrf.mxu0
      %v1718 = vadd.f32 %v1605, %v1717
      %1719 = vmatmul.f32.gmra.mxu0 %v1019
      %v1720 = vpop.f32.mrf.mxu0
      %v1721 = vadd.f32 %v1608, %v1720
      %1722 = vmatmul.f32.gmra.mxu0 %v1028
      %v1723 = vpop.f32.mrf.mxu0
      %v1724 = vadd.f32 %v1611, %v1723
      %1725 = vmatmul.f32.gmra.mxu0 %v1037
      %v1726 = vpop.f32.mrf.mxu0
      %v1727 = vadd.f32 %v1614, %v1726
      %1728 = vmatmul.f32.gmra.mxu0 %v1046
      %v1729 = vpop.f32.mrf.mxu0
      %v1730 = vadd.f32 %v1617, %v1729
      %1731 = vmatmul.f32.gmra.mxu0 %v1055
      %v1732 = vpop.f32.mrf.mxu0
      %v1733 = vadd.f32 %v1620, %v1732
      %1734 = vmatmul.f32.gmra.mxu0 %v1064
      %v1735 = vpop.f32.mrf.mxu0
      %v1736 = vadd.f32 %v1623, %v1735
      %1737 = vmatmul.f32.gmra.mxu0 %v1073
      %v1738 = vpop.f32.mrf.mxu0
      %v1739 = vadd.f32 %v1626, %v1738
      %1740 = vmatmul.f32.gmra.mxu0 %v1082
      %v1741 = vpop.f32.mrf.mxu0
      %v1742 = vadd.f32 %v1629, %v1741
      %1743 = vmatmul.f32.gmra.mxu0 %v1091
      %v1744 = vpop.f32.mrf.mxu0
      %v1745 = vadd.f32 %v1632, %v1744
      %1746 = vmatmul.f32.gmra.mxu0 %v1100
      %v1747 = vpop.f32.mrf.mxu0
      %v1748 = vadd.f32 %v1635, %v1747
      %1749 = vmatmul.f32.gmra.mxu0 %v1109
      %v1750 = vpop.f32.mrf.mxu0
      %v1751 = vadd.f32 %v1638, %v1750
      %1752 = vmatmul.f32.gmra.mxu0 %v1118
      %v1753 = vpop.f32.mrf.mxu0
      %v1754 = vadd.f32 %v1641, %v1753
      %1755 = vmatmul.f32.gmra.mxu0 %v1127
      %v1756 = vpop.f32.mrf.mxu0
      %v1757 = vadd.f32 %v1644, %v1756
      %1758 = vmatmul.f32.gmra.mxu0 %v1136
      %v1759 = vpop.f32.mrf.mxu0
      %v1760 = vadd.f32 %v1647, %v1759
      %1761 = vmatmul.f32.gmra.mxu0 %v1145
      %v1762 = vpop.f32.mrf.mxu0
      %v1763 = vadd.f32 %v1650, %v1762
      %1764 = vmatmul.f32.gmra.mxu0 %v1154
      %v1765 = vpop.f32.mrf.mxu0
      %v1766 = vadd.f32 %v1653, %v1765
      %1767 = vmatmul.f32.gmra.mxu0 %v1163
      %v1768 = vpop.f32.mrf.mxu0
      %v1769 = vadd.f32 %v1656, %v1768
      %1770 = vmatmul.f32.gmra.mxu0 %v1172
      %v1771 = vpop.f32.mrf.mxu0
      %v1772 = vadd.f32 %v1659, %v1771
      %1773 = vdwg.mxu0
      %1774 = vmatpush.msra.mxu0 %v1257
      %1775 = vmatpush.msra.mxu0 %v1256
      %1776 = vmatpush.msra.mxu0 %v1255
      %1777 = vmatpush.msra.mxu0 %v1254
      %1778 = vmatpush.msra.mxu0 %v1253
      %1779 = vmatpush.msra.mxu0 %v1252
      %1780 = vmatpush.msra.mxu0 %v1251
      %1781 = vmatpush.msra.mxu0 %v1250
      %1782 = vmatpush.msra.mxu0 %v1249
      %1783 = vmatpush.msra.mxu0 %v1248
      %1784 = vmatpush.msra.mxu0 %v1247
      %1785 = vmatpush.msra.mxu0 %v1246
      %1786 = vmatpush.msra.mxu0 %v1245
      %1787 = vmatpush.msra.mxu0 %v1244
      %1788 = vmatpush.msra.mxu0 %v1243
      %1789 = vmatpush.msra.mxu0 %v1242
      %1790 = vmatmul.f32.gmra.mxu0 %v894
      %v1791 = vpop.f32.mrf.mxu0
      %v1792 = vadd.f32 %v1679, %v1791
      %1793 = vmatmul.f32.gmra.mxu0 %v903
      %v1794 = vpop.f32.mrf.mxu0
      %v1795 = vadd.f32 %v1682, %v1794
      %1796 = vmatmul.f32.gmra.mxu0 %v912
      %v1797 = vpop.f32.mrf.mxu0
      %v1798 = vadd.f32 %v1685, %v1797
      %1799 = vmatmul.f32.gmra.mxu0 %v921
      %v1800 = vpop.f32.mrf.mxu0
      %v1801 = vadd.f32 %v1688, %v1800
      %1802 = vmatmul.f32.gmra.mxu0 %v930
      %v1803 = vpop.f32.mrf.mxu0
      %v1804 = vadd.f32 %v1691, %v1803
      %1805 = vmatmul.f32.gmra.mxu0 %v939
      %v1806 = vpop.f32.mrf.mxu0
      %v1807 = vadd.f32 %v1694, %v1806
      %1808 = vmatmul.f32.gmra.mxu0 %v948
      %v1809 = vpop.f32.mrf.mxu0
      %v1810 = vadd.f32 %v1697, %v1809
      %1811 = vmatmul.f32.gmra.mxu0 %v957
      %v1812 = vpop.f32.mrf.mxu0
      %v1813 = vadd.f32 %v1700, %v1812
      %1814 = vmatmul.f32.gmra.mxu0 %v966
      %v1815 = vpop.f32.mrf.mxu0
      %v1816 = vadd.f32 %v1703, %v1815
      %1817 = vmatmul.f32.gmra.mxu0 %v975
      %v1818 = vpop.f32.mrf.mxu0
      %v1819 = vadd.f32 %v1706, %v1818
      %1820 = vmatmul.f32.gmra.mxu0 %v984
      %v1821 = vpop.f32.mrf.mxu0
      %v1822 = vadd.f32 %v1709, %v1821
      %1823 = vmatmul.f32.gmra.mxu0 %v993
      %v1824 = vpop.f32.mrf.mxu0
      %v1825 = vadd.f32 %v1712, %v1824
      %1826 = vmatmul.f32.gmra.mxu0 %v1002
      %v1827 = vpop.f32.mrf.mxu0
      %v1828 = vadd.f32 %v1715, %v1827
      %1829 = vmatmul.f32.gmra.mxu0 %v1011
      %v1830 = vpop.f32.mrf.mxu0
      %v1831 = vadd.f32 %v1718, %v1830
      %1832 = vmatmul.f32.gmra.mxu0 %v1020
      %v1833 = vpop.f32.mrf.mxu0
      %v1834 = vadd.f32 %v1721, %v1833
      %1835 = vmatmul.f32.gmra.mxu0 %v1029
      %v1836 = vpop.f32.mrf.mxu0
      %v1837 = vadd.f32 %v1724, %v1836
      %1838 = vmatmul.f32.gmra.mxu0 %v1038
      %v1839 = vpop.f32.mrf.mxu0
      %v1840 = vadd.f32 %v1727, %v1839
      %1841 = vmatmul.f32.gmra.mxu0 %v1047
      %v1842 = vpop.f32.mrf.mxu0
      %v1843 = vadd.f32 %v1730, %v1842
      %1844 = vmatmul.f32.gmra.mxu0 %v1056
      %v1845 = vpop.f32.mrf.mxu0
      %v1846 = vadd.f32 %v1733, %v1845
      %1847 = vmatmul.f32.gmra.mxu0 %v1065
      %v1848 = vpop.f32.mrf.mxu0
      %v1849 = vadd.f32 %v1736, %v1848
      %1850 = vmatmul.f32.gmra.mxu0 %v1074
      %v1851 = vpop.f32.mrf.mxu0
      %v1852 = vadd.f32 %v1739, %v1851
      %1853 = vmatmul.f32.gmra.mxu0 %v1083
      %v1854 = vpop.f32.mrf.mxu0
      %v1855 = vadd.f32 %v1742, %v1854
      %1856 = vmatmul.f32.gmra.mxu0 %v1092
      %v1857 = vpop.f32.mrf.mxu0
      %v1858 = vadd.f32 %v1745, %v1857
      %1859 = vmatmul.f32.gmra.mxu0 %v1101
      %v1860 = vpop.f32.mrf.mxu0
      %v1861 = vadd.f32 %v1748, %v1860
      %1862 = vmatmul.f32.gmra.mxu0 %v1110
      %v1863 = vpop.f32.mrf.mxu0
      %v1864 = vadd.f32 %v1751, %v1863
      %1865 = vmatmul.f32.gmra.mxu0 %v1119
      %v1866 = vpop.f32.mrf.mxu0
      %v1867 = vadd.f32 %v1754, %v1866
      %1868 = vmatmul.f32.gmra.mxu0 %v1128
      %v1869 = vpop.f32.mrf.mxu0
      %v1870 = vadd.f32 %v1757, %v1869
      %1871 = vmatmul.f32.gmra.mxu0 %v1137
      %v1872 = vpop.f32.mrf.mxu0
      %v1873 = vadd.f32 %v1760, %v1872
      %1874 = vmatmul.f32.gmra.mxu0 %v1146
      %v1875 = vpop.f32.mrf.mxu0
      %v1876 = vadd.f32 %v1763, %v1875
      %1877 = vmatmul.f32.gmra.mxu0 %v1155
      %v1878 = vpop.f32.mrf.mxu0
      %v1879 = vadd.f32 %v1766, %v1878
      %1880 = vmatmul.f32.gmra.mxu0 %v1164
      %v1881 = vpop.f32.mrf.mxu0
      %v1882 = vadd.f32 %v1769, %v1881
      %1883 = vmatmul.f32.gmra.mxu0 %v1173
      %v1884 = vpop.f32.mrf.mxu0
      %v1885 = vadd.f32 %v1772, %v1884
      %1886 = vdwg.mxu0
      %1887 = vmatpush.msra.mxu0 %v1273
      %1888 = vmatpush.msra.mxu0 %v1272
      %1889 = vmatpush.msra.mxu0 %v1271
      %1890 = vmatpush.msra.mxu0 %v1270
      %1891 = vmatpush.msra.mxu0 %v1269
      %1892 = vmatpush.msra.mxu0 %v1268
      %1893 = vmatpush.msra.mxu0 %v1267
      %1894 = vmatpush.msra.mxu0 %v1266
      %1895 = vmatpush.msra.mxu0 %v1265
      %1896 = vmatpush.msra.mxu0 %v1264
      %1897 = vmatpush.msra.mxu0 %v1263
      %1898 = vmatpush.msra.mxu0 %v1262
      %1899 = vmatpush.msra.mxu0 %v1261
      %1900 = vmatpush.msra.mxu0 %v1260
      %1901 = vmatpush.msra.mxu0 %v1259
      %1902 = vmatpush.msra.mxu0 %v1258
      %1903 = vmatmul.f32.gmra.mxu0 %v895
      %v1904 = vpop.f32.mrf.mxu0
      %v1905 = vadd.f32 %v1792, %v1904
      %1906 = vmatmul.f32.gmra.mxu0 %v904
      %v1907 = vpop.f32.mrf.mxu0
      %v1908 = vadd.f32 %v1795, %v1907
      %1909 = vmatmul.f32.gmra.mxu0 %v913
      %v1910 = vpop.f32.mrf.mxu0
      %v1911 = vadd.f32 %v1798, %v1910
      %1912 = vmatmul.f32.gmra.mxu0 %v922
      %v1913 = vpop.f32.mrf.mxu0
      %v1914 = vadd.f32 %v1801, %v1913
      %1915 = vmatmul.f32.gmra.mxu0 %v931
      %v1916 = vpop.f32.mrf.mxu0
      %v1917 = vadd.f32 %v1804, %v1916
      %1918 = vmatmul.f32.gmra.mxu0 %v940
      %v1919 = vpop.f32.mrf.mxu0
      %v1920 = vadd.f32 %v1807, %v1919
      %1921 = vmatmul.f32.gmra.mxu0 %v949
      %v1922 = vpop.f32.mrf.mxu0
      %v1923 = vadd.f32 %v1810, %v1922
      %1924 = vmatmul.f32.gmra.mxu0 %v958
      %v1925 = vpop.f32.mrf.mxu0
      %v1926 = vadd.f32 %v1813, %v1925
      %1927 = vmatmul.f32.gmra.mxu0 %v967
      %v1928 = vpop.f32.mrf.mxu0
      %v1929 = vadd.f32 %v1816, %v1928
      %1930 = vmatmul.f32.gmra.mxu0 %v976
      %v1931 = vpop.f32.mrf.mxu0
      %v1932 = vadd.f32 %v1819, %v1931
      %1933 = vmatmul.f32.gmra.mxu0 %v985
      %v1934 = vpop.f32.mrf.mxu0
      %v1935 = vadd.f32 %v1822, %v1934
      %1936 = vmatmul.f32.gmra.mxu0 %v994
      %v1937 = vpop.f32.mrf.mxu0
      %v1938 = vadd.f32 %v1825, %v1937
      %1939 = vmatmul.f32.gmra.mxu0 %v1003
      %v1940 = vpop.f32.mrf.mxu0
      %v1941 = vadd.f32 %v1828, %v1940
      %1942 = vmatmul.f32.gmra.mxu0 %v1012
      %v1943 = vpop.f32.mrf.mxu0
      %v1944 = vadd.f32 %v1831, %v1943
      %1945 = vmatmul.f32.gmra.mxu0 %v1021
      %v1946 = vpop.f32.mrf.mxu0
      %v1947 = vadd.f32 %v1834, %v1946
      %1948 = vmatmul.f32.gmra.mxu0 %v1030
      %v1949 = vpop.f32.mrf.mxu0
      %v1950 = vadd.f32 %v1837, %v1949
      %1951 = vmatmul.f32.gmra.mxu0 %v1039
      %v1952 = vpop.f32.mrf.mxu0
      %v1953 = vadd.f32 %v1840, %v1952
      %1954 = vmatmul.f32.gmra.mxu0 %v1048
      %v1955 = vpop.f32.mrf.mxu0
      %v1956 = vadd.f32 %v1843, %v1955
      %1957 = vmatmul.f32.gmra.mxu0 %v1057
      %v1958 = vpop.f32.mrf.mxu0
      %v1959 = vadd.f32 %v1846, %v1958
      %1960 = vmatmul.f32.gmra.mxu0 %v1066
      %v1961 = vpop.f32.mrf.mxu0
      %v1962 = vadd.f32 %v1849, %v1961
      %1963 = vmatmul.f32.gmra.mxu0 %v1075
      %v1964 = vpop.f32.mrf.mxu0
      %v1965 = vadd.f32 %v1852, %v1964
      %1966 = vmatmul.f32.gmra.mxu0 %v1084
      %v1967 = vpop.f32.mrf.mxu0
      %v1968 = vadd.f32 %v1855, %v1967
      %1969 = vmatmul.f32.gmra.mxu0 %v1093
      %v1970 = vpop.f32.mrf.mxu0
      %v1971 = vadd.f32 %v1858, %v1970
      %1972 = vmatmul.f32.gmra.mxu0 %v1102
      %v1973 = vpop.f32.mrf.mxu0
      %v1974 = vadd.f32 %v1861, %v1973
      %1975 = vmatmul.f32.gmra.mxu0 %v1111
      %v1976 = vpop.f32.mrf.mxu0
      %v1977 = vadd.f32 %v1864, %v1976
      %1978 = vmatmul.f32.gmra.mxu0 %v1120
      %v1979 = vpop.f32.mrf.mxu0
      %v1980 = vadd.f32 %v1867, %v1979
      %1981 = vmatmul.f32.gmra.mxu0 %v1129
      %v1982 = vpop.f32.mrf.mxu0
      %v1983 = vadd.f32 %v1870, %v1982
      %1984 = vmatmul.f32.gmra.mxu0 %v1138
      %v1985 = vpop.f32.mrf.mxu0
      %v1986 = vadd.f32 %v1873, %v1985
      %1987 = vmatmul.f32.gmra.mxu0 %v1147
      %v1988 = vpop.f32.mrf.mxu0
      %v1989 = vadd.f32 %v1876, %v1988
      %1990 = vmatmul.f32.gmra.mxu0 %v1156
      %v1991 = vpop.f32.mrf.mxu0
      %v1992 = vadd.f32 %v1879, %v1991
      %1993 = vmatmul.f32.gmra.mxu0 %v1165
      %v1994 = vpop.f32.mrf.mxu0
      %v1995 = vadd.f32 %v1882, %v1994
      %1996 = vmatmul.f32.gmra.mxu0 %v1174
      %v1997 = vpop.f32.mrf.mxu0
      %v1998 = vadd.f32 %v1885, %v1997
      %1999 = vdwg.mxu0
      %2000 = vmatpush.msra.mxu0 %v1289
      %2001 = vmatpush.msra.mxu0 %v1288
      %2002 = vmatpush.msra.mxu0 %v1287
      %2003 = vmatpush.msra.mxu0 %v1286
      %2004 = vmatpush.msra.mxu0 %v1285
      %2005 = vmatpush.msra.mxu0 %v1284
      %2006 = vmatpush.msra.mxu0 %v1283
      %2007 = vmatpush.msra.mxu0 %v1282
      %2008 = vmatpush.msra.mxu0 %v1281
      %2009 = vmatpush.msra.mxu0 %v1280
      %2010 = vmatpush.msra.mxu0 %v1279
      %2011 = vmatpush.msra.mxu0 %v1278
      %2012 = vmatpush.msra.mxu0 %v1277
      %2013 = vmatpush.msra.mxu0 %v1276
      %2014 = vmatpush.msra.mxu0 %v1275
      %2015 = vmatpush.msra.mxu0 %v1274
      %2016 = vmatmul.f32.gmra.mxu0 %v896
      %v2017 = vpop.f32.mrf.mxu0
      %v2018 = vadd.f32 %v1905, %v2017
      %2019 = vmatmul.f32.gmra.mxu0 %v905
      %v2020 = vpop.f32.mrf.mxu0
      %v2021 = vadd.f32 %v1908, %v2020
      %2022 = vmatmul.f32.gmra.mxu0 %v914
      %v2023 = vpop.f32.mrf.mxu0
      %v2024 = vadd.f32 %v1911, %v2023
      %2025 = vmatmul.f32.gmra.mxu0 %v923
      %v2026 = vpop.f32.mrf.mxu0
      %v2027 = vadd.f32 %v1914, %v2026
      %2028 = vmatmul.f32.gmra.mxu0 %v932
      %v2029 = vpop.f32.mrf.mxu0
      %v2030 = vadd.f32 %v1917, %v2029
      %2031 = vmatmul.f32.gmra.mxu0 %v941
      %v2032 = vpop.f32.mrf.mxu0
      %v2033 = vadd.f32 %v1920, %v2032
      %2034 = vmatmul.f32.gmra.mxu0 %v950
      %v2035 = vpop.f32.mrf.mxu0
      %v2036 = vadd.f32 %v1923, %v2035
      %2037 = vmatmul.f32.gmra.mxu0 %v959
      %v2038 = vpop.f32.mrf.mxu0
      %v2039 = vadd.f32 %v1926, %v2038
      %2040 = vmatmul.f32.gmra.mxu0 %v968
      %v2041 = vpop.f32.mrf.mxu0
      %v2042 = vadd.f32 %v1929, %v2041
      %2043 = vmatmul.f32.gmra.mxu0 %v977
      %v2044 = vpop.f32.mrf.mxu0
      %v2045 = vadd.f32 %v1932, %v2044
      %2046 = vmatmul.f32.gmra.mxu0 %v986
      %v2047 = vpop.f32.mrf.mxu0
      %v2048 = vadd.f32 %v1935, %v2047
      %2049 = vmatmul.f32.gmra.mxu0 %v995
      %v2050 = vpop.f32.mrf.mxu0
      %v2051 = vadd.f32 %v1938, %v2050
      %2052 = vmatmul.f32.gmra.mxu0 %v1004
      %v2053 = vpop.f32.mrf.mxu0
      %v2054 = vadd.f32 %v1941, %v2053
      %2055 = vmatmul.f32.gmra.mxu0 %v1013
      %v2056 = vpop.f32.mrf.mxu0
      %v2057 = vadd.f32 %v1944, %v2056
      %2058 = vmatmul.f32.gmra.mxu0 %v1022
      %v2059 = vpop.f32.mrf.mxu0
      %v2060 = vadd.f32 %v1947, %v2059
      %2061 = vmatmul.f32.gmra.mxu0 %v1031
      %v2062 = vpop.f32.mrf.mxu0
      %v2063 = vadd.f32 %v1950, %v2062
      %2064 = vmatmul.f32.gmra.mxu0 %v1040
      %v2065 = vpop.f32.mrf.mxu0
      %v2066 = vadd.f32 %v1953, %v2065
      %2067 = vmatmul.f32.gmra.mxu0 %v1049
      %v2068 = vpop.f32.mrf.mxu0
      %v2069 = vadd.f32 %v1956, %v2068
      %2070 = vmatmul.f32.gmra.mxu0 %v1058
      %v2071 = vpop.f32.mrf.mxu0
      %v2072 = vadd.f32 %v1959, %v2071
      %2073 = vmatmul.f32.gmra.mxu0 %v1067
      %v2074 = vpop.f32.mrf.mxu0
      %v2075 = vadd.f32 %v1962, %v2074
      %2076 = vmatmul.f32.gmra.mxu0 %v1076
      %v2077 = vpop.f32.mrf.mxu0
      %v2078 = vadd.f32 %v1965, %v2077
      %2079 = vmatmul.f32.gmra.mxu0 %v1085
      %v2080 = vpop.f32.mrf.mxu0
      %v2081 = vadd.f32 %v1968, %v2080
      %2082 = vmatmul.f32.gmra.mxu0 %v1094
      %v2083 = vpop.f32.mrf.mxu0
      %v2084 = vadd.f32 %v1971, %v2083
      %2085 = vmatmul.f32.gmra.mxu0 %v1103
      %v2086 = vpop.f32.mrf.mxu0
      %v2087 = vadd.f32 %v1974, %v2086
      %2088 = vmatmul.f32.gmra.mxu0 %v1112
      %v2089 = vpop.f32.mrf.mxu0
      %v2090 = vadd.f32 %v1977, %v2089
      %2091 = vmatmul.f32.gmra.mxu0 %v1121
      %v2092 = vpop.f32.mrf.mxu0
      %v2093 = vadd.f32 %v1980, %v2092
      %2094 = vmatmul.f32.gmra.mxu0 %v1130
      %v2095 = vpop.f32.mrf.mxu0
      %v2096 = vadd.f32 %v1983, %v2095
      %2097 = vmatmul.f32.gmra.mxu0 %v1139
      %v2098 = vpop.f32.mrf.mxu0
      %v2099 = vadd.f32 %v1986, %v2098
      %2100 = vmatmul.f32.gmra.mxu0 %v1148
      %v2101 = vpop.f32.mrf.mxu0
      %v2102 = vadd.f32 %v1989, %v2101
      %2103 = vmatmul.f32.gmra.mxu0 %v1157
      %v2104 = vpop.f32.mrf.mxu0
      %v2105 = vadd.f32 %v1992, %v2104
      %2106 = vmatmul.f32.gmra.mxu0 %v1166
      %v2107 = vpop.f32.mrf.mxu0
      %v2108 = vadd.f32 %v1995, %v2107
      %2109 = vmatmul.f32.gmra.mxu0 %v1175
      %v2110 = vpop.f32.mrf.mxu0
      %v2111 = vadd.f32 %v1998, %v2110
      %2112 = vdwg.mxu0
      %2113 = vmatpush.msra.mxu0 %v1305
      %2114 = vmatpush.msra.mxu0 %v1304
      %2115 = vmatpush.msra.mxu0 %v1303
      %2116 = vmatpush.msra.mxu0 %v1302
      %2117 = vmatpush.msra.mxu0 %v1301
      %2118 = vmatpush.msra.mxu0 %v1300
      %2119 = vmatpush.msra.mxu0 %v1299
      %2120 = vmatpush.msra.mxu0 %v1298
      %2121 = vmatpush.msra.mxu0 %v1297
      %2122 = vmatpush.msra.mxu0 %v1296
      %2123 = vmatpush.msra.mxu0 %v1295
      %2124 = vmatpush.msra.mxu0 %v1294
      %2125 = vmatpush.msra.mxu0 %v1293
      %2126 = vmatpush.msra.mxu0 %v1292
      %2127 = vmatpush.msra.mxu0 %v1291
      %2128 = vmatpush.msra.mxu0 %v1290
      %2129 = vmatmul.f32.gmra.mxu0 %v897
      %v2130 = vpop.f32.mrf.mxu0
      %v2131 = vadd.f32 %v2018, %v2130
      %2132 = vmatmul.f32.gmra.mxu0 %v906
      %v2133 = vpop.f32.mrf.mxu0
      %v2134 = vadd.f32 %v2021, %v2133
      %2135 = vmatmul.f32.gmra.mxu0 %v915
      %v2136 = vpop.f32.mrf.mxu0
      %v2137 = vadd.f32 %v2024, %v2136
      %2138 = vmatmul.f32.gmra.mxu0 %v924
      %v2139 = vpop.f32.mrf.mxu0
      %v2140 = vadd.f32 %v2027, %v2139
      %2141 = vmatmul.f32.gmra.mxu0 %v933
      %v2142 = vpop.f32.mrf.mxu0
      %v2143 = vadd.f32 %v2030, %v2142
      %2144 = vmatmul.f32.gmra.mxu0 %v942
      %v2145 = vpop.f32.mrf.mxu0
      %v2146 = vadd.f32 %v2033, %v2145
      %2147 = vmatmul.f32.gmra.mxu0 %v951
      %v2148 = vpop.f32.mrf.mxu0
      %v2149 = vadd.f32 %v2036, %v2148
      %2150 = vmatmul.f32.gmra.mxu0 %v960
      %v2151 = vpop.f32.mrf.mxu0
      %v2152 = vadd.f32 %v2039, %v2151
      %2153 = vmatmul.f32.gmra.mxu0 %v969
      %v2154 = vpop.f32.mrf.mxu0
      %v2155 = vadd.f32 %v2042, %v2154
      %2156 = vmatmul.f32.gmra.mxu0 %v978
      %v2157 = vpop.f32.mrf.mxu0
      %v2158 = vadd.f32 %v2045, %v2157
      %2159 = vmatmul.f32.gmra.mxu0 %v987
      %v2160 = vpop.f32.mrf.mxu0
      %v2161 = vadd.f32 %v2048, %v2160
      %2162 = vmatmul.f32.gmra.mxu0 %v996
      %v2163 = vpop.f32.mrf.mxu0
      %v2164 = vadd.f32 %v2051, %v2163
      %2165 = vmatmul.f32.gmra.mxu0 %v1005
      %v2166 = vpop.f32.mrf.mxu0
      %v2167 = vadd.f32 %v2054, %v2166
      %2168 = vmatmul.f32.gmra.mxu0 %v1014
      %v2169 = vpop.f32.mrf.mxu0
      %v2170 = vadd.f32 %v2057, %v2169
      %2171 = vmatmul.f32.gmra.mxu0 %v1023
      %v2172 = vpop.f32.mrf.mxu0
      %v2173 = vadd.f32 %v2060, %v2172
      %2174 = vmatmul.f32.gmra.mxu0 %v1032
      %v2175 = vpop.f32.mrf.mxu0
      %v2176 = vadd.f32 %v2063, %v2175
      %2177 = vmatmul.f32.gmra.mxu0 %v1041
      %v2178 = vpop.f32.mrf.mxu0
      %v2179 = vadd.f32 %v2066, %v2178
      %2180 = vmatmul.f32.gmra.mxu0 %v1050
      %v2181 = vpop.f32.mrf.mxu0
      %v2182 = vadd.f32 %v2069, %v2181
      %2183 = vmatmul.f32.gmra.mxu0 %v1059
      %v2184 = vpop.f32.mrf.mxu0
      %v2185 = vadd.f32 %v2072, %v2184
      %2186 = vmatmul.f32.gmra.mxu0 %v1068
      %v2187 = vpop.f32.mrf.mxu0
      %v2188 = vadd.f32 %v2075, %v2187
      %2189 = vmatmul.f32.gmra.mxu0 %v1077
      %v2190 = vpop.f32.mrf.mxu0
      %v2191 = vadd.f32 %v2078, %v2190
      %2192 = vmatmul.f32.gmra.mxu0 %v1086
      %v2193 = vpop.f32.mrf.mxu0
      %v2194 = vadd.f32 %v2081, %v2193
      %2195 = vmatmul.f32.gmra.mxu0 %v1095
      %v2196 = vpop.f32.mrf.mxu0
      %v2197 = vadd.f32 %v2084, %v2196
      %2198 = vmatmul.f32.gmra.mxu0 %v1104
      %v2199 = vpop.f32.mrf.mxu0
      %v2200 = vadd.f32 %v2087, %v2199
      %2201 = vmatmul.f32.gmra.mxu0 %v1113
      %v2202 = vpop.f32.mrf.mxu0
      %v2203 = vadd.f32 %v2090, %v2202
      %2204 = vmatmul.f32.gmra.mxu0 %v1122
      %v2205 = vpop.f32.mrf.mxu0
      %v2206 = vadd.f32 %v2093, %v2205
      %2207 = vmatmul.f32.gmra.mxu0 %v1131
      %v2208 = vpop.f32.mrf.mxu0
      %v2209 = vadd.f32 %v2096, %v2208
      %2210 = vmatmul.f32.gmra.mxu0 %v1140
      %v2211 = vpop.f32.mrf.mxu0
      %v2212 = vadd.f32 %v2099, %v2211
      %2213 = vmatmul.f32.gmra.mxu0 %v1149
      %v2214 = vpop.f32.mrf.mxu0
      %v2215 = vadd.f32 %v2102, %v2214
      %2216 = vmatmul.f32.gmra.mxu0 %v1158
      %v2217 = vpop.f32.mrf.mxu0
      %v2218 = vadd.f32 %v2105, %v2217
      %2219 = vmatmul.f32.gmra.mxu0 %v1167
      %v2220 = vpop.f32.mrf.mxu0
      %v2221 = vadd.f32 %v2108, %v2220
      %2222 = vmatmul.f32.gmra.mxu0 %v1176
      %v2223 = vpop.f32.mrf.mxu0
      %v2224 = vadd.f32 %v2111, %v2223
      %2225 = vdwg.mxu0
      %2226 = vmatpush.msra.mxu0 %v1321
      %2227 = vmatpush.msra.mxu0 %v1320
      %2228 = vmatpush.msra.mxu0 %v1319
      %2229 = vmatpush.msra.mxu0 %v1318
      %2230 = vmatpush.msra.mxu0 %v1317
      %2231 = vmatpush.msra.mxu0 %v1316
      %2232 = vmatpush.msra.mxu0 %v1315
      %2233 = vmatpush.msra.mxu0 %v1314
      %2234 = vmatpush.msra.mxu0 %v1313
      %2235 = vmatpush.msra.mxu0 %v1312
      %2236 = vmatpush.msra.mxu0 %v1311
      %2237 = vmatpush.msra.mxu0 %v1310
      %2238 = vmatpush.msra.mxu0 %v1309
      %2239 = vmatpush.msra.mxu0 %v1308
      %2240 = vmatpush.msra.mxu0 %v1307
      %2241 = vmatpush.msra.mxu0 %v1306
      %2242 = vmatmul.f32.gmra.mxu0 %v898
      %v2243 = vpop.f32.mrf.mxu0
      %v2244 = vadd.f32 %v2131, %v2243
      %2245 = vmatmul.f32.gmra.mxu0 %v907
      %v2246 = vpop.f32.mrf.mxu0
      %v2247 = vadd.f32 %v2134, %v2246
      %2248 = vmatmul.f32.gmra.mxu0 %v916
      %v2249 = vpop.f32.mrf.mxu0
      %v2250 = vadd.f32 %v2137, %v2249
      %2251 = vmatmul.f32.gmra.mxu0 %v925
      %v2252 = vpop.f32.mrf.mxu0
      %v2253 = vadd.f32 %v2140, %v2252
      %2254 = vmatmul.f32.gmra.mxu0 %v934
      %v2255 = vpop.f32.mrf.mxu0
      %v2256 = vadd.f32 %v2143, %v2255
      %2257 = vmatmul.f32.gmra.mxu0 %v943
      %v2258 = vpop.f32.mrf.mxu0
      %v2259 = vadd.f32 %v2146, %v2258
      %2260 = vmatmul.f32.gmra.mxu0 %v952
      %v2261 = vpop.f32.mrf.mxu0
      %v2262 = vadd.f32 %v2149, %v2261
      %2263 = vmatmul.f32.gmra.mxu0 %v961
      %v2264 = vpop.f32.mrf.mxu0
      %v2265 = vadd.f32 %v2152, %v2264
      %2266 = vmatmul.f32.gmra.mxu0 %v970
      %v2267 = vpop.f32.mrf.mxu0
      %v2268 = vadd.f32 %v2155, %v2267
      %2269 = vmatmul.f32.gmra.mxu0 %v979
      %v2270 = vpop.f32.mrf.mxu0
      %v2271 = vadd.f32 %v2158, %v2270
      %2272 = vmatmul.f32.gmra.mxu0 %v988
      %v2273 = vpop.f32.mrf.mxu0
      %v2274 = vadd.f32 %v2161, %v2273
      %2275 = vmatmul.f32.gmra.mxu0 %v997
      %v2276 = vpop.f32.mrf.mxu0
      %v2277 = vadd.f32 %v2164, %v2276
      %2278 = vmatmul.f32.gmra.mxu0 %v1006
      %v2279 = vpop.f32.mrf.mxu0
      %v2280 = vadd.f32 %v2167, %v2279
      %2281 = vmatmul.f32.gmra.mxu0 %v1015
      %v2282 = vpop.f32.mrf.mxu0
      %v2283 = vadd.f32 %v2170, %v2282
      %2284 = vmatmul.f32.gmra.mxu0 %v1024
      %v2285 = vpop.f32.mrf.mxu0
      %v2286 = vadd.f32 %v2173, %v2285
      %2287 = vmatmul.f32.gmra.mxu0 %v1033
      %v2288 = vpop.f32.mrf.mxu0
      %v2289 = vadd.f32 %v2176, %v2288
      %2290 = vmatmul.f32.gmra.mxu0 %v1042
      %v2291 = vpop.f32.mrf.mxu0
      %v2292 = vadd.f32 %v2179, %v2291
      %2293 = vmatmul.f32.gmra.mxu0 %v1051
      %v2294 = vpop.f32.mrf.mxu0
      %v2295 = vadd.f32 %v2182, %v2294
      %2296 = vmatmul.f32.gmra.mxu0 %v1060
      %v2297 = vpop.f32.mrf.mxu0
      %v2298 = vadd.f32 %v2185, %v2297
      %2299 = vmatmul.f32.gmra.mxu0 %v1069
      %v2300 = vpop.f32.mrf.mxu0
      %v2301 = vadd.f32 %v2188, %v2300
      %2302 = vmatmul.f32.gmra.mxu0 %v1078
      %v2303 = vpop.f32.mrf.mxu0
      %v2304 = vadd.f32 %v2191, %v2303
      %2305 = vmatmul.f32.gmra.mxu0 %v1087
      %v2306 = vpop.f32.mrf.mxu0
      %v2307 = vadd.f32 %v2194, %v2306
      %2308 = vmatmul.f32.gmra.mxu0 %v1096
      %v2309 = vpop.f32.mrf.mxu0
      %v2310 = vadd.f32 %v2197, %v2309
      %2311 = vmatmul.f32.gmra.mxu0 %v1105
      %v2312 = vpop.f32.mrf.mxu0
      %v2313 = vadd.f32 %v2200, %v2312
      %2314 = vmatmul.f32.gmra.mxu0 %v1114
      %v2315 = vpop.f32.mrf.mxu0
      %v2316 = vadd.f32 %v2203, %v2315
      %2317 = vmatmul.f32.gmra.mxu0 %v1123
      %v2318 = vpop.f32.mrf.mxu0
      %v2319 = vadd.f32 %v2206, %v2318
      %2320 = vmatmul.f32.gmra.mxu0 %v1132
      %v2321 = vpop.f32.mrf.mxu0
      %v2322 = vadd.f32 %v2209, %v2321
      %2323 = vmatmul.f32.gmra.mxu0 %v1141
      %v2324 = vpop.f32.mrf.mxu0
      %v2325 = vadd.f32 %v2212, %v2324
      %2326 = vmatmul.f32.gmra.mxu0 %v1150
      %v2327 = vpop.f32.mrf.mxu0
      %v2328 = vadd.f32 %v2215, %v2327
      %2329 = vmatmul.f32.gmra.mxu0 %v1159
      %v2330 = vpop.f32.mrf.mxu0
      %v2331 = vadd.f32 %v2218, %v2330
      %2332 = vmatmul.f32.gmra.mxu0 %v1168
      %v2333 = vpop.f32.mrf.mxu0
      %v2334 = vadd.f32 %v2221, %v2333
      %2335 = vmatmul.f32.gmra.mxu0 %v1177
      %v2336 = vpop.f32.mrf.mxu0
      %v2337 = vadd.f32 %v2224, %v2336
      %2338 = vdwg.mxu0
      %v2339 = vadd.f32 %v2244, %v2247
      %v2340 = vadd.f32 %v2339, %v2250
      %v2341 = vadd.f32 %v2340, %v2253
      %v2342 = vadd.f32 %v2341, %v2256
      %v2343 = vadd.f32 %v2342, %v2259
      %v2344 = vadd.f32 %v2343, %v2262
      %v2345 = vadd.f32 %v2344, %v2265
      %v2346 = vadd.f32 %v2345, %v2268
      %v2347 = vadd.f32 %v2346, %v2271
      %v2348 = vadd.f32 %v2347, %v2274
      %v2349 = vadd.f32 %v2348, %v2277
      %v2350 = vadd.f32 %v2349, %v2280
      %v2351 = vadd.f32 %v2350, %v2283
      %v2352 = vadd.f32 %v2351, %v2286
      %v2353 = vadd.f32 %v2352, %v2289
      %v2354 = vadd.f32 %v2353, %v2292
      %v2355 = vadd.f32 %v2354, %v2295
      %v2356 = vadd.f32 %v2355, %v2298
      %v2357 = vadd.f32 %v2356, %v2301
      %v2358 = vadd.f32 %v2357, %v2304
      %v2359 = vadd.f32 %v2358, %v2307
      %v2360 = vadd.f32 %v2359, %v2310
      %v2361 = vadd.f32 %v2360, %v2313
      %v2362 = vadd.f32 %v2361, %v2316
      %v2363 = vadd.f32 %v2362, %v2319
      %v2364 = vadd.f32 %v2363, %v2322
      %v2365 = vadd.f32 %v2364, %v2325
      %v2366 = vadd.f32 %v2365, %v2328
      %v2367 = vadd.f32 %v2366, %v2331
      %v2368 = vadd.f32 %v2367, %v2334
      %v2369 = vadd.f32 %v2368, %v2337
      %v2370 = vrot.slane %v2369, 4
      %v2371 = vadd.f32 %v2369, %v2370
      %v2372 = vrot.slane %v2371, 2
      %v2373 = vadd.f32 %v2371, %v2372
      %v2374 = vrot.slane %v2373, 1
      %v2375 = vadd.f32 %v2373, %v2374
      %v2376 = vrcp.pop 256.0
      %v2377 = vmul.f32 256.0, %v2376
      %v2378 = vsub.f32 1.0, %v2377
      %v2379 = vmul.f32 %v2376, %v2378
      %v2380 = vadd.f32 %v2376, %v2379
      %vm2381 = vweird.f32 %v2376
      %v2382 = vsel %vm2381, %v2376, %v2380
      %v2383 = vmul.f32 %v2375, %v2382
      %v2384 = vsub.f32 %v2244, %v2383
      %v2385 = vsub.f32 %v2247, %v2383
      %v2386 = vsub.f32 %v2250, %v2383
      %v2387 = vsub.f32 %v2253, %v2383
      %v2388 = vsub.f32 %v2256, %v2383
      %v2389 = vsub.f32 %v2259, %v2383
      %v2390 = vsub.f32 %v2262, %v2383
      %v2391 = vsub.f32 %v2265, %v2383
      %v2392 = vsub.f32 %v2268, %v2383
      %v2393 = vsub.f32 %v2271, %v2383
      %v2394 = vsub.f32 %v2274, %v2383
      %v2395 = vsub.f32 %v2277, %v2383
      %v2396 = vsub.f32 %v2280, %v2383
      %v2397 = vsub.f32 %v2283, %v2383
      %v2398 = vsub.f32 %v2286, %v2383
      %v2399 = vsub.f32 %v2289, %v2383
      %v2400 = vsub.f32 %v2292, %v2383
      %v2401 = vsub.f32 %v2295, %v2383
      %v2402 = vsub.f32 %v2298, %v2383
      %v2403 = vsub.f32 %v2301, %v2383
      %v2404 = vsub.f32 %v2304, %v2383
      %v2405 = vsub.f32 %v2307, %v2383
      %v2406 = vsub.f32 %v2310, %v2383
      %v2407 = vsub.f32 %v2313, %v2383
      %v2408 = vsub.f32 %v2316, %v2383
      %v2409 = vsub.f32 %v2319, %v2383
      %v2410 = vsub.f32 %v2322, %v2383
      %v2411 = vsub.f32 %v2325, %v2383
      %v2412 = vsub.f32 %v2328, %v2383
      %v2413 = vsub.f32 %v2331, %v2383
      %v2414 = vsub.f32 %v2334, %v2383
      %v2415 = vsub.f32 %v2337, %v2383
      %v2416 = vmul.f32 %v2384, %v2384
      %v2417 = vmul.f32 %v2385, %v2385
      %v2418 = vmul.f32 %v2386, %v2386
      %v2419 = vmul.f32 %v2387, %v2387
      %v2420 = vmul.f32 %v2388, %v2388
      %v2421 = vmul.f32 %v2389, %v2389
      %v2422 = vmul.f32 %v2390, %v2390
      %v2423 = vmul.f32 %v2391, %v2391
      %v2424 = vmul.f32 %v2392, %v2392
      %v2425 = vmul.f32 %v2393, %v2393
      %v2426 = vmul.f32 %v2394, %v2394
      %v2427 = vmul.f32 %v2395, %v2395
      %v2428 = vmul.f32 %v2396, %v2396
      %v2429 = vmul.f32 %v2397, %v2397
      %v2430 = vmul.f32 %v2398, %v2398
      %v2431 = vmul.f32 %v2399, %v2399
      %v2432 = vmul.f32 %v2400, %v2400
      %v2433 = vmul.f32 %v2401, %v2401
      %v2434 = vmul.f32 %v2402, %v2402
      %v2435 = vmul.f32 %v2403, %v2403
      %v2436 = vmul.f32 %v2404, %v2404
      %v2437 = vmul.f32 %v2405, %v2405
      %v2438 = vmul.f32 %v2406, %v2406
      %v2439 = vmul.f32 %v2407, %v2407
      %v2440 = vmul.f32 %v2408, %v2408
      %v2441 = vmul.f32 %v2409, %v2409
      %v2442 = vmul.f32 %v2410, %v2410
      %v2443 = vmul.f32 %v2411, %v2411
      %v2444 = vmul.f32 %v2412, %v2412
      %v2445 = vmul.f32 %v2413, %v2413
      %v2446 = vmul.f32 %v2414, %v2414
      %v2447 = vmul.f32 %v2415, %v2415
      %v2448 = vadd.f32 %v2416, %v2417
      %v2449 = vadd.f32 %v2448, %v2418
      %v2450 = vadd.f32 %v2449, %v2419
      %v2451 = vadd.f32 %v2450, %v2420
      %v2452 = vadd.f32 %v2451, %v2421
      %v2453 = vadd.f32 %v2452, %v2422
      %v2454 = vadd.f32 %v2453, %v2423
      %v2455 = vadd.f32 %v2454, %v2424
      %v2456 = vadd.f32 %v2455, %v2425
      %v2457 = vadd.f32 %v2456, %v2426
      %v2458 = vadd.f32 %v2457, %v2427
      %v2459 = vadd.f32 %v2458, %v2428
      %v2460 = vadd.f32 %v2459, %v2429
      %v2461 = vadd.f32 %v2460, %v2430
      %v2462 = vadd.f32 %v2461, %v2431
      %v2463 = vadd.f32 %v2462, %v2432
      %v2464 = vadd.f32 %v2463, %v2433
      %v2465 = vadd.f32 %v2464, %v2434
      %v2466 = vadd.f32 %v2465, %v2435
      %v2467 = vadd.f32 %v2466, %v2436
      %v2468 = vadd.f32 %v2467, %v2437
      %v2469 = vadd.f32 %v2468, %v2438
      %v2470 = vadd.f32 %v2469, %v2439
      %v2471 = vadd.f32 %v2470, %v2440
      %v2472 = vadd.f32 %v2471, %v2441
      %v2473 = vadd.f32 %v2472, %v2442
      %v2474 = vadd.f32 %v2473, %v2443
      %v2475 = vadd.f32 %v2474, %v2444
      %v2476 = vadd.f32 %v2475, %v2445
      %v2477 = vadd.f32 %v2476, %v2446
      %v2478 = vadd.f32 %v2477, %v2447
      %v2479 = vrot.slane %v2478, 4
      %v2480 = vadd.f32 %v2478, %v2479
      %v2481 = vrot.slane %v2480, 2
      %v2482 = vadd.f32 %v2480, %v2481
      %v2483 = vrot.slane %v2482, 1
      %v2484 = vadd.f32 %v2482, %v2483
      %v2485 = vmul.f32 %v2484, %v2382
      %v2486 = vadd.f32 %v2485, 1e-05
      %v2487 = vrsqrt.pop %v2486
      %v2488 = vmul.f32 %v2487, %v2486
      %v2489 = vmul.f32 %v2488, %v2487
      %v2490 = vmul.f32 0.5, %v2489
      %v2491 = vsub.f32 1.5, %v2490
      %v2492 = vmul.f32 %v2487, %v2491
      %vm2493 = vweird.f32 %v2486
      %vm2494 = vweird.f32 %v2487
      %vm2495 = vmor %vm2493, %vm2494
      %v2496 = vsel %vm2495, %v2487, %v2492
      %v2497 = vmul.f32 %v2384, %v2496
      %v2498 = vmul.f32 %v2385, %v2496
      %v2499 = vmul.f32 %v2386, %v2496
      %v2500 = vmul.f32 %v2387, %v2496
      %v2501 = vmul.f32 %v2388, %v2496
      %v2502 = vmul.f32 %v2389, %v2496
      %v2503 = vmul.f32 %v2390, %v2496
      %v2504 = vmul.f32 %v2391, %v2496
      %v2505 = vmul.f32 %v2392, %v2496
      %v2506 = vmul.f32 %v2393, %v2496
      %v2507 = vmul.f32 %v2394, %v2496
      %v2508 = vmul.f32 %v2395, %v2496
      %v2509 = vmul.f32 %v2396, %v2496
      %v2510 = vmul.f32 %v2397, %v2496
      %v2511 = vmul.f32 %v2398, %v2496
      %v2512 = vmul.f32 %v2399, %v2496
      %v2513 = vmul.f32 %v2400, %v2496
      %v2514 = vmul.f32 %v2401, %v2496
      %v2515 = vmul.f32 %v2402, %v2496
      %v2516 = vmul.f32 %v2403, %v2496
      %v2517 = vmul.f32 %v2404, %v2496
      %v2518 = vmul.f32 %v2405, %v2496
      %v2519 = vmul.f32 %v2406, %v2496
      %v2520 = vmul.f32 %v2407, %v2496
      %v2521 = vmul.f32 %v2408, %v2496
      %v2522 = vmul.f32 %v2409, %v2496
      %v2523 = vmul.f32 %v2410, %v2496
      %v2524 = vmul.f32 %v2411, %v2496
      %v2525 = vmul.f32 %v2412, %v2496
      %v2526 = vmul.f32 %v2413, %v2496
      %v2527 = vmul.f32 %v2414, %v2496
      %v2528 = vmul.f32 %v2415, %v2496
      %v2529 = vmax.f32 %v2497, 0.0
      %v2530 = vmax.f32 %v2498, 0.0
      %v2531 = vmax.f32 %v2499, 0.0
      %v2532 = vmax.f32 %v2500, 0.0
      %v2533 = vmax.f32 %v2501, 0.0
      %v2534 = vmax.f32 %v2502, 0.0
      %v2535 = vmax.f32 %v2503, 0.0
      %v2536 = vmax.f32 %v2504, 0.0
      %v2537 = vmax.f32 %v2505, 0.0
      %v2538 = vmax.f32 %v2506, 0.0
      %v2539 = vmax.f32 %v2507, 0.0
      %v2540 = vmax.f32 %v2508, 0.0
      %v2541 = vmax.f32 %v2509, 0.0
      %v2542 = vmax.f32 %v2510, 0.0
      %v2543 = vmax.f32 %v2511, 0.0
      %v2544 = vmax.f32 %v2512, 0.0
      %v2545 = vmax.f32 %v2513, 0.0
      %v2546 = vmax.f32 %v2514, 0.0
      %v2547 = vmax.f32 %v2515, 0.0
      %v2548 = vmax.f32 %v2516, 0.0
      %v2549 = vmax.f32 %v2517, 0.0
      %v2550 = vmax.f32 %v2518, 0.0
      %v2551 = vmax.f32 %v2519, 0.0
      %v2552 = vmax.f32 %v2520, 0.0
      %v2553 = vmax.f32 %v2521, 0.0
      %v2554 = vmax.f32 %v2522, 0.0
      %v2555 = vmax.f32 %v2523, 0.0
      %v2556 = vmax.f32 %v2524, 0.0
      %v2557 = vmax.f32 %v2525, 0.0
      %v2558 = vmax.f32 %v2526, 0.0
      %v2559 = vmax.f32 %v2527, 0.0
      %v2560 = vmax.f32 %v2528, 0.0
      %2561 = vst [vmem:[%s203 + $0x1] sm:$0xff] %v2529
      %2562 = vst [vmem:[%s203 + $0x9] sm:$0xff] %v2530
      %2563 = vst [vmem:[%s203 + $0x19] sm:$0xff] %v2531
      %2564 = vst [vmem:[%s203 + $0x21] sm:$0xff] %v2532
      %2565 = vst [vmem:[%s203 + $0x31] sm:$0xff] %v2533
      %2566 = vst [vmem:[%s203 + $0x39] sm:$0xff] %v2534
      %2567 = vst [vmem:[%s203 + $0x49] sm:$0xff] %v2535
      %2568 = vst [vmem:[%s203 + $0x51] sm:$0xff] %v2536
      %2569 = vst [vmem:[%s203 + $0x61] sm:$0xff] %v2537
      %2570 = vst [vmem:[%s203 + $0x69] sm:$0xff] %v2538
      %2571 = vst [vmem:[%s203 + $0x79] sm:$0xff] %v2539
      %2572 = vst [vmem:[%s203 + $0x81] sm:$0xff] %v2540
      %2573 = vst [vmem:[%s203 + $0x91] sm:$0xff] %v2541
      %2574 = vst [vmem:[%s203 + $0x99] sm:$0xff] %v2542
      %2575 = vst [vmem:[%s203 + $0xa9] sm:$0xff] %v2543
      %2576 = vst [vmem:[%s203 + $0xb1] sm:$0xff] %v2544
      %2577 = vst [vmem:[%s203 + $0xc1] sm:$0xff] %v2545
      %2578 = vst [vmem:[%s203 + $0xc9] sm:$0xff] %v2546
      %2579 = vst [vmem:[%s203 + $0xd9] sm:$0xff] %v2547
      %2580 = vst [vmem:[%s203 + $0xe1] sm:$0xff] %v2548
      %2581 = vst [vmem:[%s203 + $0xf1] sm:$0xff] %v2549
      %2582 = vst [vmem:[%s203 + $0xf9] sm:$0xff] %v2550
      %2583 = vst [vmem:[%s203 + $0x109] sm:$0xff] %v2551
      %2584 = vst [vmem:[%s203 + $0x111] sm:$0xff] %v2552
      %2585 = vst [vmem:[%s203 + $0x121] sm:$0xff] %v2553
      %2586 = vst [vmem:[%s203 + $0x129] sm:$0xff] %v2554
      %2587 = vst [vmem:[%s203 + $0x139] sm:$0xff] %v2555
      %2588 = vst [vmem:[%s203 + $0x141] sm:$0xff] %v2556
      %2589 = vst [vmem:[%s203 + $0x151] sm:$0xff] %v2557
      %2590 = vst [vmem:[%s203 + $0x159] sm:$0xff] %v2558
      %2591 = vst [vmem:[%s203 + $0x169] sm:$0xff] %v2559
      %2592 = vst [vmem:[%s203 + $0x171] sm:$0xff] %v2560
      %2593 = vst [vmem:[#allocation2 + $0x1] sm:$0xff] %v2531
      %2594 = vst [vmem:[#allocation2 + $0x9] sm:$0xff] %v2532
      %2595 = vst [vmem:[%s238 + $0x1] sm:$0xff] %v2557
      %2596 = vst [vmem:[%s238 + $0x9] sm:$0xff] %v2558
      %v2597 = vld [vmem:[#allocation2 + $0x2] sm:$0x1]
      %v2598 = vld [vmem:[#allocation2 + $0x1a] sm:$0x1]
      %v2599 = vld [vmem:[#allocation2 + $0x32] sm:$0x1]
      %v2600 = vld [vmem:[#allocation2 + $0x4a] sm:$0x1]
      %v2601 = vld [vmem:[#allocation2 + $0x62] sm:$0x1]
      %v2602 = vld [vmem:[#allocation2 + $0x7a] sm:$0x1]
      %v2603 = vld [vmem:[#allocation2 + $0x92] sm:$0x1]
      %v2604 = vld [vmem:[#allocation2 + $0xaa] sm:$0x1]
      %v2605 = vld [vmem:[#allocation2 + $0xc2] sm:$0x1]
      %v2606 = vld [vmem:[#allocation2 + $0xda] sm:$0x1]
      %v2607 = vld [vmem:[#allocation2 + $0xf2] sm:$0x1]
      %v2608 = vld [vmem:[#allocation2 + $0x10a] sm:$0x1]
      %v2609 = vld [vmem:[#allocation2 + $0x122] sm:$0x1]
      %v2610 = vld [vmem:[#allocation2 + $0x13a] sm:$0x1]
      %v2611 = vld [vmem:[#allocation2 + $0x152] sm:$0x1]
      %v2612 = vld [vmem:[#allocation2 + $0x16a] sm:$0x1]
      %v2613 = vld [vmem:[#allocation2 + $0x182] sm:$0x1]
      %v2614 = vld [vmem:[#allocation2 + $0x19a] sm:$0x1]
      %2615 = vst [vmem:[#allocation2] sm:$0x1] %v2597
      %2616 = vst [vmem:[#allocation2 + $0x18] sm:$0x1] %v2598
      %2617 = vst [vmem:[#allocation2 + $0x30] sm:$0x1] %v2599
      %2618 = vst [vmem:[#allocation2 + $0x48] sm:$0x1] %v2600
      %2619 = vst [vmem:[#allocation2 + $0x60] sm:$0x1] %v2601
      %2620 = vst [vmem:[#allocation2 + $0x78] sm:$0x1] %v2602
      %2621 = vst [vmem:[#allocation2 + $0x90] sm:$0x1] %v2603
      %2622 = vst [vmem:[#allocation2 + $0xa8] sm:$0x1] %v2604
      %2623 = vst [vmem:[#allocation2 + $0xc0] sm:$0x1] %v2605
      %2624 = vst [vmem:[#allocation2 + $0xd8] sm:$0x1] %v2606
      %2625 = vst [vmem:[#allocation2 + $0xf0] sm:$0x1] %v2607
      %2626 = vst [vmem:[#allocation2 + $0x108] sm:$0x1] %v2608
      %2627 = vst [vmem:[#allocation2 + $0x120] sm:$0x1] %v2609
      %2628 = vst [vmem:[#allocation2 + $0x138] sm:$0x1] %v2610
      %2629 = vst [vmem:[#allocation2 + $0x150] sm:$0x1] %v2611
      %2630 = vst [vmem:[#allocation2 + $0x168] sm:$0x1] %v2612
      %2631 = vst [vmem:[#allocation2 + $0x180] sm:$0x1] %v2613
      %2632 = vst [vmem:[#allocation2 + $0x198] sm:$0x1] %v2614
      %v2633 = vld [vmem:[#allocation2 + $0xf] sm:$0x1]
      %v2634 = vld [vmem:[#allocation2 + $0x27] sm:$0x1]
      %v2635 = vld [vmem:[#allocation2 + $0x3f] sm:$0x1]
      %v2636 = vld [vmem:[#allocation2 + $0x57] sm:$0x1]
      %v2637 = vld [vmem:[#allocation2 + $0x6f] sm:$0x1]
      %v2638 = vld [vmem:[#allocation2 + $0x87] sm:$0x1]
      %v2639 = vld [vmem:[#allocation2 + $0x9f] sm:$0x1]
      %v2640 = vld [vmem:[#allocation2 + $0xb7] sm:$0x1]
      %v2641 = vld [vmem:[#allocation2 + $0xcf] sm:$0x1]
      %v2642 = vld [vmem:[#allocation2 + $0xe7] sm:$0x1]
      %v2643 = vld [vmem:[#allocation2 + $0xff] sm:$0x1]
      %v2644 = vld [vmem:[#allocation2 + $0x117] sm:$0x1]
      %v2645 = vld [vmem:[#allocation2 + $0x12f] sm:$0x1]
      %v2646 = vld [vmem:[#allocation2 + $0x147] sm:$0x1]
      %v2647 = vld [vmem:[#allocation2 + $0x15f] sm:$0x1]
      %v2648 = vld [vmem:[#allocation2 + $0x177] sm:$0x1]
      %v2649 = vld [vmem:[#allocation2 + $0x18f] sm:$0x1]
      %v2650 = vld [vmem:[#allocation2 + $0x1a7] sm:$0x1]
      %2651 = vst [vmem:[#allocation2 + $0x11] sm:$0x1] %v2633
      %2652 = vst [vmem:[#allocation2 + $0x29] sm:$0x1] %v2634
      %2653 = vst [vmem:[#allocation2 + $0x41] sm:$0x1] %v2635
      %2654 = vst [vmem:[#allocation2 + $0x59] sm:$0x1] %v2636
      %2655 = vst [vmem:[#allocation2 + $0x71] sm:$0x1] %v2637
      %2656 = vst [vmem:[#allocation2 + $0x89] sm:$0x1] %v2638
      %2657 = vst [vmem:[#allocation2 + $0xa1] sm:$0x1] %v2639
      %2658 = vst [vmem:[#allocation2 + $0xb9] sm:$0x1] %v2640
      %2659 = vst [vmem:[#allocation2 + $0xd1] sm:$0x1] %v2641
      %2660 = vst [vmem:[#allocation2 + $0xe9] sm:$0x1] %v2642
      %2661 = vst [vmem:[#allocation2 + $0x101] sm:$0x1] %v2643
      %2662 = vst [vmem:[#allocation2 + $0x119] sm:$0x1] %v2644
      %2663 = vst [vmem:[#allocation2 + $0x131] sm:$0x1] %v2645
      %2664 = vst [vmem:[#allocation2 + $0x149] sm:$0x1] %v2646
      %2665 = vst [vmem:[#allocation2 + $0x161] sm:$0x1] %v2647
      %2666 = vst [vmem:[#allocation2 + $0x179] sm:$0x1] %v2648
      %2667 = vst [vmem:[#allocation2 + $0x191] sm:$0x1] %v2649
      %2668 = vst [vmem:[#allocation2 + $0x1a9] sm:$0x1] %v2650
      %v2669 = vld [vmem:[#allocation2] sm:$0xff]
      %v2670 = vld [vmem:[#allocation2 + $0x8] sm:$0xff]
      %v2671 = vld [vmem:[#allocation2 + $0x18] sm:$0xff]
      %v2672 = vld [vmem:[#allocation2 + $0x20] sm:$0xff]
      %v2673 = vld [vmem:[#allocation2 + $0x30] sm:$0xff]
      %v2674 = vld [vmem:[#allocation2 + $0x38] sm:$0xff]
      %v2675 = vld [vmem:[#allocation2 + $0x48] sm:$0xff]
      %v2676 = vld [vmem:[#allocation2 + $0x50] sm:$0xff]
      %v2677 = vld [vmem:[#allocation2 + $0x60] sm:$0xff]
      %v2678 = vld [vmem:[#allocation2 + $0x68] sm:$0xff]
      %v2679 = vld [vmem:[#allocation2 + $0x78] sm:$0xff]
      %v2680 = vld [vmem:[#allocation2 + $0x80] sm:$0xff]
      %v2681 = vld [vmem:[#allocation2 + $0x90] sm:$0xff]
      %v2682 = vld [vmem:[#allocation2 + $0x98] sm:$0xff]
      %v2683 = vld [vmem:[#allocation2 + $0xa8] sm:$0xff]
      %v2684 = vld [vmem:[#allocation2 + $0xb0] sm:$0xff]
      %v2685 = vld [vmem:[#allocation2 + $0xc0] sm:$0xff]
      %v2686 = vld [vmem:[#allocation2 + $0xc8] sm:$0xff]
      %v2687 = vld [vmem:[#allocation2 + $0xd8] sm:$0xff]
      %v2688 = vld [vmem:[#allocation2 + $0xe0] sm:$0xff]
      %v2689 = vld [vmem:[#allocation2 + $0xf0] sm:$0xff]
      %v2690 = vld [vmem:[#allocation2 + $0xf8] sm:$0xff]
      %v2691 = vld [vmem:[#allocation2 + $0x108] sm:$0xff]
      %v2692 = vld [vmem:[#allocation2 + $0x110] sm:$0xff]
      %v2693 = vld [vmem:[#allocation2 + $0x120] sm:$0xff]
      %v2694 = vld [vmem:[#allocation2 + $0x128] sm:$0xff]
      %v2695 = vld [vmem:[#allocation2 + $0x138] sm:$0xff]
      %v2696 = vld [vmem:[#allocation2 + $0x140] sm:$0xff]
      %v2697 = vld [vmem:[#allocation2 + $0x150] sm:$0xff]
      %v2698 = vld [vmem:[#allocation2 + $0x158] sm:$0xff]
      %v2699 = vld [vmem:[#allocation2 + $0x168] sm:$0xff]
      %v2700 = vld [vmem:[#allocation2 + $0x170] sm:$0xff]
      %2701 = vst [vmem:[#allocation3] sm:$0xff] %v2669
      %2702 = vst [vmem:[#allocation3 + $0x48] sm:$0xff] %v2670
      %2703 = vst [vmem:[#allocation3 + $0x90] sm:$0xff] %v2671
      %2704 = vst [vmem:[#allocation3 + $0xd8] sm:$0xff] %v2672
      %2705 = vst [vmem:[#allocation3 + $0x120] sm:$0xff] %v2673
      %2706 = vst [vmem:[#allocation3 + $0x168] sm:$0xff] %v2674
      %2707 = vst [vmem:[#allocation3 + $0x1b0] sm:$0xff] %v2675
      %2708 = vst [vmem:[#allocation3 + $0x1f8] sm:$0xff] %v2676
      %2709 = vst [vmem:[#allocation3 + $0x240] sm:$0xff] %v2677
      %2710 = vst [vmem:[#allocation3 + $0x288] sm:$0xff] %v2678
      %2711 = vst [vmem:[#allocation3 + $0x2d0] sm:$0xff] %v2679
      %2712 = vst [vmem:[#allocation3 + $0x318] sm:$0xff] %v2680
      %2713 = vst [vmem:[#allocation3 + $0x360] sm:$0xff] %v2681
      %2714 = vst [vmem:[#allocation3 + $0x3a8] sm:$0xff] %v2682
      %2715 = vst [vmem:[#allocation3 + $0x3f0] sm:$0xff] %v2683
      %2716 = vst [vmem:[#allocation3 + $0x438] sm:$0xff] %v2684
      %2717 = vst [vmem:[#allocation3 + $0x480] sm:$0xff] %v2685
      %2718 = vst [vmem:[#allocation3 + $0x4c8] sm:$0xff] %v2686
      %2719 = vst [vmem:[#allocation3 + $0x510] sm:$0xff] %v2687
      %2720 = vst [vmem:[#allocation3 + $0x558] sm:$0xff] %v2688
      %2721 = vst [vmem:[#allocation3 + $0x5a0] sm:$0xff] %v2689
      %2722 = vst [vmem:[#allocation3 + $0x5e8] sm:$0xff] %v2690
      %2723 = vst [vmem:[#allocation3 + $0x630] sm:$0xff] %v2691
      %2724 = vst [vmem:[#allocation3 + $0x678] sm:$0xff] %v2692
      %2725 = vst [vmem:[#allocation3 + $0x6c0] sm:$0xff] %v2693
      %2726 = vst [vmem:[#allocation3 + $0x708] sm:$0xff] %v2694
      %2727 = vst [vmem:[#allocation3 + $0x750] sm:$0xff] %v2695
      %2728 = vst [vmem:[#allocation3 + $0x798] sm:$0xff] %v2696
      %2729 = vst [vmem:[#allocation3 + $0x7e0] sm:$0xff] %v2697
      %2730 = vst [vmem:[#allocation3 + $0x828] sm:$0xff] %v2698
      %2731 = vst [vmem:[#allocation3 + $0x870] sm:$0xff] %v2699
      %2732 = vst [vmem:[#allocation3 + $0x8b8] sm:$0xff] %v2700
      %v2733 = vld [vmem:[#allocation2 + $0x1] sm:$0xff]
      %v2734 = vld [vmem:[#allocation2 + $0x9] sm:$0xff]
      %v2735 = vld [vmem:[#allocation2 + $0x19] sm:$0xff]
      %v2736 = vld [vmem:[#allocation2 + $0x21] sm:$0xff]
      %v2737 = vld [vmem:[#allocation2 + $0x31] sm:$0xff]
      %v2738 = vld [vmem:[#allocation2 + $0x39] sm:$0xff]
      %v2739 = vld [vmem:[#allocation2 + $0x49] sm:$0xff]
      %v2740 = vld [vmem:[#allocation2 + $0x51] sm:$0xff]
      %v2741 = vld [vmem:[#allocation2 + $0x61] sm:$0xff]
      %v2742 = vld [vmem:[#allocation2 + $0x69] sm:$0xff]
      %v2743 = vld [vmem:[#allocation2 + $0x79] sm:$0xff]
      %v2744 = vld [vmem:[#allocation2 + $0x81] sm:$0xff]
      %v2745 = vld [vmem:[#allocation2 + $0x91] sm:$0xff]
      %v2746 = vld [vmem:[#allocation2 + $0x99] sm:$0xff]
      %v2747 = vld [vmem:[#allocation2 + $0xa9] sm:$0xff]
      %v2748 = vld [vmem:[#allocation2 + $0xb1] sm:$0xff]
      %v2749 = vld [vmem:[#allocation2 + $0xc1] sm:$0xff]
      %v2750 = vld [vmem:[#allocation2 + $0xc9] sm:$0xff]
      %v2751 = vld [vmem:[#allocation2 + $0xd9] sm:$0xff]
      %v2752 = vld [vmem:[#allocation2 + $0xe1] sm:$0xff]
      %v2753 = vld [vmem:[#allocation2 + $0xf1] sm:$0xff]
      %v2754 = vld [vmem:[#allocation2 + $0xf9] sm:$0xff]
      %v2755 = vld [vmem:[#allocation2 + $0x109] sm:$0xff]
      %v2756 = vld [vmem:[#allocation2 + $0x111] sm:$0xff]
      %v2757 = vld [vmem:[#allocation2 + $0x121] sm:$0xff]
      %v2758 = vld [vmem:[#allocation2 + $0x129] sm:$0xff]
      %v2759 = vld [vmem:[#allocation2 + $0x139] sm:$0xff]
      %v2760 = vld [vmem:[#allocation2 + $0x141] sm:$0xff]
      %v2761 = vld [vmem:[#allocation2 + $0x151] sm:$0xff]
      %v2762 = vld [vmem:[#allocation2 + $0x159] sm:$0xff]
      %v2763 = vld [vmem:[#allocation2 + $0x169] sm:$0xff]
      %v2764 = vld [vmem:[#allocation2 + $0x171] sm:$0xff]
      %2765 = vst [vmem:[#allocation3 + $0x8] sm:$0xff] %v2733
      %2766 = vst [vmem:[#allocation3 + $0x50] sm:$0xff] %v2734
      %2767 = vst [vmem:[#allocation3 + $0x98] sm:$0xff] %v2735
      %2768 = vst [vmem:[#allocation3 + $0xe0] sm:$0xff] %v2736
      %2769 = vst [vmem:[#allocation3 + $0x128] sm:$0xff] %v2737
      %2770 = vst [vmem:[#allocation3 + $0x170] sm:$0xff] %v2738
      %2771 = vst [vmem:[#allocation3 + $0x1b8] sm:$0xff] %v2739
      %2772 = vst [vmem:[#allocation3 + $0x200] sm:$0xff] %v2740
      %2773 = vst [vmem:[#allocation3 + $0x248] sm:$0xff] %v2741
      %2774 = vst [vmem:[#allocation3 + $0x290] sm:$0xff] %v2742
      %2775 = vst [vmem:[#allocation3 + $0x2d8] sm:$0xff] %v2743
      %2776 = vst [vmem:[#allocation3 + $0x320] sm:$0xff] %v2744
      %2777 = vst [vmem:[#allocation3 + $0x368] sm:$0xff] %v2745
      %2778 = vst [vmem:[#allocation3 + $0x3b0] sm:$0xff] %v2746
      %2779 = vst [vmem:[#allocation3 + $0x3f8] sm:$0xff] %v2747
      %2780 = vst [vmem:[#allocation3 + $0x440] sm:$0xff] %v2748
      %2781 = vst [vmem:[#allocation3 + $0x488] sm:$0xff] %v2749
      %2782 = vst [vmem:[#allocation3 + $0x4d0] sm:$0xff] %v2750
      %2783 = vst [vmem:[#allocation3 + $0x518] sm:$0xff] %v2751
      %2784 = vst [vmem:[#allocation3 + $0x560] sm:$0xff] %v2752
      %2785 = vst [vmem:[#allocation3 + $0x5a8] sm:$0xff] %v2753
      %2786 = vst [vmem:[#allocation3 + $0x5f0] sm:$0xff] %v2754
      %2787 = vst [vmem:[#allocation3 + $0x638] sm:$0xff] %v2755
      %2788 = vst [vmem:[#allocation3 + $0x680] sm:$0xff] %v2756
      %2789 = vst [vmem:[#allocation3 + $0x6c8] sm:$0xff] %v2757
      %2790 = vst [vmem:[#allocation3 + $0x710] sm:$0xff] %v2758
      %2791 = vst [vmem:[#allocation3 + $0x758] sm:$0xff] %v2759
      %2792 = vst [vmem:[#allocation3 + $0x7a0] sm:$0xff] %v2760
      %2793 = vst [vmem:[#allocation3 + $0x7e8] sm:$0xff] %v2761
      %2794 = vst [vmem:[#allocation3 + $0x830] sm:$0xff] %v2762
      %2795 = vst [vmem:[#allocation3 + $0x878] sm:$0xff] %v2763
      %2796 = vst [vmem:[#allocation3 + $0x8c0] sm:$0xff] %v2764
      %v2797 = vld [vmem:[#allocation2 + $0x2] sm:$0xff]
      %v2798 = vld [vmem:[#allocation2 + $0xa] sm:$0xff]
      %v2799 = vld [vmem:[#allocation2 + $0x1a] sm:$0xff]
      %v2800 = vld [vmem:[#allocation2 + $0x22] sm:$0xff]
      %v2801 = vld [vmem:[#allocation2 + $0x32] sm:$0xff]
      %v2802 = vld [vmem:[#allocation2 + $0x3a] sm:$0xff]
      %v2803 = vld [vmem:[#allocation2 + $0x4a] sm:$0xff]
      %v2804 = vld [vmem:[#allocation2 + $0x52] sm:$0xff]
      %v2805 = vld [vmem:[#allocation2 + $0x62] sm:$0xff]
      %v2806 = vld [vmem:[#allocation2 + $0x6a] sm:$0xff]
      %v2807 = vld [vmem:[#allocation2 + $0x7a] sm:$0xff]
      %v2808 = vld [vmem:[#allocation2 + $0x82] sm:$0xff]
      %v2809 = vld [vmem:[#allocation2 + $0x92] sm:$0xff]
      %v2810 = vld [vmem:[#allocation2 + $0x9a] sm:$0xff]
      %v2811 = vld [vmem:[#allocation2 + $0xaa] sm:$0xff]
      %v2812 = vld [vmem:[#allocation2 + $0xb2] sm:$0xff]
      %v2813 = vld [vmem:[#allocation2 + $0xc2] sm:$0xff]
      %v2814 = vld [vmem:[#allocation2 + $0xca] sm:$0xff]
      %v2815 = vld [vmem:[#allocation2 + $0xda] sm:$0xff]
      %v2816 = vld [vmem:[#allocation2 + $0xe2] sm:$0xff]
      %v2817 = vld [vmem:[#allocation2 + $0xf2] sm:$0xff]
      %v2818 = vld [vmem:[#allocation2 + $0xfa] sm:$0xff]
      %v2819 = vld [vmem:[#allocation2 + $0x10a] sm:$0xff]
      %v2820 = vld [vmem:[#allocation2 + $0x112] sm:$0xff]
      %v2821 = vld [vmem:[#allocation2 + $0x122] sm:$0xff]
      %v2822 = vld [vmem:[#allocation2 + $0x12a] sm:$0xff]
      %v2823 = vld [vmem:[#allocation2 + $0x13a] sm:$0xff]
      %v2824 = vld [vmem:[#allocation2 + $0x142] sm:$0xff]
      %v2825 = vld [vmem:[#allocation2 + $0x152] sm:$0xff]
      %v2826 = vld [vmem:[#allocation2 + $0x15a] sm:$0xff]
      %v2827 = vld [vmem:[#allocation2 + $0x16a] sm:$0xff]
      %v2828 = vld [vmem:[#allocation2 + $0x172] sm:$0xff]
      %2829 = vst [vmem:[#allocation3 + $0x10] sm:$0xff] %v2797
      %2830 = vst [vmem:[#allocation3 + $0x58] sm:$0xff] %v2798
      %2831 = vst [vmem:[#allocation3 + $0xa0] sm:$0xff] %v2799
      %2832 = vst [vmem:[#allocation3 + $0xe8] sm:$0xff] %v2800
      %2833 = vst [vmem:[#allocation3 + $0x130] sm:$0xff] %v2801
      %2834 = vst [vmem:[#allocation3 + $0x178] sm:$0xff] %v2802
      %2835 = vst [vmem:[#allocation3 + $0x1c0] sm:$0xff] %v2803
      %2836 = vst [vmem:[#allocation3 + $0x208] sm:$0xff] %v2804
      %2837 = vst [vmem:[#allocation3 + $0x250] sm:$0xff] %v2805
      %2838 = vst [vmem:[#allocation3 + $0x298] sm:$0xff] %v2806
      %2839 = vst [vmem:[#allocation3 + $0x2e0] sm:$0xff] %v2807
      %2840 = vst [vmem:[#allocation3 + $0x328] sm:$0xff] %v2808
      %2841 = vst [vmem:[#allocation3 + $0x370] sm:$0xff] %v2809
      %2842 = vst [vmem:[#allocation3 + $0x3b8] sm:$0xff] %v2810
      %2843 = vst [vmem:[#allocation3 + $0x400] sm:$0xff] %v2811
      %2844 = vst [vmem:[#allocation3 + $0x448] sm:$0xff] %v2812
      %2845 = vst [vmem:[#allocation3 + $0x490] sm:$0xff] %v2813
      %2846 = vst [vmem:[#allocation3 + $0x4d8] sm:$0xff] %v2814
      %2847 = vst [vmem:[#allocation3 + $0x520] sm:$0xff] %v2815
      %2848 = vst [vmem:[#allocation3 + $0x568] sm:$0xff] %v2816
      %2849 = vst [vmem:[#allocation3 + $0x5b0] sm:$0xff] %v2817
      %2850 = vst [vmem:[#allocation3 + $0x5f8] sm:$0xff] %v2818
      %2851 = vst [vmem:[#allocation3 + $0x640] sm:$0xff] %v2819
      %2852 = vst [vmem:[#allocation3 + $0x688] sm:$0xff] %v2820
      %2853 = vst [vmem:[#allocation3 + $0x6d0] sm:$0xff] %v2821
      %2854 = vst [vmem:[#allocation3 + $0x718] sm:$0xff] %v2822
      %2855 = vst [vmem:[#allocation3 + $0x760] sm:$0xff] %v2823
      %2856 = vst [vmem:[#allocation3 + $0x7a8] sm:$0xff] %v2824
      %2857 = vst [vmem:[#allocation3 + $0x7f0] sm:$0xff] %v2825
      %2858 = vst [vmem:[#allocation3 + $0x838] sm:$0xff] %v2826
      %2859 = vst [vmem:[#allocation3 + $0x880] sm:$0xff] %v2827
      %2860 = vst [vmem:[#allocation3 + $0x8c8] sm:$0xff] %v2828
      %v2861 = vld [vmem:[%s203] sm:$0xff]
      %v2862 = vld [vmem:[%s203 + $0x8] sm:$0xff]
      %v2863 = vld [vmem:[%s203 + $0x18] sm:$0xff]
      %v2864 = vld [vmem:[%s203 + $0x20] sm:$0xff]
      %v2865 = vld [vmem:[%s203 + $0x30] sm:$0xff]
      %v2866 = vld [vmem:[%s203 + $0x38] sm:$0xff]
      %v2867 = vld [vmem:[%s203 + $0x48] sm:$0xff]
      %v2868 = vld [vmem:[%s203 + $0x50] sm:$0xff]
      %v2869 = vld [vmem:[%s203 + $0x60] sm:$0xff]
      %v2870 = vld [vmem:[%s203 + $0x68] sm:$0xff]
      %v2871 = vld [vmem:[%s203 + $0x78] sm:$0xff]
      %v2872 = vld [vmem:[%s203 + $0x80] sm:$0xff]
      %v2873 = vld [vmem:[%s203 + $0x90] sm:$0xff]
      %v2874 = vld [vmem:[%s203 + $0x98] sm:$0xff]
      %v2875 = vld [vmem:[%s203 + $0xa8] sm:$0xff]
      %v2876 = vld [vmem:[%s203 + $0xb0] sm:$0xff]
      %v2877 = vld [vmem:[%s203 + $0xc0] sm:$0xff]
      %v2878 = vld [vmem:[%s203 + $0xc8] sm:$0xff]
      %v2879 = vld [vmem:[%s203 + $0xd8] sm:$0xff]
      %v2880 = vld [vmem:[%s203 + $0xe0] sm:$0xff]
      %v2881 = vld [vmem:[%s203 + $0xf0] sm:$0xff]
      %v2882 = vld [vmem:[%s203 + $0xf8] sm:$0xff]
      %v2883 = vld [vmem:[%s203 + $0x108] sm:$0xff]
      %v2884 = vld [vmem:[%s203 + $0x110] sm:$0xff]
      %v2885 = vld [vmem:[%s203 + $0x120] sm:$0xff]
      %v2886 = vld [vmem:[%s203 + $0x128] sm:$0xff]
      %v2887 = vld [vmem:[%s203 + $0x138] sm:$0xff]
      %v2888 = vld [vmem:[%s203 + $0x140] sm:$0xff]
      %v2889 = vld [vmem:[%s203 + $0x150] sm:$0xff]
      %v2890 = vld [vmem:[%s203 + $0x158] sm:$0xff]
      %v2891 = vld [vmem:[%s203 + $0x168] sm:$0xff]
      %v2892 = vld [vmem:[%s203 + $0x170] sm:$0xff]
      %2893 = vst [vmem:[#allocation3 + $0x18] sm:$0xff] %v2861
      %2894 = vst [vmem:[#allocation3 + $0x60] sm:$0xff] %v2862
      %2895 = vst [vmem:[#allocation3 + $0xa8] sm:$0xff] %v2863
      %2896 = vst [vmem:[#allocation3 + $0xf0] sm:$0xff] %v2864
      %2897 = vst [vmem:[#allocation3 + $0x138] sm:$0xff] %v2865
      %2898 = vst [vmem:[#allocation3 + $0x180] sm:$0xff] %v2866
      %2899 = vst [vmem:[#allocation3 + $0x1c8] sm:$0xff] %v2867
      %2900 = vst [vmem:[#allocation3 + $0x210] sm:$0xff] %v2868
      %2901 = vst [vmem:[#allocation3 + $0x258] sm:$0xff] %v2869
      %2902 = vst [vmem:[#allocation3 + $0x2a0] sm:$0xff] %v2870
      %2903 = vst [vmem:[#allocation3 + $0x2e8] sm:$0xff] %v2871
      %2904 = vst [vmem:[#allocation3 + $0x330] sm:$0xff] %v2872
      %2905 = vst [vmem:[#allocation3 + $0x378] sm:$0xff] %v2873
      %2906 = vst [vmem:[#allocation3 + $0x3c0] sm:$0xff] %v2874
      %2907 = vst [vmem:[#allocation3 + $0x408] sm:$0xff] %v2875
      %2908 = vst [vmem:[#allocation3 + $0x450] sm:$0xff] %v2876
      %2909 = vst [vmem:[#allocation3 + $0x498] sm:$0xff] %v2877
      %2910 = vst [vmem:[#allocation3 + $0x4e0] sm:$0xff] %v2878
      %2911 = vst [vmem:[#allocation3 + $0x528] sm:$0xff] %v2879
      %2912 = vst [vmem:[#allocation3 + $0x570] sm:$0xff] %v2880
      %2913 = vst [vmem:[#allocation3 + $0x5b8] sm:$0xff] %v2881
      %2914 = vst [vmem:[#allocation3 + $0x600] sm:$0xff] %v2882
      %2915 = vst [vmem:[#allocation3 + $0x648] sm:$0xff] %v2883
      %2916 = vst [vmem:[#allocation3 + $0x690] sm:$0xff] %v2884
      %2917 = vst [vmem:[#allocation3 + $0x6d8] sm:$0xff] %v2885
      %2918 = vst [vmem:[#allocation3 + $0x720] sm:$0xff] %v2886
      %2919 = vst [vmem:[#allocation3 + $0x768] sm:$0xff] %v2887
      %2920 = vst [vmem:[#allocation3 + $0x7b0] sm:$0xff] %v2888
      %2921 = vst [vmem:[#allocation3 + $0x7f8] sm:$0xff] %v2889
      %2922 = vst [vmem:[#allocation3 + $0x840] sm:$0xff] %v2890
      %2923 = vst [vmem:[#allocation3 + $0x888] sm:$0xff] %v2891
      %2924 = vst [vmem:[#allocation3 + $0x8d0] sm:$0xff] %v2892
      %v2925 = vld [vmem:[%s203 + $0x1] sm:$0xff]
      %v2926 = vld [vmem:[%s203 + $0x9] sm:$0xff]
      %v2927 = vld [vmem:[%s203 + $0x19] sm:$0xff]
      %v2928 = vld [vmem:[%s203 + $0x21] sm:$0xff]
      %v2929 = vld [vmem:[%s203 + $0x31] sm:$0xff]
      %v2930 = vld [vmem:[%s203 + $0x39] sm:$0xff]
      %v2931 = vld [vmem:[%s203 + $0x49] sm:$0xff]
      %v2932 = vld [vmem:[%s203 + $0x51] sm:$0xff]
      %v2933 = vld [vmem:[%s203 + $0x61] sm:$0xff]
      %v2934 = vld [vmem:[%s203 + $0x69] sm:$0xff]
      %v2935 = vld [vmem:[%s203 + $0x79] sm:$0xff]
      %v2936 = vld [vmem:[%s203 + $0x81] sm:$0xff]
      %v2937 = vld [vmem:[%s203 + $0x91] sm:$0xff]
      %v2938 = vld [vmem:[%s203 + $0x99] sm:$0xff]
      %v2939 = vld [vmem:[%s203 + $0xa9] sm:$0xff]
      %v2940 = vld [vmem:[%s203 + $0xb1] sm:$0xff]
      %v2941 = vld [vmem:[%s203 + $0xc1] sm:$0xff]
      %v2942 = vld [vmem:[%s203 + $0xc9] sm:$0xff]
      %v2943 = vld [vmem:[%s203 + $0xd9] sm:$0xff]
      %v2944 = vld [vmem:[%s203 + $0xe1] sm:$0xff]
      %v2945 = vld [vmem:[%s203 + $0xf1] sm:$0xff]
      %v2946 = vld [vmem:[%s203 + $0xf9] sm:$0xff]
      %v2947 = vld [vmem:[%s203 + $0x109] sm:$0xff]
      %v2948 = vld [vmem:[%s203 + $0x111] sm:$0xff]
      %v2949 = vld [vmem:[%s203 + $0x121] sm:$0xff]
      %v2950 = vld [vmem:[%s203 + $0x129] sm:$0xff]
      %v2951 = vld [vmem:[%s203 + $0x139] sm:$0xff]
      %v2952 = vld [vmem:[%s203 + $0x141] sm:$0xff]
      %v2953 = vld [vmem:[%s203 + $0x151] sm:$0xff]
      %v2954 = vld [vmem:[%s203 + $0x159] sm:$0xff]
      %v2955 = vld [vmem:[%s203 + $0x169] sm:$0xff]
      %v2956 = vld [vmem:[%s203 + $0x171] sm:$0xff]
      %2957 = vst [vmem:[#allocation3 + $0x20] sm:$0xff] %v2925
      %2958 = vst [vmem:[#allocation3 + $0x68] sm:$0xff] %v2926
      %2959 = vst [vmem:[#allocation3 + $0xb0] sm:$0xff] %v2927
      %2960 = vst [vmem:[#allocation3 + $0xf8] sm:$0xff] %v2928
      %2961 = vst [vmem:[#allocation3 + $0x140] sm:$0xff] %v2929
      %2962 = vst [vmem:[#allocation3 + $0x188] sm:$0xff] %v2930
      %2963 = vst [vmem:[#allocation3 + $0x1d0] sm:$0xff] %v2931
      %2964 = vst [vmem:[#allocation3 + $0x218] sm:$0xff] %v2932
      %2965 = vst [vmem:[#allocation3 + $0x260] sm:$0xff] %v2933
      %2966 = vst [vmem:[#allocation3 + $0x2a8] sm:$0xff] %v2934
      %2967 = vst [vmem:[#allocation3 + $0x2f0] sm:$0xff] %v2935
      %2968 = vst [vmem:[#allocation3 + $0x338] sm:$0xff] %v2936
      %2969 = vst [vmem:[#allocation3 + $0x380] sm:$0xff] %v2937
      %2970 = vst [vmem:[#allocation3 + $0x3c8] sm:$0xff] %v2938
      %2971 = vst [vmem:[#allocation3 + $0x410] sm:$0xff] %v2939
      %2972 = vst [vmem:[#allocation3 + $0x458] sm:$0xff] %v2940
      %2973 = vst [vmem:[#allocation3 + $0x4a0] sm:$0xff] %v2941
      %2974 = vst [vmem:[#allocation3 + $0x4e8] sm:$0xff] %v2942
      %2975 = vst [vmem:[#allocation3 + $0x530] sm:$0xff] %v2943
      %2976 = vst [vmem:[#allocation3 + $0x578] sm:$0xff] %v2944
      %2977 = vst [vmem:[#allocation3 + $0x5c0] sm:$0xff] %v2945
      %2978 = vst [vmem:[#allocation3 + $0x608] sm:$0xff] %v2946
      %2979 = vst [vmem:[#allocation3 + $0x650] sm:$0xff] %v2947
      %2980 = vst [vmem:[#allocation3 + $0x698] sm:$0xff] %v2948
      %2981 = vst [vmem:[#allocation3 + $0x6e0] sm:$0xff] %v2949
      %2982 = vst [vmem:[#allocation3 + $0x728] sm:$0xff] %v2950
      %2983 = vst [vmem:[#allocation3 + $0x770] sm:$0xff] %v2951
      %2984 = vst [vmem:[#allocation3 + $0x7b8] sm:$0xff] %v2952
      %2985 = vst [vmem:[#allocation3 + $0x800] sm:$0xff] %v2953
      %2986 = vst [vmem:[#allocation3 + $0x848] sm:$0xff] %v2954
      %2987 = vst [vmem:[#allocation3 + $0x890] sm:$0xff] %v2955
      %2988 = vst [vmem:[#allocation3 + $0x8d8] sm:$0xff] %v2956
      %v2989 = vld [vmem:[%s203 + $0x2] sm:$0xff]
      %v2990 = vld [vmem:[%s203 + $0xa] sm:$0xff]
      %v2991 = vld [vmem:[%s203 + $0x1a] sm:$0xff]
      %v2992 = vld [vmem:[%s203 + $0x22] sm:$0xff]
      %v2993 = vld [vmem:[%s203 + $0x32] sm:$0xff]
      %v2994 = vld [vmem:[%s203 + $0x3a] sm:$0xff]
      %v2995 = vld [vmem:[%s203 + $0x4a] sm:$0xff]
      %v2996 = vld [vmem:[%s203 + $0x52] sm:$0xff]
      %v2997 = vld [vmem:[%s203 + $0x62] sm:$0xff]
      %v2998 = vld [vmem:[%s203 + $0x6a] sm:$0xff]
      %v2999 = vld [vmem:[%s203 + $0x7a] sm:$0xff]
      %v3000 = vld [vmem:[%s203 + $0x82] sm:$0xff]
      %v3001 = vld [vmem:[%s203 + $0x92] sm:$0xff]
      %v3002 = vld [vmem:[%s203 + $0x9a] sm:$0xff]
      %v3003 = vld [vmem:[%s203 + $0xaa] sm:$0xff]
      %v3004 = vld [vmem:[%s203 + $0xb2] sm:$0xff]
      %v3005 = vld [vmem:[%s203 + $0xc2] sm:$0xff]
      %v3006 = vld [vmem:[%s203 + $0xca] sm:$0xff]
      %v3007 = vld [vmem:[%s203 + $0xda] sm:$0xff]
      %v3008 = vld [vmem:[%s203 + $0xe2] sm:$0xff]
      %v3009 = vld [vmem:[%s203 + $0xf2] sm:$0xff]
      %v3010 = vld [vmem:[%s203 + $0xfa] sm:$0xff]
      %v3011 = vld [vmem:[%s203 + $0x10a] sm:$0xff]
      %v3012 = vld [vmem:[%s203 + $0x112] sm:$0xff]
      %v3013 = vld [vmem:[%s203 + $0x122] sm:$0xff]
      %v3014 = vld [vmem:[%s203 + $0x12a] sm:$0xff]
      %v3015 = vld [vmem:[%s203 + $0x13a] sm:$0xff]
      %v3016 = vld [vmem:[%s203 + $0x142] sm:$0xff]
      %v3017 = vld [vmem:[%s203 + $0x152] sm:$0xff]
      %v3018 = vld [vmem:[%s203 + $0x15a] sm:$0xff]
      %v3019 = vld [vmem:[%s203 + $0x16a] sm:$0xff]
      %v3020 = vld [vmem:[%s203 + $0x172] sm:$0xff]
      %3021 = vst [vmem:[#allocation3 + $0x28] sm:$0xff] %v2989
      %3022 = vst [vmem:[#allocation3 + $0x70] sm:$0xff] %v2990
      %3023 = vst [vmem:[#allocation3 + $0xb8] sm:$0xff] %v2991
      %3024 = vst [vmem:[#allocation3 + $0x100] sm:$0xff] %v2992
      %3025 = vst [vmem:[#allocation3 + $0x148] sm:$0xff] %v2993
      %3026 = vst [vmem:[#allocation3 + $0x190] sm:$0xff] %v2994
      %3027 = vst [vmem:[#allocation3 + $0x1d8] sm:$0xff] %v2995
      %3028 = vst [vmem:[#allocation3 + $0x220] sm:$0xff] %v2996
      %3029 = vst [vmem:[#allocation3 + $0x268] sm:$0xff] %v2997
      %3030 = vst [vmem:[#allocation3 + $0x2b0] sm:$0xff] %v2998
      %3031 = vst [vmem:[#allocation3 + $0x2f8] sm:$0xff] %v2999
      %3032 = vst [vmem:[#allocation3 + $0x340] sm:$0xff] %v3000
      %3033 = vst [vmem:[#allocation3 + $0x388] sm:$0xff] %v3001
      %3034 = vst [vmem:[#allocation3 + $0x3d0] sm:$0xff] %v3002
      %3035 = vst [vmem:[#allocation3 + $0x418] sm:$0xff] %v3003
      %3036 = vst [vmem:[#allocation3 + $0x460] sm:$0xff] %v3004
      %3037 = vst [vmem:[#allocation3 + $0x4a8] sm:$0xff] %v3005
      %3038 = vst [vmem:[#allocation3 + $0x4f0] sm:$0xff] %v3006
      %3039 = vst [vmem:[#allocation3 + $0x538] sm:$0xff] %v3007
      %3040 = vst [vmem:[#allocation3 + $0x580] sm:$0xff] %v3008
      %3041 = vst [vmem:[#allocation3 + $0x5c8] sm:$0xff] %v3009
      %3042 = vst [vmem:[#allocation3 + $0x610] sm:$0xff] %v3010
      %3043 = vst [vmem:[#allocation3 + $0x658] sm:$0xff] %v3011
      %3044 = vst [vmem:[#allocation3 + $0x6a0] sm:$0xff] %v3012
      %3045 = vst [vmem:[#allocation3 + $0x6e8] sm:$0xff] %v3013
      %3046 = vst [vmem:[#allocation3 + $0x730] sm:$0xff] %v3014
      %3047 = vst [vmem:[#allocation3 + $0x778] sm:$0xff] %v3015
      %3048 = vst [vmem:[#allocation3 + $0x7c0] sm:$0xff] %v3016
      %3049 = vst [vmem:[#allocation3 + $0x808] sm:$0xff] %v3017
      %3050 = vst [vmem:[#allocation3 + $0x850] sm:$0xff] %v3018
      %3051 = vst [vmem:[#allocation3 + $0x898] sm:$0xff] %v3019
      %3052 = vst [vmem:[#allocation3 + $0x8e0] sm:$0xff] %v3020
      %v3053 = vld [vmem:[%s697] sm:$0xff]
      %v3054 = vld [vmem:[%s697 + $0x8] sm:$0xff]
      %v3055 = vld [vmem:[%s697 + $0x18] sm:$0xff]
      %v3056 = vld [vmem:[%s697 + $0x20] sm:$0xff]
      %v3057 = vld [vmem:[%s697 + $0x30] sm:$0xff]
      %v3058 = vld [vmem:[%s697 + $0x38] sm:$0xff]
      %v3059 = vld [vmem:[%s697 + $0x48] sm:$0xff]
      %v3060 = vld [vmem:[%s697 + $0x50] sm:$0xff]
      %v3061 = vld [vmem:[%s697 + $0x60] sm:$0xff]
      %v3062 = vld [vmem:[%s697 + $0x68] sm:$0xff]
      %v3063 = vld [vmem:[%s697 + $0x78] sm:$0xff]
      %v3064 = vld [vmem:[%s697 + $0x80] sm:$0xff]
      %v3065 = vld [vmem:[%s697 + $0x90] sm:$0xff]
      %v3066 = vld [vmem:[%s697 + $0x98] sm:$0xff]
      %v3067 = vld [vmem:[%s697 + $0xa8] sm:$0xff]
      %v3068 = vld [vmem:[%s697 + $0xb0] sm:$0xff]
      %v3069 = vld [vmem:[%s697 + $0xc0] sm:$0xff]
      %v3070 = vld [vmem:[%s697 + $0xc8] sm:$0xff]
      %v3071 = vld [vmem:[%s697 + $0xd8] sm:$0xff]
      %v3072 = vld [vmem:[%s697 + $0xe0] sm:$0xff]
      %v3073 = vld [vmem:[%s697 + $0xf0] sm:$0xff]
      %v3074 = vld [vmem:[%s697 + $0xf8] sm:$0xff]
      %v3075 = vld [vmem:[%s697 + $0x108] sm:$0xff]
      %v3076 = vld [vmem:[%s697 + $0x110] sm:$0xff]
      %v3077 = vld [vmem:[%s697 + $0x120] sm:$0xff]
      %v3078 = vld [vmem:[%s697 + $0x128] sm:$0xff]
      %v3079 = vld [vmem:[%s697 + $0x138] sm:$0xff]
      %v3080 = vld [vmem:[%s697 + $0x140] sm:$0xff]
      %v3081 = vld [vmem:[%s697 + $0x150] sm:$0xff]
      %v3082 = vld [vmem:[%s697 + $0x158] sm:$0xff]
      %v3083 = vld [vmem:[%s697 + $0x168] sm:$0xff]
      %v3084 = vld [vmem:[%s697 + $0x170] sm:$0xff]
      %3085 = vst [vmem:[#allocation3 + $0x30] sm:$0xff] %v3053
      %3086 = vst [vmem:[#allocation3 + $0x78] sm:$0xff] %v3054
      %3087 = vst [vmem:[#allocation3 + $0xc0] sm:$0xff] %v3055
      %3088 = vst [vmem:[#allocation3 + $0x108] sm:$0xff] %v3056
      %3089 = vst [vmem:[#allocation3 + $0x150] sm:$0xff] %v3057
      %3090 = vst [vmem:[#allocation3 + $0x198] sm:$0xff] %v3058
      %3091 = vst [vmem:[#allocation3 + $0x1e0] sm:$0xff] %v3059
      %3092 = vst [vmem:[#allocation3 + $0x228] sm:$0xff] %v3060
      %3093 = vst [vmem:[#allocation3 + $0x270] sm:$0xff] %v3061
      %3094 = vst [vmem:[#allocation3 + $0x2b8] sm:$0xff] %v3062
      %3095 = vst [vmem:[#allocation3 + $0x300] sm:$0xff] %v3063
      %3096 = vst [vmem:[#allocation3 + $0x348] sm:$0xff] %v3064
      %3097 = vst [vmem:[#allocation3 + $0x390] sm:$0xff] %v3065
      %3098 = vst [vmem:[#allocation3 + $0x3d8] sm:$0xff] %v3066
      %3099 = vst [vmem:[#allocation3 + $0x420] sm:$0xff] %v3067
      %3100 = vst [vmem:[#allocation3 + $0x468] sm:$0xff] %v3068
      %3101 = vst [vmem:[#allocation3 + $0x4b0] sm:$0xff] %v3069
      %3102 = vst [vmem:[#allocation3 + $0x4f8] sm:$0xff] %v3070
      %3103 = vst [vmem:[#allocation3 + $0x540] sm:$0xff] %v3071
      %3104 = vst [vmem:[#allocation3 + $0x588] sm:$0xff] %v3072
      %3105 = vst [vmem:[#allocation3 + $0x5d0] sm:$0xff] %v3073
      %3106 = vst [vmem:[#allocation3 + $0x618] sm:$0xff] %v3074
      %3107 = vst [vmem:[#allocation3 + $0x660] sm:$0xff] %v3075
      %3108 = vst [vmem:[#allocation3 + $0x6a8] sm:$0xff] %v3076
      %3109 = vst [vmem:[#allocation3 + $0x6f0] sm:$0xff] %v3077
      %3110 = vst [vmem:[#allocation3 + $0x738] sm:$0xff] %v3078
      %3111 = vst [vmem:[#allocation3 + $0x780] sm:$0xff] %v3079
      %3112 = vst [vmem:[#allocation3 + $0x7c8] sm:$0xff] %v3080
      %3113 = vst [vmem:[#allocation3 + $0x810] sm:$0xff] %v3081
      %3114 = vst [vmem:[#allocation3 + $0x858] sm:$0xff] %v3082
      %3115 = vst [vmem:[#allocation3 + $0x8a0] sm:$0xff] %v3083
      %3116 = vst [vmem:[#allocation3 + $0x8e8] sm:$0xff] %v3084
      %v3117 = vld [vmem:[%s697 + $0x1] sm:$0xff]
      %v3118 = vld [vmem:[%s697 + $0x9] sm:$0xff]
      %v3119 = vld [vmem:[%s697 + $0x19] sm:$0xff]
      %v3120 = vld [vmem:[%s697 + $0x21] sm:$0xff]
      %v3121 = vld [vmem:[%s697 + $0x31] sm:$0xff]
      %v3122 = vld [vmem:[%s697 + $0x39] sm:$0xff]
      %v3123 = vld [vmem:[%s697 + $0x49] sm:$0xff]
      %v3124 = vld [vmem:[%s697 + $0x51] sm:$0xff]
      %v3125 = vld [vmem:[%s697 + $0x61] sm:$0xff]
      %v3126 = vld [vmem:[%s697 + $0x69] sm:$0xff]
      %v3127 = vld [vmem:[%s697 + $0x79] sm:$0xff]
      %v3128 = vld [vmem:[%s697 + $0x81] sm:$0xff]
      %v3129 = vld [vmem:[%s697 + $0x91] sm:$0xff]
      %v3130 = vld [vmem:[%s697 + $0x99] sm:$0xff]
      %v3131 = vld [vmem:[%s697 + $0xa9] sm:$0xff]
      %v3132 = vld [vmem:[%s697 + $0xb1] sm:$0xff]
      %v3133 = vld [vmem:[%s697 + $0xc1] sm:$0xff]
      %v3134 = vld [vmem:[%s697 + $0xc9] sm:$0xff]
      %v3135 = vld [vmem:[%s697 + $0xd9] sm:$0xff]
      %v3136 = vld [vmem:[%s697 + $0xe1] sm:$0xff]
      %v3137 = vld [vmem:[%s697 + $0xf1] sm:$0xff]
      %v3138 = vld [vmem:[%s697 + $0xf9] sm:$0xff]
      %v3139 = vld [vmem:[%s697 + $0x109] sm:$0xff]
      %v3140 = vld [vmem:[%s697 + $0x111] sm:$0xff]
      %v3141 = vld [vmem:[%s697 + $0x121] sm:$0xff]
      %v3142 = vld [vmem:[%s697 + $0x129] sm:$0xff]
      %v3143 = vld [vmem:[%s697 + $0x139] sm:$0xff]
      %v3144 = vld [vmem:[%s697 + $0x141] sm:$0xff]
      %v3145 = vld [vmem:[%s697 + $0x151] sm:$0xff]
      %v3146 = vld [vmem:[%s697 + $0x159] sm:$0xff]
      %v3147 = vld [vmem:[%s697 + $0x169] sm:$0xff]
      %v3148 = vld [vmem:[%s697 + $0x171] sm:$0xff]
      %3149 = vst [vmem:[#allocation3 + $0x38] sm:$0xff] %v3117
      %3150 = vst [vmem:[#allocation3 + $0x80] sm:$0xff] %v3118
      %3151 = vst [vmem:[#allocation3 + $0xc8] sm:$0xff] %v3119
      %3152 = vst [vmem:[#allocation3 + $0x110] sm:$0xff] %v3120
      %3153 = vst [vmem:[#allocation3 + $0x158] sm:$0xff] %v3121
      %3154 = vst [vmem:[#allocation3 + $0x1a0] sm:$0xff] %v3122
      %3155 = vst [vmem:[#allocation3 + $0x1e8] sm:$0xff] %v3123
      %3156 = vst [vmem:[#allocation3 + $0x230] sm:$0xff] %v3124
      %3157 = vst [vmem:[#allocation3 + $0x278] sm:$0xff] %v3125
      %3158 = vst [vmem:[#allocation3 + $0x2c0] sm:$0xff] %v3126
      %3159 = vst [vmem:[#allocation3 + $0x308] sm:$0xff] %v3127
      %3160 = vst [vmem:[#allocation3 + $0x350] sm:$0xff] %v3128
      %3161 = vst [vmem:[#allocation3 + $0x398] sm:$0xff] %v3129
      %3162 = vst [vmem:[#allocation3 + $0x3e0] sm:$0xff] %v3130
      %3163 = vst [vmem:[#allocation3 + $0x428] sm:$0xff] %v3131
      %3164 = vst [vmem:[#allocation3 + $0x470] sm:$0xff] %v3132
      %3165 = vst [vmem:[#allocation3 + $0x4b8] sm:$0xff] %v3133
      %3166 = vst [vmem:[#allocation3 + $0x500] sm:$0xff] %v3134
      %3167 = vst [vmem:[#allocation3 + $0x548] sm:$0xff] %v3135
      %3168 = vst [vmem:[#allocation3 + $0x590] sm:$0xff] %v3136
      %3169 = vst [vmem:[#allocation3 + $0x5d8] sm:$0xff] %v3137
      %3170 = vst [vmem:[#allocation3 + $0x620] sm:$0xff] %v3138
      %3171 = vst [vmem:[#allocation3 + $0x668] sm:$0xff] %v3139
      %3172 = vst [vmem:[#allocation3 + $0x6b0] sm:$0xff] %v3140
      %3173 = vst [vmem:[#allocation3 + $0x6f8] sm:$0xff] %v3141
      %3174 = vst [vmem:[#allocation3 + $0x740] sm:$0xff] %v3142
      %3175 = vst [vmem:[#allocation3 + $0x788] sm:$0xff] %v3143
      %3176 = vst [vmem:[#allocation3 + $0x7d0] sm:$0xff] %v3144
      %3177 = vst [vmem:[#allocation3 + $0x818] sm:$0xff] %v3145
      %3178 = vst [vmem:[#allocation3 + $0x860] sm:$0xff] %v3146
      %3179 = vst [vmem:[#allocation3 + $0x8a8] sm:$0xff] %v3147
      %3180 = vst [vmem:[#allocation3 + $0x8f0] sm:$0xff] %v3148
      %v3181 = vld [vmem:[%s697 + $0x2] sm:$0xff]
      %v3182 = vld [vmem:[%s697 + $0xa] sm:$0xff]
      %v3183 = vld [vmem:[%s697 + $0x1a] sm:$0xff]
      %v3184 = vld [vmem:[%s697 + $0x22] sm:$0xff]
      %v3185 = vld [vmem:[%s697 + $0x32] sm:$0xff]
      %v3186 = vld [vmem:[%s697 + $0x3a] sm:$0xff]
      %v3187 = vld [vmem:[%s697 + $0x4a] sm:$0xff]
      %v3188 = vld [vmem:[%s697 + $0x52] sm:$0xff]
      %v3189 = vld [vmem:[%s697 + $0x62] sm:$0xff]
      %v3190 = vld [vmem:[%s697 + $0x6a] sm:$0xff]
      %v3191 = vld [vmem:[%s697 + $0x7a] sm:$0xff]
      %v3192 = vld [vmem:[%s697 + $0x82] sm:$0xff]
      %v3193 = vld [vmem:[%s697 + $0x92] sm:$0xff]
      %v3194 = vld [vmem:[%s697 + $0x9a] sm:$0xff]
      %v3195 = vld [vmem:[%s697 + $0xaa] sm:$0xff]
      %v3196 = vld [vmem:[%s697 + $0xb2] sm:$0xff]
      %v3197 = vld [vmem:[%s697 + $0xc2] sm:$0xff]
      %v3198 = vld [vmem:[%s697 + $0xca] sm:$0xff]
      %v3199 = vld [vmem:[%s697 + $0xda] sm:$0xff]
      %v3200 = vld [vmem:[%s697 + $0xe2] sm:$0xff]
      %v3201 = vld [vmem:[%s697 + $0xf2] sm:$0xff]
      %v3202 = vld [vmem:[%s697 + $0xfa] sm:$0xff]
      %v3203 = vld [vmem:[%s697 + $0x10a] sm:$0xff]
      %v3204 = vld [vmem:[%s697 + $0x112] sm:$0xff]
      %v3205 = vld [vmem:[%s697 + $0x122] sm:$0xff]
      %v3206 = vld [vmem:[%s697 + $0x12a] sm:$0xff]
      %v3207 = vld [vmem:[%s697 + $0x13a] sm:$0xff]
      %v3208 = vld [vmem:[%s697 + $0x142] sm:$0xff]
      %v3209 = vld [vmem:[%s697 + $0x152] sm:$0xff]
      %v3210 = vld [vmem:[%s697 + $0x15a] sm:$0xff]
      %v3211 = vld [vmem:[%s697 + $0x16a] sm:$0xff]
      %v3212 = vld [vmem:[%s697 + $0x172] sm:$0xff]
      %3213 = vst [vmem:[#allocation3 + $0x40] sm:$0xff] %v3181
      %3214 = vst [vmem:[#allocation3 + $0x88] sm:$0xff] %v3182
      %3215 = vst [vmem:[#allocation3 + $0xd0] sm:$0xff] %v3183
      %3216 = vst [vmem:[#allocation3 + $0x118] sm:$0xff] %v3184
      %3217 = vst [vmem:[#allocation3 + $0x160] sm:$0xff] %v3185
      %3218 = vst [vmem:[#allocation3 + $0x1a8] sm:$0xff] %v3186
      %3219 = vst [vmem:[#allocation3 + $0x1f0] sm:$0xff] %v3187
      %3220 = vst [vmem:[#allocation3 + $0x238] sm:$0xff] %v3188
      %3221 = vst [vmem:[#allocation3 + $0x280] sm:$0xff] %v3189
      %3222 = vst [vmem:[#allocation3 + $0x2c8] sm:$0xff] %v3190
      %3223 = vst [vmem:[#allocation3 + $0x310] sm:$0xff] %v3191
      %3224 = vst [vmem:[#allocation3 + $0x358] sm:$0xff] %v3192
      %3225 = vst [vmem:[#allocation3 + $0x3a0] sm:$0xff] %v3193
      %3226 = vst [vmem:[#allocation3 + $0x3e8] sm:$0xff] %v3194
      %3227 = vst [vmem:[#allocation3 + $0x430] sm:$0xff] %v3195
      %3228 = vst [vmem:[#allocation3 + $0x478] sm:$0xff] %v3196
      %3229 = vst [vmem:[#allocation3 + $0x4c0] sm:$0xff] %v3197
      %3230 = vst [vmem:[#allocation3 + $0x508] sm:$0xff] %v3198
      %3231 = vst [vmem:[#allocation3 + $0x550] sm:$0xff] %v3199
      %3232 = vst [vmem:[#allocation3 + $0x598] sm:$0xff] %v3200
      %3233 = vst [vmem:[#allocation3 + $0x5e0] sm:$0xff] %v3201
      %3234 = vst [vmem:[#allocation3 + $0x628] sm:$0xff] %v3202
      %3235 = vst [vmem:[#allocation3 + $0x670] sm:$0xff] %v3203
      %3236 = vst [vmem:[#allocation3 + $0x6b8] sm:$0xff] %v3204
      %3237 = vst [vmem:[#allocation3 + $0x700] sm:$0xff] %v3205
      %3238 = vst [vmem:[#allocation3 + $0x748] sm:$0xff] %v3206
      %3239 = vst [vmem:[#allocation3 + $0x790] sm:$0xff] %v3207
      %3240 = vst [vmem:[#allocation3 + $0x7d8] sm:$0xff] %v3208
      %3241 = vst [vmem:[#allocation3 + $0x820] sm:$0xff] %v3209
      %3242 = vst [vmem:[#allocation3 + $0x868] sm:$0xff] %v3210
      %3243 = vst [vmem:[#allocation3 + $0x8b0] sm:$0xff] %v3211
      %3244 = vst [vmem:[#allocation3 + $0x8f8] sm:$0xff] %v3212
      %v3245 = vld [vmem:[#allocation3] sm:$0xff]
      %v3246 = vld [vmem:[#allocation3 + $0x8] sm:$0xff]
      %v3247 = vld [vmem:[#allocation3 + $0x10] sm:$0xff]
      %v3248 = vld [vmem:[#allocation3 + $0x18] sm:$0xff]
      %v3249 = vld [vmem:[#allocation3 + $0x20] sm:$0xff]
      %v3250 = vld [vmem:[#allocation3 + $0x28] sm:$0xff]
      %v3251 = vld [vmem:[#allocation3 + $0x30] sm:$0xff]
      %v3252 = vld [vmem:[#allocation3 + $0x38] sm:$0xff]
      %v3253 = vld [vmem:[#allocation3 + $0x40] sm:$0xff]
      %v3254 = vld [vmem:[#allocation3 + $0x48] sm:$0xff]
      %v3255 = vld [vmem:[#allocation3 + $0x50] sm:$0xff]
      %v3256 = vld [vmem:[#allocation3 + $0x58] sm:$0xff]
      %v3257 = vld [vmem:[#allocation3 + $0x60] sm:$0xff]
      %v3258 = vld [vmem:[#allocation3 + $0x68] sm:$0xff]
      %v3259 = vld [vmem:[#allocation3 + $0x70] sm:$0xff]
      %v3260 = vld [vmem:[#allocation3 + $0x78] sm:$0xff]
      %v3261 = vld [vmem:[#allocation3 + $0x80] sm:$0xff]
      %v3262 = vld [vmem:[#allocation3 + $0x88] sm:$0xff]
      %v3263 = vld [vmem:[#allocation3 + $0x90] sm:$0xff]
      %v3264 = vld [vmem:[#allocation3 + $0x98] sm:$0xff]
      %v3265 = vld [vmem:[#allocation3 + $0xa0] sm:$0xff]
      %v3266 = vld [vmem:[#allocation3 + $0xa8] sm:$0xff]
      %v3267 = vld [vmem:[#allocation3 + $0xb0] sm:$0xff]
      %v3268 = vld [vmem:[#allocation3 + $0xb8] sm:$0xff]
      %v3269 = vld [vmem:[#allocation3 + $0xc0] sm:$0xff]
      %v3270 = vld [vmem:[#allocation3 + $0xc8] sm:$0xff]
      %v3271 = vld [vmem:[#allocation3 + $0xd0] sm:$0xff]
      %v3272 = vld [vmem:[#allocation3 + $0xd8] sm:$0xff]
      %v3273 = vld [vmem:[#allocation3 + $0xe0] sm:$0xff]
      %v3274 = vld [vmem:[#allocation3 + $0xe8] sm:$0xff]
      %v3275 = vld [vmem:[#allocation3 + $0xf0] sm:$0xff]
      %v3276 = vld [vmem:[#allocation3 + $0xf8] sm:$0xff]
      %v3277 = vld [vmem:[#allocation3 + $0x100] sm:$0xff]
      %v3278 = vld [vmem:[#allocation3 + $0x108] sm:$0xff]
      %v3279 = vld [vmem:[#allocation3 + $0x110] sm:$0xff]
      %v3280 = vld [vmem:[#allocation3 + $0x118] sm:$0xff]
      %v3281 = vld [vmem:[#allocation3 + $0x120] sm:$0xff]
      %v3282 = vld [vmem:[#allocation3 + $0x128] sm:$0xff]
      %v3283 = vld [vmem:[#allocation3 + $0x130] sm:$0xff]
      %v3284 = vld [vmem:[#allocation3 + $0x138] sm:$0xff]
      %v3285 = vld [vmem:[#allocation3 + $0x140] sm:$0xff]
      %v3286 = vld [vmem:[#allocation3 + $0x148] sm:$0xff]
      %v3287 = vld [vmem:[#allocation3 + $0x150] sm:$0xff]
      %v3288 = vld [vmem:[#allocation3 + $0x158] sm:$0xff]
      %v3289 = vld [vmem:[#allocation3 + $0x160] sm:$0xff]
      %v3290 = vld [vmem:[#allocation3 + $0x168] sm:$0xff]
      %v3291 = vld [vmem:[#allocation3 + $0x170] sm:$0xff]
      %v3292 = vld [vmem:[#allocation3 + $0x178] sm:$0xff]
      %v3293 = vld [vmem:[#allocation3 + $0x180] sm:$0xff]
      %v3294 = vld [vmem:[#allocation3 + $0x188] sm:$0xff]
      %v3295 = vld [vmem:[#allocation3 + $0x190] sm:$0xff]
      %v3296 = vld [vmem:[#allocation3 + $0x198] sm:$0xff]
      %v3297 = vld [vmem:[#allocation3 + $0x1a0] sm:$0xff]
      %v3298 = vld [vmem:[#allocation3 + $0x1a8] sm:$0xff]
      %v3299 = vld [vmem:[#allocation3 + $0x1b0] sm:$0xff]
      %v3300 = vld [vmem:[#allocation3 + $0x1b8] sm:$0xff]
      %v3301 = vld [vmem:[#allocation3 + $0x1c0] sm:$0xff]
      %v3302 = vld [vmem:[#allocation3 + $0x1c8] sm:$0xff]
      %v3303 = vld [vmem:[#allocation3 + $0x1d0] sm:$0xff]
      %v3304 = vld [vmem:[#allocation3 + $0x1d8] sm:$0xff]
      %v3305 = vld [vmem:[#allocation3 + $0x1e0] sm:$0xff]
      %v3306 = vld [vmem:[#allocation3 + $0x1e8] sm:$0xff]
      %v3307 = vld [vmem:[#allocation3 + $0x1f0] sm:$0xff]
      %v3308 = vld [vmem:[#allocation3 + $0x1f8] sm:$0xff]
      %v3309 = vld [vmem:[#allocation3 + $0x200] sm:$0xff]
      %v3310 = vld [vmem:[#allocation3 + $0x208] sm:$0xff]
      %v3311 = vld [vmem:[#allocation3 + $0x210] sm:$0xff]
      %v3312 = vld [vmem:[#allocation3 + $0x218] sm:$0xff]
      %v3313 = vld [vmem:[#allocation3 + $0x220] sm:$0xff]
      %v3314 = vld [vmem:[#allocation3 + $0x228] sm:$0xff]
      %v3315 = vld [vmem:[#allocation3 + $0x230] sm:$0xff]
      %v3316 = vld [vmem:[#allocation3 + $0x238] sm:$0xff]
      %v3317 = vld [vmem:[#allocation3 + $0x240] sm:$0xff]
      %v3318 = vld [vmem:[#allocation3 + $0x248] sm:$0xff]
      %v3319 = vld [vmem:[#allocation3 + $0x250] sm:$0xff]
      %v3320 = vld [vmem:[#allocation3 + $0x258] sm:$0xff]
      %v3321 = vld [vmem:[#allocation3 + $0x260] sm:$0xff]
      %v3322 = vld [vmem:[#allocation3 + $0x268] sm:$0xff]
      %v3323 = vld [vmem:[#allocation3 + $0x270] sm:$0xff]
      %v3324 = vld [vmem:[#allocation3 + $0x278] sm:$0xff]
      %v3325 = vld [vmem:[#allocation3 + $0x280] sm:$0xff]
      %v3326 = vld [vmem:[#allocation3 + $0x288] sm:$0xff]
      %v3327 = vld [vmem:[#allocation3 + $0x290] sm:$0xff]
      %v3328 = vld [vmem:[#allocation3 + $0x298] sm:$0xff]
      %v3329 = vld [vmem:[#allocation3 + $0x2a0] sm:$0xff]
      %v3330 = vld [vmem:[#allocation3 + $0x2a8] sm:$0xff]
      %v3331 = vld [vmem:[#allocation3 + $0x2b0] sm:$0xff]
      %v3332 = vld [vmem:[#allocation3 + $0x2b8] sm:$0xff]
      %v3333 = vld [vmem:[#allocation3 + $0x2c0] sm:$0xff]
      %v3334 = vld [vmem:[#allocation3 + $0x2c8] sm:$0xff]
      %v3335 = vld [vmem:[#allocation3 + $0x2d0] sm:$0xff]
      %v3336 = vld [vmem:[#allocation3 + $0x2d8] sm:$0xff]
      %v3337 = vld [vmem:[#allocation3 + $0x2e0] sm:$0xff]
      %v3338 = vld [vmem:[#allocation3 + $0x2e8] sm:$0xff]
      %v3339 = vld [vmem:[#allocation3 + $0x2f0] sm:$0xff]
      %v3340 = vld [vmem:[#allocation3 + $0x2f8] sm:$0xff]
      %v3341 = vld [vmem:[#allocation3 + $0x300] sm:$0xff]
      %v3342 = vld [vmem:[#allocation3 + $0x308] sm:$0xff]
      %v3343 = vld [vmem:[#allocation3 + $0x310] sm:$0xff]
      %v3344 = vld [vmem:[#allocation3 + $0x318] sm:$0xff]
      %v3345 = vld [vmem:[#allocation3 + $0x320] sm:$0xff]
      %v3346 = vld [vmem:[#allocation3 + $0x328] sm:$0xff]
      %v3347 = vld [vmem:[#allocation3 + $0x330] sm:$0xff]
      %v3348 = vld [vmem:[#allocation3 + $0x338] sm:$0xff]
      %v3349 = vld [vmem:[#allocation3 + $0x340] sm:$0xff]
      %v3350 = vld [vmem:[#allocation3 + $0x348] sm:$0xff]
      %v3351 = vld [vmem:[#allocation3 + $0x350] sm:$0xff]
      %v3352 = vld [vmem:[#allocation3 + $0x358] sm:$0xff]
      %v3353 = vld [vmem:[#allocation3 + $0x360] sm:$0xff]
      %v3354 = vld [vmem:[#allocation3 + $0x368] sm:$0xff]
      %v3355 = vld [vmem:[#allocation3 + $0x370] sm:$0xff]
      %v3356 = vld [vmem:[#allocation3 + $0x378] sm:$0xff]
      %v3357 = vld [vmem:[#allocation3 + $0x380] sm:$0xff]
      %v3358 = vld [vmem:[#allocation3 + $0x388] sm:$0xff]
      %v3359 = vld [vmem:[#allocation3 + $0x390] sm:$0xff]
      %v3360 = vld [vmem:[#allocation3 + $0x398] sm:$0xff]
      %v3361 = vld [vmem:[#allocation3 + $0x3a0] sm:$0xff]
      %v3362 = vld [vmem:[#allocation3 + $0x3a8] sm:$0xff]
      %v3363 = vld [vmem:[#allocation3 + $0x3b0] sm:$0xff]
      %v3364 = vld [vmem:[#allocation3 + $0x3b8] sm:$0xff]
      %v3365 = vld [vmem:[#allocation3 + $0x3c0] sm:$0xff]
      %v3366 = vld [vmem:[#allocation3 + $0x3c8] sm:$0xff]
      %v3367 = vld [vmem:[#allocation3 + $0x3d0] sm:$0xff]
      %v3368 = vld [vmem:[#allocation3 + $0x3d8] sm:$0xff]
      %v3369 = vld [vmem:[#allocation3 + $0x3e0] sm:$0xff]
      %v3370 = vld [vmem:[#allocation3 + $0x3e8] sm:$0xff]
      %v3371 = vld [vmem:[#allocation3 + $0x3f0] sm:$0xff]
      %v3372 = vld [vmem:[#allocation3 + $0x3f8] sm:$0xff]
      %v3373 = vld [vmem:[#allocation3 + $0x400] sm:$0xff]
      %v3374 = vld [vmem:[#allocation3 + $0x408] sm:$0xff]
      %v3375 = vld [vmem:[#allocation3 + $0x410] sm:$0xff]
      %v3376 = vld [vmem:[#allocation3 + $0x418] sm:$0xff]
      %v3377 = vld [vmem:[#allocation3 + $0x420] sm:$0xff]
      %v3378 = vld [vmem:[#allocation3 + $0x428] sm:$0xff]
      %v3379 = vld [vmem:[#allocation3 + $0x430] sm:$0xff]
      %v3380 = vld [vmem:[#allocation3 + $0x438] sm:$0xff]
      %v3381 = vld [vmem:[#allocation3 + $0x440] sm:$0xff]
      %v3382 = vld [vmem:[#allocation3 + $0x448] sm:$0xff]
      %v3383 = vld [vmem:[#allocation3 + $0x450] sm:$0xff]
      %v3384 = vld [vmem:[#allocation3 + $0x458] sm:$0xff]
      %v3385 = vld [vmem:[#allocation3 + $0x460] sm:$0xff]
      %v3386 = vld [vmem:[#allocation3 + $0x468] sm:$0xff]
      %v3387 = vld [vmem:[#allocation3 + $0x470] sm:$0xff]
      %v3388 = vld [vmem:[#allocation3 + $0x478] sm:$0xff]
      %v3389 = vld [vmem:[#allocation3 + $0x480] sm:$0xff]
      %v3390 = vld [vmem:[#allocation3 + $0x488] sm:$0xff]
      %v3391 = vld [vmem:[#allocation3 + $0x490] sm:$0xff]
      %v3392 = vld [vmem:[#allocation3 + $0x498] sm:$0xff]
      %v3393 = vld [vmem:[#allocation3 + $0x4a0] sm:$0xff]
      %v3394 = vld [vmem:[#allocation3 + $0x4a8] sm:$0xff]
      %v3395 = vld [vmem:[#allocation3 + $0x4b0] sm:$0xff]
      %v3396 = vld [vmem:[#allocation3 + $0x4b8] sm:$0xff]
      %v3397 = vld [vmem:[#allocation3 + $0x4c0] sm:$0xff]
      %v3398 = vld [vmem:[#allocation3 + $0x4c8] sm:$0xff]
      %v3399 = vld [vmem:[#allocation3 + $0x4d0] sm:$0xff]
      %v3400 = vld [vmem:[#allocation3 + $0x4d8] sm:$0xff]
      %v3401 = vld [vmem:[#allocation3 + $0x4e0] sm:$0xff]
      %v3402 = vld [vmem:[#allocation3 + $0x4e8] sm:$0xff]
      %v3403 = vld [vmem:[#allocation3 + $0x4f0] sm:$0xff]
      %v3404 = vld [vmem:[#allocation3 + $0x4f8] sm:$0xff]
      %v3405 = vld [vmem:[#allocation3 + $0x500] sm:$0xff]
      %v3406 = vld [vmem:[#allocation3 + $0x508] sm:$0xff]
      %v3407 = vld [vmem:[#allocation3 + $0x510] sm:$0xff]
      %v3408 = vld [vmem:[#allocation3 + $0x518] sm:$0xff]
      %v3409 = vld [vmem:[#allocation3 + $0x520] sm:$0xff]
      %v3410 = vld [vmem:[#allocation3 + $0x528] sm:$0xff]
      %v3411 = vld [vmem:[#allocation3 + $0x530] sm:$0xff]
      %v3412 = vld [vmem:[#allocation3 + $0x538] sm:$0xff]
      %v3413 = vld [vmem:[#allocation3 + $0x540] sm:$0xff]
      %v3414 = vld [vmem:[#allocation3 + $0x548] sm:$0xff]
      %v3415 = vld [vmem:[#allocation3 + $0x550] sm:$0xff]
      %v3416 = vld [vmem:[#allocation3 + $0x558] sm:$0xff]
      %v3417 = vld [vmem:[#allocation3 + $0x560] sm:$0xff]
      %v3418 = vld [vmem:[#allocation3 + $0x568] sm:$0xff]
      %v3419 = vld [vmem:[#allocation3 + $0x570] sm:$0xff]
      %v3420 = vld [vmem:[#allocation3 + $0x578] sm:$0xff]
      %v3421 = vld [vmem:[#allocation3 + $0x580] sm:$0xff]
      %v3422 = vld [vmem:[#allocation3 + $0x588] sm:$0xff]
      %v3423 = vld [vmem:[#allocation3 + $0x590] sm:$0xff]
      %v3424 = vld [vmem:[#allocation3 + $0x598] sm:$0xff]
      %v3425 = vld [vmem:[#allocation3 + $0x5a0] sm:$0xff]
      %v3426 = vld [vmem:[#allocation3 + $0x5a8] sm:$0xff]
      %v3427 = vld [vmem:[#allocation3 + $0x5b0] sm:$0xff]
      %v3428 = vld [vmem:[#allocation3 + $0x5b8] sm:$0xff]
      %v3429 = vld [vmem:[#allocation3 + $0x5c0] sm:$0xff]
      %v3430 = vld [vmem:[#allocation3 + $0x5c8] sm:$0xff]
      %v3431 = vld [vmem:[#allocation3 + $0x5d0] sm:$0xff]
      %v3432 = vld [vmem:[#allocation3 + $0x5d8] sm:$0xff]
      %v3433 = vld [vmem:[#allocation3 + $0x5e0] sm:$0xff]
      %v3434 = vld [vmem:[#allocation3 + $0x5e8] sm:$0xff]
      %v3435 = vld [vmem:[#allocation3 + $0x5f0] sm:$0xff]
      %v3436 = vld [vmem:[#allocation3 + $0x5f8] sm:$0xff]
      %v3437 = vld [vmem:[#allocation3 + $0x600] sm:$0xff]
      %v3438 = vld [vmem:[#allocation3 + $0x608] sm:$0xff]
      %v3439 = vld [vmem:[#allocation3 + $0x610] sm:$0xff]
      %v3440 = vld [vmem:[#allocation3 + $0x618] sm:$0xff]
      %v3441 = vld [vmem:[#allocation3 + $0x620] sm:$0xff]
      %v3442 = vld [vmem:[#allocation3 + $0x628] sm:$0xff]
      %v3443 = vld [vmem:[#allocation3 + $0x630] sm:$0xff]
      %v3444 = vld [vmem:[#allocation3 + $0x638] sm:$0xff]
      %v3445 = vld [vmem:[#allocation3 + $0x640] sm:$0xff]
      %v3446 = vld [vmem:[#allocation3 + $0x648] sm:$0xff]
      %v3447 = vld [vmem:[#allocation3 + $0x650] sm:$0xff]
      %v3448 = vld [vmem:[#allocation3 + $0x658] sm:$0xff]
      %v3449 = vld [vmem:[#allocation3 + $0x660] sm:$0xff]
      %v3450 = vld [vmem:[#allocation3 + $0x668] sm:$0xff]
      %v3451 = vld [vmem:[#allocation3 + $0x670] sm:$0xff]
      %v3452 = vld [vmem:[#allocation3 + $0x678] sm:$0xff]
      %v3453 = vld [vmem:[#allocation3 + $0x680] sm:$0xff]
      %v3454 = vld [vmem:[#allocation3 + $0x688] sm:$0xff]
      %v3455 = vld [vmem:[#allocation3 + $0x690] sm:$0xff]
      %v3456 = vld [vmem:[#allocation3 + $0x698] sm:$0xff]
      %v3457 = vld [vmem:[#allocation3 + $0x6a0] sm:$0xff]
      %v3458 = vld [vmem:[#allocation3 + $0x6a8] sm:$0xff]
      %v3459 = vld [vmem:[#allocation3 + $0x6b0] sm:$0xff]
      %v3460 = vld [vmem:[#allocation3 + $0x6b8] sm:$0xff]
      %v3461 = vld [vmem:[#allocation3 + $0x6c0] sm:$0xff]
      %v3462 = vld [vmem:[#allocation3 + $0x6c8] sm:$0xff]
      %v3463 = vld [vmem:[#allocation3 + $0x6d0] sm:$0xff]
      %v3464 = vld [vmem:[#allocation3 + $0x6d8] sm:$0xff]
      %v3465 = vld [vmem:[#allocation3 + $0x6e0] sm:$0xff]
      %v3466 = vld [vmem:[#allocation3 + $0x6e8] sm:$0xff]
      %v3467 = vld [vmem:[#allocation3 + $0x6f0] sm:$0xff]
      %v3468 = vld [vmem:[#allocation3 + $0x6f8] sm:$0xff]
      %v3469 = vld [vmem:[#allocation3 + $0x700] sm:$0xff]
      %v3470 = vld [vmem:[#allocation3 + $0x708] sm:$0xff]
      %v3471 = vld [vmem:[#allocation3 + $0x710] sm:$0xff]
      %v3472 = vld [vmem:[#allocation3 + $0x718] sm:$0xff]
      %v3473 = vld [vmem:[#allocation3 + $0x720] sm:$0xff]
      %v3474 = vld [vmem:[#allocation3 + $0x728] sm:$0xff]
      %v3475 = vld [vmem:[#allocation3 + $0x730] sm:$0xff]
      %v3476 = vld [vmem:[#allocation3 + $0x738] sm:$0xff]
      %v3477 = vld [vmem:[#allocation3 + $0x740] sm:$0xff]
      %v3478 = vld [vmem:[#allocation3 + $0x748] sm:$0xff]
      %v3479 = vld [vmem:[#allocation3 + $0x750] sm:$0xff]
      %v3480 = vld [vmem:[#allocation3 + $0x758] sm:$0xff]
      %v3481 = vld [vmem:[#allocation3 + $0x760] sm:$0xff]
      %v3482 = vld [vmem:[#allocation3 + $0x768] sm:$0xff]
      %v3483 = vld [vmem:[#allocation3 + $0x770] sm:$0xff]
      %v3484 = vld [vmem:[#allocation3 + $0x778] sm:$0xff]
      %v3485 = vld [vmem:[#allocation3 + $0x780] sm:$0xff]
      %v3486 = vld [vmem:[#allocation3 + $0x788] sm:$0xff]
      %v3487 = vld [vmem:[#allocation3 + $0x790] sm:$0xff]
      %v3488 = vld [vmem:[#allocation3 + $0x798] sm:$0xff]
      %v3489 = vld [vmem:[#allocation3 + $0x7a0] sm:$0xff]
      %v3490 = vld [vmem:[#allocation3 + $0x7a8] sm:$0xff]
      %v3491 = vld [vmem:[#allocation3 + $0x7b0] sm:$0xff]
      %v3492 = vld [vmem:[#allocation3 + $0x7b8] sm:$0xff]
      %v3493 = vld [vmem:[#allocation3 + $0x7c0] sm:$0xff]
      %v3494 = vld [vmem:[#allocation3 + $0x7c8] sm:$0xff]
      %v3495 = vld [vmem:[#allocation3 + $0x7d0] sm:$0xff]
      %v3496 = vld [vmem:[#allocation3 + $0x7d8] sm:$0xff]
      %v3497 = vld [vmem:[#allocation3 + $0x7e0] sm:$0xff]
      %v3498 = vld [vmem:[#allocation3 + $0x7e8] sm:$0xff]
      %v3499 = vld [vmem:[#allocation3 + $0x7f0] sm:$0xff]
      %v3500 = vld [vmem:[#allocation3 + $0x7f8] sm:$0xff]
      %v3501 = vld [vmem:[#allocation3 + $0x800] sm:$0xff]
      %v3502 = vld [vmem:[#allocation3 + $0x808] sm:$0xff]
      %v3503 = vld [vmem:[#allocation3 + $0x810] sm:$0xff]
      %v3504 = vld [vmem:[#allocation3 + $0x818] sm:$0xff]
      %v3505 = vld [vmem:[#allocation3 + $0x820] sm:$0xff]
      %v3506 = vld [vmem:[#allocation3 + $0x828] sm:$0xff]
      %v3507 = vld [vmem:[#allocation3 + $0x830] sm:$0xff]
      %v3508 = vld [vmem:[#allocation3 + $0x838] sm:$0xff]
      %v3509 = vld [vmem:[#allocation3 + $0x840] sm:$0xff]
      %v3510 = vld [vmem:[#allocation3 + $0x848] sm:$0xff]
      %v3511 = vld [vmem:[#allocation3 + $0x850] sm:$0xff]
      %v3512 = vld [vmem:[#allocation3 + $0x858] sm:$0xff]
      %v3513 = vld [vmem:[#allocation3 + $0x860] sm:$0xff]
      %v3514 = vld [vmem:[#allocation3 + $0x868] sm:$0xff]
      %v3515 = vld [vmem:[#allocation3 + $0x870] sm:$0xff]
      %v3516 = vld [vmem:[#allocation3 + $0x878] sm:$0xff]
      %v3517 = vld [vmem:[#allocation3 + $0x880] sm:$0xff]
      %v3518 = vld [vmem:[#allocation3 + $0x888] sm:$0xff]
      %v3519 = vld [vmem:[#allocation3 + $0x890] sm:$0xff]
      %v3520 = vld [vmem:[#allocation3 + $0x898] sm:$0xff]
      %v3521 = vld [vmem:[#allocation3 + $0x8a0] sm:$0xff]
      %v3522 = vld [vmem:[#allocation3 + $0x8a8] sm:$0xff]
      %v3523 = vld [vmem:[#allocation3 + $0x8b0] sm:$0xff]
      %v3524 = vld [vmem:[#allocation3 + $0x8b8] sm:$0xff]
      %v3525 = vld [vmem:[#allocation3 + $0x8c0] sm:$0xff]
      %v3526 = vld [vmem:[#allocation3 + $0x8c8] sm:$0xff]
      %v3527 = vld [vmem:[#allocation3 + $0x8d0] sm:$0xff]
      %v3528 = vld [vmem:[#allocation3 + $0x8d8] sm:$0xff]
      %v3529 = vld [vmem:[#allocation3 + $0x8e0] sm:$0xff]
      %v3530 = vld [vmem:[#allocation3 + $0x8e8] sm:$0xff]
      %v3531 = vld [vmem:[#allocation3 + $0x8f0] sm:$0xff]
      %v3532 = vld [vmem:[#allocation3 + $0x8f8] sm:$0xff]
      %v3533 = vld [vmem:[%s2] sm:$0xff]
      %v3534 = vld [vmem:[%s2 + $0x8] sm:$0xff]
      %v3535 = vld [vmem:[%s2 + $0x10] sm:$0xff]
      %v3536 = vld [vmem:[%s2 + $0x18] sm:$0xff]
      %v3537 = vld [vmem:[%s2 + $0x20] sm:$0xff]
      %v3538 = vld [vmem:[%s2 + $0x28] sm:$0xff]
      %v3539 = vld [vmem:[%s2 + $0x30] sm:$0xff]
      %v3540 = vld [vmem:[%s2 + $0x38] sm:$0xff]
      %v3541 = vld [vmem:[%s2 + $0x40] sm:$0xff]
      %v3542 = vld [vmem:[%s2 + $0x48] sm:$0xff]
      %v3543 = vld [vmem:[%s2 + $0x50] sm:$0xff]
      %v3544 = vld [vmem:[%s2 + $0x58] sm:$0xff]
      %v3545 = vld [vmem:[%s2 + $0x60] sm:$0xff]
      %v3546 = vld [vmem:[%s2 + $0x68] sm:$0xff]
      %v3547 = vld [vmem:[%s2 + $0x70] sm:$0xff]
      %v3548 = vld [vmem:[%s2 + $0x78] sm:$0xff]
      %v3549 = vld [vmem:[%s2 + $0x80] sm:$0xff]
      %v3550 = vld [vmem:[%s2 + $0x88] sm:$0xff]
      %v3551 = vld [vmem:[%s2 + $0x90] sm:$0xff]
      %v3552 = vld [vmem:[%s2 + $0x98] sm:$0xff]
      %v3553 = vld [vmem:[%s2 + $0xa0] sm:$0xff]
      %v3554 = vld [vmem:[%s2 + $0xa8] sm:$0xff]
      %v3555 = vld [vmem:[%s2 + $0xb0] sm:$0xff]
      %v3556 = vld [vmem:[%s2 + $0xb8] sm:$0xff]
      %v3557 = vld [vmem:[%s2 + $0xc0] sm:$0xff]
      %v3558 = vld [vmem:[%s2 + $0xc8] sm:$0xff]
      %v3559 = vld [vmem:[%s2 + $0xd0] sm:$0xff]
      %v3560 = vld [vmem:[%s2 + $0xd8] sm:$0xff]
      %v3561 = vld [vmem:[%s2 + $0xe0] sm:$0xff]
      %v3562 = vld [vmem:[%s2 + $0xe8] sm:$0xff]
      %v3563 = vld [vmem:[%s2 + $0xf0] sm:$0xff]
      %v3564 = vld [vmem:[%s2 + $0xf8] sm:$0xff]
      %v3565 = vld [vmem:[%s2 + $0x100] sm:$0xff]
      %v3566 = vld [vmem:[%s2 + $0x108] sm:$0xff]
      %v3567 = vld [vmem:[%s2 + $0x110] sm:$0xff]
      %v3568 = vld [vmem:[%s2 + $0x118] sm:$0xff]
      %v3569 = vld [vmem:[%s2 + $0x120] sm:$0xff]
      %v3570 = vld [vmem:[%s2 + $0x128] sm:$0xff]
      %v3571 = vld [vmem:[%s2 + $0x130] sm:$0xff]
      %v3572 = vld [vmem:[%s2 + $0x138] sm:$0xff]
      %v3573 = vld [vmem:[%s2 + $0x140] sm:$0xff]
      %v3574 = vld [vmem:[%s2 + $0x148] sm:$0xff]
      %v3575 = vld [vmem:[%s2 + $0x150] sm:$0xff]
      %v3576 = vld [vmem:[%s2 + $0x158] sm:$0xff]
      %v3577 = vld [vmem:[%s2 + $0x160] sm:$0xff]
      %v3578 = vld [vmem:[%s2 + $0x168] sm:$0xff]
      %v3579 = vld [vmem:[%s2 + $0x170] sm:$0xff]
      %v3580 = vld [vmem:[%s2 + $0x178] sm:$0xff]
      %v3581 = vld [vmem:[%s2 + $0x180] sm:$0xff]
      %v3582 = vld [vmem:[%s2 + $0x188] sm:$0xff]
      %v3583 = vld [vmem:[%s2 + $0x190] sm:$0xff]
      %v3584 = vld [vmem:[%s2 + $0x198] sm:$0xff]
      %v3585 = vld [vmem:[%s2 + $0x1a0] sm:$0xff]
      %v3586 = vld [vmem:[%s2 + $0x1a8] sm:$0xff]
      %v3587 = vld [vmem:[%s2 + $0x1b0] sm:$0xff]
      %v3588 = vld [vmem:[%s2 + $0x1b8] sm:$0xff]
      %v3589 = vld [vmem:[%s2 + $0x1c0] sm:$0xff]
      %v3590 = vld [vmem:[%s2 + $0x1c8] sm:$0xff]
      %v3591 = vld [vmem:[%s2 + $0x1d0] sm:$0xff]
      %v3592 = vld [vmem:[%s2 + $0x1d8] sm:$0xff]
      %v3593 = vld [vmem:[%s2 + $0x1e0] sm:$0xff]
      %v3594 = vld [vmem:[%s2 + $0x1e8] sm:$0xff]
      %v3595 = vld [vmem:[%s2 + $0x1f0] sm:$0xff]
      %v3596 = vld [vmem:[%s2 + $0x1f8] sm:$0xff]
      %v3597 = vld [vmem:[%s2 + $0x200] sm:$0xff]
      %v3598 = vld [vmem:[%s2 + $0x208] sm:$0xff]
      %v3599 = vld [vmem:[%s2 + $0x210] sm:$0xff]
      %v3600 = vld [vmem:[%s2 + $0x218] sm:$0xff]
      %v3601 = vld [vmem:[%s2 + $0x220] sm:$0xff]
      %v3602 = vld [vmem:[%s2 + $0x228] sm:$0xff]
      %v3603 = vld [vmem:[%s2 + $0x230] sm:$0xff]
      %v3604 = vld [vmem:[%s2 + $0x238] sm:$0xff]
      %v3605 = vld [vmem:[%s2 + $0x240] sm:$0xff]
      %v3606 = vld [vmem:[%s2 + $0x248] sm:$0xff]
      %v3607 = vld [vmem:[%s2 + $0x250] sm:$0xff]
      %v3608 = vld [vmem:[%s2 + $0x258] sm:$0xff]
      %v3609 = vld [vmem:[%s2 + $0x260] sm:$0xff]
      %v3610 = vld [vmem:[%s2 + $0x268] sm:$0xff]
      %v3611 = vld [vmem:[%s2 + $0x270] sm:$0xff]
      %v3612 = vld [vmem:[%s2 + $0x278] sm:$0xff]
      %v3613 = vld [vmem:[%s2 + $0x280] sm:$0xff]
      %v3614 = vld [vmem:[%s2 + $0x288] sm:$0xff]
      %v3615 = vld [vmem:[%s2 + $0x290] sm:$0xff]
      %v3616 = vld [vmem:[%s2 + $0x298] sm:$0xff]
      %v3617 = vld [vmem:[%s2 + $0x2a0] sm:$0xff]
      %v3618 = vld [vmem:[%s2 + $0x2a8] sm:$0xff]
      %v3619 = vld [vmem:[%s2 + $0x2b0] sm:$0xff]
      %v3620 = vld [vmem:[%s2 + $0x2b8] sm:$0xff]
      %v3621 = vld [vmem:[%s2 + $0x2c0] sm:$0xff]
      %v3622 = vld [vmem:[%s2 + $0x2c8] sm:$0xff]
      %v3623 = vld [vmem:[%s2 + $0x2d0] sm:$0xff]
      %v3624 = vld [vmem:[%s2 + $0x2d8] sm:$0xff]
      %v3625 = vld [vmem:[%s2 + $0x2e0] sm:$0xff]
      %v3626 = vld [vmem:[%s2 + $0x2e8] sm:$0xff]
      %v3627 = vld [vmem:[%s2 + $0x2f0] sm:$0xff]
      %v3628 = vld [vmem:[%s2 + $0x2f8] sm:$0xff]
      %v3629 = vld [vmem:[%s2 + $0x300] sm:$0xff]
      %v3630 = vld [vmem:[%s2 + $0x308] sm:$0xff]
      %v3631 = vld [vmem:[%s2 + $0x310] sm:$0xff]
      %v3632 = vld [vmem:[%s2 + $0x318] sm:$0xff]
      %v3633 = vld [vmem:[%s2 + $0x320] sm:$0xff]
      %v3634 = vld [vmem:[%s2 + $0x328] sm:$0xff]
      %v3635 = vld [vmem:[%s2 + $0x330] sm:$0xff]
      %v3636 = vld [vmem:[%s2 + $0x338] sm:$0xff]
      %v3637 = vld [vmem:[%s2 + $0x340] sm:$0xff]
      %v3638 = vld [vmem:[%s2 + $0x348] sm:$0xff]
      %v3639 = vld [vmem:[%s2 + $0x350] sm:$0xff]
      %v3640 = vld [vmem:[%s2 + $0x358] sm:$0xff]
      %v3641 = vld [vmem:[%s2 + $0x360] sm:$0xff]
      %v3642 = vld [vmem:[%s2 + $0x368] sm:$0xff]
      %v3643 = vld [vmem:[%s2 + $0x370] sm:$0xff]
      %v3644 = vld [vmem:[%s2 + $0x378] sm:$0xff]
      %v3645 = vld [vmem:[%s2 + $0x380] sm:$0xff]
      %v3646 = vld [vmem:[%s2 + $0x388] sm:$0xff]
      %v3647 = vld [vmem:[%s2 + $0x390] sm:$0xff]
      %v3648 = vld [vmem:[%s2 + $0x398] sm:$0xff]
      %v3649 = vld [vmem:[%s2 + $0x3a0] sm:$0xff]
      %v3650 = vld [vmem:[%s2 + $0x3a8] sm:$0xff]
      %v3651 = vld [vmem:[%s2 + $0x3b0] sm:$0xff]
      %v3652 = vld [vmem:[%s2 + $0x3b8] sm:$0xff]
      %v3653 = vld [vmem:[%s2 + $0x3c0] sm:$0xff]
      %v3654 = vld [vmem:[%s2 + $0x3c8] sm:$0xff]
      %v3655 = vld [vmem:[%s2 + $0x3d0] sm:$0xff]
      %v3656 = vld [vmem:[%s2 + $0x3d8] sm:$0xff]
      %v3657 = vld [vmem:[%s2 + $0x3e0] sm:$0xff]
      %v3658 = vld [vmem:[%s2 + $0x3e8] sm:$0xff]
      %v3659 = vld [vmem:[%s2 + $0x3f0] sm:$0xff]
      %v3660 = vld [vmem:[%s2 + $0x3f8] sm:$0xff]
      %v3661 = vld [vmem:[%s2 + $0x400] sm:$0xff]
      %v3662 = vld [vmem:[%s2 + $0x408] sm:$0xff]
      %v3663 = vld [vmem:[%s2 + $0x410] sm:$0xff]
      %v3664 = vld [vmem:[%s2 + $0x418] sm:$0xff]
      %v3665 = vld [vmem:[%s2 + $0x420] sm:$0xff]
      %v3666 = vld [vmem:[%s2 + $0x428] sm:$0xff]
      %v3667 = vld [vmem:[%s2 + $0x430] sm:$0xff]
      %v3668 = vld [vmem:[%s2 + $0x438] sm:$0xff]
      %v3669 = vld [vmem:[%s2 + $0x440] sm:$0xff]
      %v3670 = vld [vmem:[%s2 + $0x448] sm:$0xff]
      %v3671 = vld [vmem:[%s2 + $0x450] sm:$0xff]
      %v3672 = vld [vmem:[%s2 + $0x458] sm:$0xff]
      %v3673 = vld [vmem:[%s2 + $0x460] sm:$0xff]
      %v3674 = vld [vmem:[%s2 + $0x468] sm:$0xff]
      %v3675 = vld [vmem:[%s2 + $0x470] sm:$0xff]
      %v3676 = vld [vmem:[%s2 + $0x478] sm:$0xff]
      %3677 = vmatpush.msra.mxu0 %v3548
      %3678 = vmatpush.msra.mxu0 %v3547
      %3679 = vmatpush.msra.mxu0 %v3546
      %3680 = vmatpush.msra.mxu0 %v3545
      %3681 = vmatpush.msra.mxu0 %v3544
      %3682 = vmatpush.msra.mxu0 %v3543
      %3683 = vmatpush.msra.mxu0 %v3542
      %3684 = vmatpush.msra.mxu0 %v3541
      %3685 = vmatpush.msra.mxu0 %v3540
      %3686 = vmatpush.msra.mxu0 %v3539
      %3687 = vmatpush.msra.mxu0 %v3538
      %3688 = vmatpush.msra.mxu0 %v3537
      %3689 = vmatpush.msra.mxu0 %v3536
      %3690 = vmatpush.msra.mxu0 %v3535
      %3691 = vmatpush.msra.mxu0 %v3534
      %3692 = vmatpush.msra.mxu0 %v3533
      %3693 = vmatmul.f32.gmra.mxu0 %v3245
      %v3694 = vpop.f32.mrf.mxu0
      %v3695 = vadd.f32 0.0, %v3694
      %3696 = vmatmul.f32.gmra.mxu0 %v3254
      %v3697 = vpop.f32.mrf.mxu0
      %v3698 = vadd.f32 0.0, %v3697
      %3699 = vmatmul.f32.gmra.mxu0 %v3263
      %v3700 = vpop.f32.mrf.mxu0
      %v3701 = vadd.f32 0.0, %v3700
      %3702 = vmatmul.f32.gmra.mxu0 %v3272
      %v3703 = vpop.f32.mrf.mxu0
      %v3704 = vadd.f32 0.0, %v3703
      %3705 = vmatmul.f32.gmra.mxu0 %v3281
      %v3706 = vpop.f32.mrf.mxu0
      %v3707 = vadd.f32 0.0, %v3706
      %3708 = vmatmul.f32.gmra.mxu0 %v3290
      %v3709 = vpop.f32.mrf.mxu0
      %v3710 = vadd.f32 0.0, %v3709
      %3711 = vmatmul.f32.gmra.mxu0 %v3299
      %v3712 = vpop.f32.mrf.mxu0
      %v3713 = vadd.f32 0.0, %v3712
      %3714 = vmatmul.f32.gmra.mxu0 %v3308
      %v3715 = vpop.f32.mrf.mxu0
      %v3716 = vadd.f32 0.0, %v3715
      %3717 = vmatmul.f32.gmra.mxu0 %v3317
      %v3718 = vpop.f32.mrf.mxu0
      %v3719 = vadd.f32 0.0, %v3718
      %3720 = vmatmul.f32.gmra.mxu0 %v3326
      %v3721 = vpop.f32.mrf.mxu0
      %v3722 = vadd.f32 0.0, %v3721
      %3723 = vmatmul.f32.gmra.mxu0 %v3335
      %v3724 = vpop.f32.mrf.mxu0
      %v3725 = vadd.f32 0.0, %v3724
      %3726 = vmatmul.f32.gmra.mxu0 %v3344
      %v3727 = vpop.f32.mrf.mxu0
      %v3728 = vadd.f32 0.0, %v3727
      %3729 = vmatmul.f32.gmra.mxu0 %v3353
      %v3730 = vpop.f32.mrf.mxu0
      %v3731 = vadd.f32 0.0, %v3730
      %3732 = vmatmul.f32.gmra.mxu0 %v3362
      %v3733 = vpop.f32.mrf.mxu0
      %v3734 = vadd.f32 0.0, %v3733
      %3735 = vmatmul.f32.gmra.mxu0 %v3371
      %v3736 = vpop.f32.mrf.mxu0
      %v3737 = vadd.f32 0.0, %v3736
      %3738 = vmatmul.f32.gmra.mxu0 %v3380
      %v3739 = vpop.f32.mrf.mxu0
      %v3740 = vadd.f32 0.0, %v3739
      %3741 = vmatmul.f32.gmra.mxu0 %v3389
      %v3742 = vpop.f32.mrf.mxu0
      %v3743 = vadd.f32 0.0, %v3742
      %3744 = vmatmul.f32.gmra.mxu0 %v3398
      %v3745 = vpop.f32.mrf.mxu0
      %v3746 = vadd.f32 0.0, %v3745
      %3747 = vmatmul.f32.gmra.mxu0 %v3407
      %v3748 = vpop.f32.mrf.mxu0
      %v3749 = vadd.f32 0.0, %v3748
      %3750 = vmatmul.f32.gmra.mxu0 %v3416
      %v3751 = vpop.f32.mrf.mxu0
      %v3752 = vadd.f32 0.0, %v3751
      %3753 = vmatmul.f32.gmra.mxu0 %v3425
      %v3754 = vpop.f32.mrf.mxu0
      %v3755 = vadd.f32 0.0, %v3754
      %3756 = vmatmul.f32.gmra.mxu0 %v3434
      %v3757 = vpop.f32.mrf.mxu0
      %v3758 = vadd.f32 0.0, %v3757
      %3759 = vmatmul.f32.gmra.mxu0 %v3443
      %v3760 = vpop.f32.mrf.mxu0
      %v3761 = vadd.f32 0.0, %v3760
      %3762 = vmatmul.f32.gmra.mxu0 %v3452
      %v3763 = vpop.f32.mrf.mxu0
      %v3764 = vadd.f32 0.0, %v3763
      %3765 = vmatmul.f32.gmra.mxu0 %v3461
      %v3766 = vpop.f32.mrf.mxu0
      %v3767 = vadd.f32 0.0, %v3766
      %3768 = vmatmul.f32.gmra.mxu0 %v3470
      %v3769 = vpop.f32.mrf.mxu0
      %v3770 = vadd.f32 0.0, %v3769
      %3771 = vmatmul.f32.gmra.mxu0 %v3479
      %v3772 = vpop.f32.mrf.mxu0
      %v3773 = vadd.f32 0.0, %v3772
      %3774 = vmatmul.f32.gmra.mxu0 %v3488
      %v3775 = vpop.f32.mrf.mxu0
      %v3776 = vadd.f32 0.0, %v3775
      %3777 = vmatmul.f32.gmra.mxu0 %v3497
      %v3778 = vpop.f32.mrf.mxu0
      %v3779 = vadd.f32 0.0, %v3778
      %3780 = vmatmul.f32.gmra.mxu0 %v3506
      %v3781 = vpop.f32.mrf.mxu0
      %v3782 = vadd.f32 0.0, %v3781
      %3783 = vmatmul.f32.gmra.mxu0 %v3515
      %v3784 = vpop.f32.mrf.mxu0
      %v3785 = vadd.f32 0.0, %v3784
      %3786 = vmatmul.f32.gmra.mxu0 %v3524
      %v3787 = vpop.f32.mrf.mxu0
      %v3788 = vadd.f32 0.0, %v3787
      %3789 = vdwg.mxu0
      %3790 = vmatpush.msra.mxu0 %v3564
      %3791 = vmatpush.msra.mxu0 %v3563
      %3792 = vmatpush.msra.mxu0 %v3562
      %3793 = vmatpush.msra.mxu0 %v3561
      %3794 = vmatpush.msra.mxu0 %v3560
      %3795 = vmatpush.msra.mxu0 %v3559
      %3796 = vmatpush.msra.mxu0 %v3558
      %3797 = vmatpush.msra.mxu0 %v3557
      %3798 = vmatpush.msra.mxu0 %v3556
      %3799 = vmatpush.msra.mxu0 %v3555
      %3800 = vmatpush.msra.mxu0 %v3554
      %3801 = vmatpush.msra.mxu0 %v3553
      %3802 = vmatpush.msra.mxu0 %v3552
      %3803 = vmatpush.msra.mxu0 %v3551
      %3804 = vmatpush.msra.mxu0 %v3550
      %3805 = vmatpush.msra.mxu0 %v3549
      %3806 = vmatmul.f32.gmra.mxu0 %v3246
      %v3807 = vpop.f32.mrf.mxu0
      %v3808 = vadd.f32 %v3695, %v3807
      %3809 = vmatmul.f32.gmra.mxu0 %v3255
      %v3810 = vpop.f32.mrf.mxu0
      %v3811 = vadd.f32 %v3698, %v3810
      %3812 = vmatmul.f32.gmra.mxu0 %v3264
      %v3813 = vpop.f32.mrf.mxu0
      %v3814 = vadd.f32 %v3701, %v3813
      %3815 = vmatmul.f32.gmra.mxu0 %v3273
      %v3816 = vpop.f32.mrf.mxu0
      %v3817 = vadd.f32 %v3704, %v3816
      %3818 = vmatmul.f32.gmra.mxu0 %v3282
      %v3819 = vpop.f32.mrf.mxu0
      %v3820 = vadd.f32 %v3707, %v3819
      %3821 = vmatmul.f32.gmra.mxu0 %v3291
      %v3822 = vpop.f32.mrf.mxu0
      %v3823 = vadd.f32 %v3710, %v3822
      %3824 = vmatmul.f32.gmra.mxu0 %v3300
      %v3825 = vpop.f32.mrf.mxu0
      %v3826 = vadd.f32 %v3713, %v3825
      %3827 = vmatmul.f32.gmra.mxu0 %v3309
      %v3828 = vpop.f32.mrf.mxu0
      %v3829 = vadd.f32 %v3716, %v3828
      %3830 = vmatmul.f32.gmra.mxu0 %v3318
      %v3831 = vpop.f32.mrf.mxu0
      %v3832 = vadd.f32 %v3719, %v3831
      %3833 = vmatmul.f32.gmra.mxu0 %v3327
      %v3834 = vpop.f32.mrf.mxu0
      %v3835 = vadd.f32 %v3722, %v3834
      %3836 = vmatmul.f32.gmra.mxu0 %v3336
      %v3837 = vpop.f32.mrf.mxu0
      %v3838 = vadd.f32 %v3725, %v3837
      %3839 = vmatmul.f32.gmra.mxu0 %v3345
      %v3840 = vpop.f32.mrf.mxu0
      %v3841 = vadd.f32 %v3728, %v3840
      %3842 = vmatmul.f32.gmra.mxu0 %v3354
      %v3843 = vpop.f32.mrf.mxu0
      %v3844 = vadd.f32 %v3731, %v3843
      %3845 = vmatmul.f32.gmra.mxu0 %v3363
      %v3846 = vpop.f32.mrf.mxu0
      %v3847 = vadd.f32 %v3734, %v3846
      %3848 = vmatmul.f32.gmra.mxu0 %v3372
      %v3849 = vpop.f32.mrf.mxu0
      %v3850 = vadd.f32 %v3737, %v3849
      %3851 = vmatmul.f32.gmra.mxu0 %v3381
      %v3852 = vpop.f32.mrf.mxu0
      %v3853 = vadd.f32 %v3740, %v3852
      %3854 = vmatmul.f32.gmra.mxu0 %v3390
      %v3855 = vpop.f32.mrf.mxu0
      %v3856 = vadd.f32 %v3743, %v3855
      %3857 = vmatmul.f32.gmra.mxu0 %v3399
      %v3858 = vpop.f32.mrf.mxu0
      %v3859 = vadd.f32 %v3746, %v3858
      %3860 = vmatmul.f32.gmra.mxu0 %v3408
      %v3861 = vpop.f32.mrf.mxu0
      %v3862 = vadd.f32 %v3749, %v3861
      %3863 = vmatmul.f32.gmra.mxu0 %v3417
      %v3864 = vpop.f32.mrf.mxu0
      %v3865 = vadd.f32 %v3752, %v3864
      %3866 = vmatmul.f32.gmra.mxu0 %v3426
      %v3867 = vpop.f32.mrf.mxu0
      %v3868 = vadd.f32 %v3755, %v3867
      %3869 = vmatmul.f32.gmra.mxu0 %v3435
      %v3870 = vpop.f32.mrf.mxu0
      %v3871 = vadd.f32 %v3758, %v3870
      %3872 = vmatmul.f32.gmra.mxu0 %v3444
      %v3873 = vpop.f32.mrf.mxu0
      %v3874 = vadd.f32 %v3761, %v3873
      %3875 = vmatmul.f32.gmra.mxu0 %v3453
      %v3876 = vpop.f32.mrf.mxu0
      %v3877 = vadd.f32 %v3764, %v3876
      %3878 = vmatmul.f32.gmra.mxu0 %v3462
      %v3879 = vpop.f32.mrf.mxu0
      %v3880 = vadd.f32 %v3767, %v3879
      %3881 = vmatmul.f32.gmra.mxu0 %v3471
      %v3882 = vpop.f32.mrf.mxu0
      %v3883 = vadd.f32 %v3770, %v3882
      %3884 = vmatmul.f32.gmra.mxu0 %v3480
      %v3885 = vpop.f32.mrf.mxu0
      %v3886 = vadd.f32 %v3773, %v3885
      %3887 = vmatmul.f32.gmra.mxu0 %v3489
      %v3888 = vpop.f32.mrf.mxu0
      %v3889 = vadd.f32 %v3776, %v3888
      %3890 = vmatmul.f32.gmra.mxu0 %v3498
      %v3891 = vpop.f32.mrf.mxu0
      %v3892 = vadd.f32 %v3779, %v3891
      %3893 = vmatmul.f32.gmra.mxu0 %v3507
      %v3894 = vpop.f32.mrf.mxu0
      %v3895 = vadd.f32 %v3782, %v3894
      %3896 = vmatmul.f32.gmra.mxu0 %v3516
      %v3897 = vpop.f32.mrf.mxu0
      %v3898 = vadd.f32 %v3785, %v3897
      %3899 = vmatmul.f32.gmra.mxu0 %v3525
      %v3900 = vpop.f32.mrf.mxu0
      %v3901 = vadd.f32 %v3788, %v3900
      %3902 = vdwg.mxu0
      %3903 = vmatpush.msra.mxu0 %v3580
      %3904 = vmatpush.msra.mxu0 %v3579
      %3905 = vmatpush.msra.mxu0 %v3578
      %3906 = vmatpush.msra.mxu0 %v3577
      %3907 = vmatpush.msra.mxu0 %v3576
      %3908 = vmatpush.msra.mxu0 %v3575
      %3909 = vmatpush.msra.mxu0 %v3574
      %3910 = vmatpush.msra.mxu0 %v3573
      %3911 = vmatpush.msra.mxu0 %v3572
      %3912 = vmatpush.msra.mxu0 %v3571
      %3913 = vmatpush.msra.mxu0 %v3570
      %3914 = vmatpush.msra.mxu0 %v3569
      %3915 = vmatpush.msra.mxu0 %v3568
      %3916 = vmatpush.msra.mxu0 %v3567
      %3917 = vmatpush.msra.mxu0 %v3566
      %3918 = vmatpush.msra.mxu0 %v3565
      %3919 = vmatmul.f32.gmra.mxu0 %v3247
      %v3920 = vpop.f32.mrf.mxu0
      %v3921 = vadd.f32 %v3808, %v3920
      %3922 = vmatmul.f32.gmra.mxu0 %v3256
      %v3923 = vpop.f32.mrf.mxu0
      %v3924 = vadd.f32 %v3811, %v3923
      %3925 = vmatmul.f32.gmra.mxu0 %v3265
      %v3926 = vpop.f32.mrf.mxu0
      %v3927 = vadd.f32 %v3814, %v3926
      %3928 = vmatmul.f32.gmra.mxu0 %v3274
      %v3929 = vpop.f32.mrf.mxu0
      %v3930 = vadd.f32 %v3817, %v3929
      %3931 = vmatmul.f32.gmra.mxu0 %v3283
      %v3932 = vpop.f32.mrf.mxu0
      %v3933 = vadd.f32 %v3820, %v3932
      %3934 = vmatmul.f32.gmra.mxu0 %v3292
      %v3935 = vpop.f32.mrf.mxu0
      %v3936 = vadd.f32 %v3823, %v3935
      %3937 = vmatmul.f32.gmra.mxu0 %v3301
      %v3938 = vpop.f32.mrf.mxu0
      %v3939 = vadd.f32 %v3826, %v3938
      %3940 = vmatmul.f32.gmra.mxu0 %v3310
      %v3941 = vpop.f32.mrf.mxu0
      %v3942 = vadd.f32 %v3829, %v3941
      %3943 = vmatmul.f32.gmra.mxu0 %v3319
      %v3944 = vpop.f32.mrf.mxu0
      %v3945 = vadd.f32 %v3832, %v3944
      %3946 = vmatmul.f32.gmra.mxu0 %v3328
      %v3947 = vpop.f32.mrf.mxu0
      %v3948 = vadd.f32 %v3835, %v3947
      %3949 = vmatmul.f32.gmra.mxu0 %v3337
      %v3950 = vpop.f32.mrf.mxu0
      %v3951 = vadd.f32 %v3838, %v3950
      %3952 = vmatmul.f32.gmra.mxu0 %v3346
      %v3953 = vpop.f32.mrf.mxu0
      %v3954 = vadd.f32 %v3841, %v3953
      %3955 = vmatmul.f32.gmra.mxu0 %v3355
      %v3956 = vpop.f32.mrf.mxu0
      %v3957 = vadd.f32 %v3844, %v3956
      %3958 = vmatmul.f32.gmra.mxu0 %v3364
      %v3959 = vpop.f32.mrf.mxu0
      %v3960 = vadd.f32 %v3847, %v3959
      %3961 = vmatmul.f32.gmra.mxu0 %v3373
      %v3962 = vpop.f32.mrf.mxu0
      %v3963 = vadd.f32 %v3850, %v3962
      %3964 = vmatmul.f32.gmra.mxu0 %v3382
      %v3965 = vpop.f32.mrf.mxu0
      %v3966 = vadd.f32 %v3853, %v3965
      %3967 = vmatmul.f32.gmra.mxu0 %v3391
      %v3968 = vpop.f32.mrf.mxu0
      %v3969 = vadd.f32 %v3856, %v3968
      %3970 = vmatmul.f32.gmra.mxu0 %v3400
      %v3971 = vpop.f32.mrf.mxu0
      %v3972 = vadd.f32 %v3859, %v3971
      %3973 = vmatmul.f32.gmra.mxu0 %v3409
      %v3974 = vpop.f32.mrf.mxu0
      %v3975 = vadd.f32 %v3862, %v3974
      %3976 = vmatmul.f32.gmra.mxu0 %v3418
      %v3977 = vpop.f32.mrf.mxu0
      %v3978 = vadd.f32 %v3865, %v3977
      %3979 = vmatmul.f32.gmra.mxu0 %v3427
      %v3980 = vpop.f32.mrf.mxu0
      %v3981 = vadd.f32 %v3868, %v3980
      %3982 = vmatmul.f32.gmra.mxu0 %v3436
      %v3983 = vpop.f32.mrf.mxu0
      %v3984 = vadd.f32 %v3871, %v3983
      %3985 = vmatmul.f32.gmra.mxu0 %v3445
      %v3986 = vpop.f32.mrf.mxu0
      %v3987 = vadd.f32 %v3874, %v3986
      %3988 = vmatmul.f32.gmra.mxu0 %v3454
      %v3989 = vpop.f32.mrf.mxu0
      %v3990 = vadd.f32 %v3877, %v3989
      %3991 = vmatmul.f32.gmra.mxu0 %v3463
      %v3992 = vpop.f32.mrf.mxu0
      %v3993 = vadd.f32 %v3880, %v3992
      %3994 = vmatmul.f32.gmra.mxu0 %v3472
      %v3995 = vpop.f32.mrf.mxu0
      %v3996 = vadd.f32 %v3883, %v3995
      %3997 = vmatmul.f32.gmra.mxu0 %v3481
      %v3998 = vpop.f32.mrf.mxu0
      %v3999 = vadd.f32 %v3886, %v3998
      %4000 = vmatmul.f32.gmra.mxu0 %v3490
      %v4001 = vpop.f32.mrf.mxu0
      %v4002 = vadd.f32 %v3889, %v4001
      %4003 = vmatmul.f32.gmra.mxu0 %v3499
      %v4004 = vpop.f32.mrf.mxu0
      %v4005 = vadd.f32 %v3892, %v4004
      %4006 = vmatmul.f32.gmra.mxu0 %v3508
      %v4007 = vpop.f32.mrf.mxu0
      %v4008 = vadd.f32 %v3895, %v4007
      %4009 = vmatmul.f32.gmra.mxu0 %v3517
      %v4010 = vpop.f32.mrf.mxu0
      %v4011 = vadd.f32 %v3898, %v4010
      %4012 = vmatmul.f32.gmra.mxu0 %v3526
      %v4013 = vpop.f32.mrf.mxu0
      %v4014 = vadd.f32 %v3901, %v4013
      %4015 = vdwg.mxu0
      %4016 = vmatpush.msra.mxu0 %v3596
      %4017 = vmatpush.msra.mxu0 %v3595
      %4018 = vmatpush.msra.mxu0 %v3594
      %4019 = vmatpush.msra.mxu0 %v3593
      %4020 = vmatpush.msra.mxu0 %v3592
      %4021 = vmatpush.msra.mxu0 %v3591
      %4022 = vmatpush.msra.mxu0 %v3590
      %4023 = vmatpush.msra.mxu0 %v3589
      %4024 = vmatpush.msra.mxu0 %v3588
      %4025 = vmatpush.msra.mxu0 %v3587
      %4026 = vmatpush.msra.mxu0 %v3586
      %4027 = vmatpush.msra.mxu0 %v3585
      %4028 = vmatpush.msra.mxu0 %v3584
      %4029 = vmatpush.msra.mxu0 %v3583
      %4030 = vmatpush.msra.mxu0 %v3582
      %4031 = vmatpush.msra.mxu0 %v3581
      %4032 = vmatmul.f32.gmra.mxu0 %v3248
      %v4033 = vpop.f32.mrf.mxu0
      %v4034 = vadd.f32 %v3921, %v4033
      %4035 = vmatmul.f32.gmra.mxu0 %v3257
      %v4036 = vpop.f32.mrf.mxu0
      %v4037 = vadd.f32 %v3924, %v4036
      %4038 = vmatmul.f32.gmra.mxu0 %v3266
      %v4039 = vpop.f32.mrf.mxu0
      %v4040 = vadd.f32 %v3927, %v4039
      %4041 = vmatmul.f32.gmra.mxu0 %v3275
      %v4042 = vpop.f32.mrf.mxu0
      %v4043 = vadd.f32 %v3930, %v4042
      %4044 = vmatmul.f32.gmra.mxu0 %v3284
      %v4045 = vpop.f32.mrf.mxu0
      %v4046 = vadd.f32 %v3933, %v4045
      %4047 = vmatmul.f32.gmra.mxu0 %v3293
      %v4048 = vpop.f32.mrf.mxu0
      %v4049 = vadd.f32 %v3936, %v4048
      %4050 = vmatmul.f32.gmra.mxu0 %v3302
      %v4051 = vpop.f32.mrf.mxu0
      %v4052 = vadd.f32 %v3939, %v4051
      %4053 = vmatmul.f32.gmra.mxu0 %v3311
      %v4054 = vpop.f32.mrf.mxu0
      %v4055 = vadd.f32 %v3942, %v4054
      %4056 = vmatmul.f32.gmra.mxu0 %v3320
      %v4057 = vpop.f32.mrf.mxu0
      %v4058 = vadd.f32 %v3945, %v4057
      %4059 = vmatmul.f32.gmra.mxu0 %v3329
      %v4060 = vpop.f32.mrf.mxu0
      %v4061 = vadd.f32 %v3948, %v4060
      %4062 = vmatmul.f32.gmra.mxu0 %v3338
      %v4063 = vpop.f32.mrf.mxu0
      %v4064 = vadd.f32 %v3951, %v4063
      %4065 = vmatmul.f32.gmra.mxu0 %v3347
      %v4066 = vpop.f32.mrf.mxu0
      %v4067 = vadd.f32 %v3954, %v4066
      %4068 = vmatmul.f32.gmra.mxu0 %v3356
      %v4069 = vpop.f32.mrf.mxu0
      %v4070 = vadd.f32 %v3957, %v4069
      %4071 = vmatmul.f32.gmra.mxu0 %v3365
      %v4072 = vpop.f32.mrf.mxu0
      %v4073 = vadd.f32 %v3960, %v4072
      %4074 = vmatmul.f32.gmra.mxu0 %v3374
      %v4075 = vpop.f32.mrf.mxu0
      %v4076 = vadd.f32 %v3963, %v4075
      %4077 = vmatmul.f32.gmra.mxu0 %v3383
      %v4078 = vpop.f32.mrf.mxu0
      %v4079 = vadd.f32 %v3966, %v4078
      %4080 = vmatmul.f32.gmra.mxu0 %v3392
      %v4081 = vpop.f32.mrf.mxu0
      %v4082 = vadd.f32 %v3969, %v4081
      %4083 = vmatmul.f32.gmra.mxu0 %v3401
      %v4084 = vpop.f32.mrf.mxu0
      %v4085 = vadd.f32 %v3972, %v4084
      %4086 = vmatmul.f32.gmra.mxu0 %v3410
      %v4087 = vpop.f32.mrf.mxu0
      %v4088 = vadd.f32 %v3975, %v4087
      %4089 = vmatmul.f32.gmra.mxu0 %v3419
      %v4090 = vpop.f32.mrf.mxu0
      %v4091 = vadd.f32 %v3978, %v4090
      %4092 = vmatmul.f32.gmra.mxu0 %v3428
      %v4093 = vpop.f32.mrf.mxu0
      %v4094 = vadd.f32 %v3981, %v4093
      %4095 = vmatmul.f32.gmra.mxu0 %v3437
      %v4096 = vpop.f32.mrf.mxu0
      %v4097 = vadd.f32 %v3984, %v4096
      %4098 = vmatmul.f32.gmra.mxu0 %v3446
      %v4099 = vpop.f32.mrf.mxu0
      %v4100 = vadd.f32 %v3987, %v4099
      %4101 = vmatmul.f32.gmra.mxu0 %v3455
      %v4102 = vpop.f32.mrf.mxu0
      %v4103 = vadd.f32 %v3990, %v4102
      %4104 = vmatmul.f32.gmra.mxu0 %v3464
      %v4105 = vpop.f32.mrf.mxu0
      %v4106 = vadd.f32 %v3993, %v4105
      %4107 = vmatmul.f32.gmra.mxu0 %v3473
      %v4108 = vpop.f32.mrf.mxu0
      %v4109 = vadd.f32 %v3996, %v4108
      %4110 = vmatmul.f32.gmra.mxu0 %v3482
      %v4111 = vpop.f32.mrf.mxu0
      %v4112 = vadd.f32 %v3999, %v4111
      %4113 = vmatmul.f32.gmra.mxu0 %v3491
      %v4114 = vpop.f32.mrf.mxu0
      %v4115 = vadd.f32 %v4002, %v4114
      %4116 = vmatmul.f32.gmra.mxu0 %v3500
      %v4117 = vpop.f32.mrf.mxu0
      %v4118 = vadd.f32 %v4005, %v4117
      %4119 = vmatmul.f32.gmra.mxu0 %v3509
      %v4120 = vpop.f32.mrf.mxu0
      %v4121 = vadd.f32 %v4008, %v4120
      %4122 = vmatmul.f32.gmra.mxu0 %v3518
      %v4123 = vpop.f32.mrf.mxu0
      %v4124 = vadd.f32 %v4011, %v4123
      %4125 = vmatmul.f32.gmra.mxu0 %v3527
      %v4126 = vpop.f32.mrf.mxu0
      %v4127 = vadd.f32 %v4014, %v4126
      %4128 = vdwg.mxu0
      %4129 = vmatpush.msra.mxu0 %v3612
      %4130 = vmatpush.msra.mxu0 %v3611
      %4131 = vmatpush.msra.mxu0 %v3610
      %4132 = vmatpush.msra.mxu0 %v3609
      %4133 = vmatpush.msra.mxu0 %v3608
      %4134 = vmatpush.msra.mxu0 %v3607
      %4135 = vmatpush.msra.mxu0 %v3606
      %4136 = vmatpush.msra.mxu0 %v3605
      %4137 = vmatpush.msra.mxu0 %v3604
      %4138 = vmatpush.msra.mxu0 %v3603
      %4139 = vmatpush.msra.mxu0 %v3602
      %4140 = vmatpush.msra.mxu0 %v3601
      %4141 = vmatpush.msra.mxu0 %v3600
      %4142 = vmatpush.msra.mxu0 %v3599
      %4143 = vmatpush.msra.mxu0 %v3598
      %4144 = vmatpush.msra.mxu0 %v3597
      %4145 = vmatmul.f32.gmra.mxu0 %v3249
      %v4146 = vpop.f32.mrf.mxu0
      %v4147 = vadd.f32 %v4034, %v4146
      %4148 = vmatmul.f32.gmra.mxu0 %v3258
      %v4149 = vpop.f32.mrf.mxu0
      %v4150 = vadd.f32 %v4037, %v4149
      %4151 = vmatmul.f32.gmra.mxu0 %v3267
      %v4152 = vpop.f32.mrf.mxu0
      %v4153 = vadd.f32 %v4040, %v4152
      %4154 = vmatmul.f32.gmra.mxu0 %v3276
      %v4155 = vpop.f32.mrf.mxu0
      %v4156 = vadd.f32 %v4043, %v4155
      %4157 = vmatmul.f32.gmra.mxu0 %v3285
      %v4158 = vpop.f32.mrf.mxu0
      %v4159 = vadd.f32 %v4046, %v4158
      %4160 = vmatmul.f32.gmra.mxu0 %v3294
      %v4161 = vpop.f32.mrf.mxu0
      %v4162 = vadd.f32 %v4049, %v4161
      %4163 = vmatmul.f32.gmra.mxu0 %v3303
      %v4164 = vpop.f32.mrf.mxu0
      %v4165 = vadd.f32 %v4052, %v4164
      %4166 = vmatmul.f32.gmra.mxu0 %v3312
      %v4167 = vpop.f32.mrf.mxu0
      %v4168 = vadd.f32 %v4055, %v4167
      %4169 = vmatmul.f32.gmra.mxu0 %v3321
      %v4170 = vpop.f32.mrf.mxu0
      %v4171 = vadd.f32 %v4058, %v4170
      %4172 = vmatmul.f32.gmra.mxu0 %v3330
      %v4173 = vpop.f32.mrf.mxu0
      %v4174 = vadd.f32 %v4061, %v4173
      %4175 = vmatmul.f32.gmra.mxu0 %v3339
      %v4176 = vpop.f32.mrf.mxu0
      %v4177 = vadd.f32 %v4064, %v4176
      %4178 = vmatmul.f32.gmra.mxu0 %v3348
      %v4179 = vpop.f32.mrf.mxu0
      %v4180 = vadd.f32 %v4067, %v4179
      %4181 = vmatmul.f32.gmra.mxu0 %v3357
      %v4182 = vpop.f32.mrf.mxu0
      %v4183 = vadd.f32 %v4070, %v4182
      %4184 = vmatmul.f32.gmra.mxu0 %v3366
      %v4185 = vpop.f32.mrf.mxu0
      %v4186 = vadd.f32 %v4073, %v4185
      %4187 = vmatmul.f32.gmra.mxu0 %v3375
      %v4188 = vpop.f32.mrf.mxu0
      %v4189 = vadd.f32 %v4076, %v4188
      %4190 = vmatmul.f32.gmra.mxu0 %v3384
      %v4191 = vpop.f32.mrf.mxu0
      %v4192 = vadd.f32 %v4079, %v4191
      %4193 = vmatmul.f32.gmra.mxu0 %v3393
      %v4194 = vpop.f32.mrf.mxu0
      %v4195 = vadd.f32 %v4082, %v4194
      %4196 = vmatmul.f32.gmra.mxu0 %v3402
      %v4197 = vpop.f32.mrf.mxu0
      %v4198 = vadd.f32 %v4085, %v4197
      %4199 = vmatmul.f32.gmra.mxu0 %v3411
      %v4200 = vpop.f32.mrf.mxu0
      %v4201 = vadd.f32 %v4088, %v4200
      %4202 = vmatmul.f32.gmra.mxu0 %v3420
      %v4203 = vpop.f32.mrf.mxu0
      %v4204 = vadd.f32 %v4091, %v4203
      %4205 = vmatmul.f32.gmra.mxu0 %v3429
      %v4206 = vpop.f32.mrf.mxu0
      %v4207 = vadd.f32 %v4094, %v4206
      %4208 = vmatmul.f32.gmra.mxu0 %v3438
      %v4209 = vpop.f32.mrf.mxu0
      %v4210 = vadd.f32 %v4097, %v4209
      %4211 = vmatmul.f32.gmra.mxu0 %v3447
      %v4212 = vpop.f32.mrf.mxu0
      %v4213 = vadd.f32 %v4100, %v4212
      %4214 = vmatmul.f32.gmra.mxu0 %v3456
      %v4215 = vpop.f32.mrf.mxu0
      %v4216 = vadd.f32 %v4103, %v4215
      %4217 = vmatmul.f32.gmra.mxu0 %v3465
      %v4218 = vpop.f32.mrf.mxu0
      %v4219 = vadd.f32 %v4106, %v4218
      %4220 = vmatmul.f32.gmra.mxu0 %v3474
      %v4221 = vpop.f32.mrf.mxu0
      %v4222 = vadd.f32 %v4109, %v4221
      %4223 = vmatmul.f32.gmra.mxu0 %v3483
      %v4224 = vpop.f32.mrf.mxu0
      %v4225 = vadd.f32 %v4112, %v4224
      %4226 = vmatmul.f32.gmra.mxu0 %v3492
      %v4227 = vpop.f32.mrf.mxu0
      %v4228 = vadd.f32 %v4115, %v4227
      %4229 = vmatmul.f32.gmra.mxu0 %v3501
      %v4230 = vpop.f32.mrf.mxu0
      %v4231 = vadd.f32 %v4118, %v4230
      %4232 = vmatmul.f32.gmra.mxu0 %v3510
      %v4233 = vpop.f32.mrf.mxu0
      %v4234 = vadd.f32 %v4121, %v4233
      %4235 = vmatmul.f32.gmra.mxu0 %v3519
      %v4236 = vpop.f32.mrf.mxu0
      %v4237 = vadd.f32 %v4124, %v4236
      %4238 = vmatmul.f32.gmra.mxu0 %v3528
      %v4239 = vpop.f32.mrf.mxu0
      %v4240 = vadd.f32 %v4127, %v4239
      %4241 = vdwg.mxu0
      %4242 = vmatpush.msra.mxu0 %v3628
      %4243 = vmatpush.msra.mxu0 %v3627
      %4244 = vmatpush.msra.mxu0 %v3626
      %4245 = vmatpush.msra.mxu0 %v3625
      %4246 = vmatpush.msra.mxu0 %v3624
      %4247 = vmatpush.msra.mxu0 %v3623
      %4248 = vmatpush.msra.mxu0 %v3622
      %4249 = vmatpush.msra.mxu0 %v3621
      %4250 = vmatpush.msra.mxu0 %v3620
      %4251 = vmatpush.msra.mxu0 %v3619
      %4252 = vmatpush.msra.mxu0 %v3618
      %4253 = vmatpush.msra.mxu0 %v3617
      %4254 = vmatpush.msra.mxu0 %v3616
      %4255 = vmatpush.msra.mxu0 %v3615
      %4256 = vmatpush.msra.mxu0 %v3614
      %4257 = vmatpush.msra.mxu0 %v3613
      %4258 = vmatmul.f32.gmra.mxu0 %v3250
      %v4259 = vpop.f32.mrf.mxu0
      %v4260 = vadd.f32 %v4147, %v4259
      %4261 = vmatmul.f32.gmra.mxu0 %v3259
      %v4262 = vpop.f32.mrf.mxu0
      %v4263 = vadd.f32 %v4150, %v4262
      %4264 = vmatmul.f32.gmra.mxu0 %v3268
      %v4265 = vpop.f32.mrf.mxu0
      %v4266 = vadd.f32 %v4153, %v4265
      %4267 = vmatmul.f32.gmra.mxu0 %v3277
      %v4268 = vpop.f32.mrf.mxu0
      %v4269 = vadd.f32 %v4156, %v4268
      %4270 = vmatmul.f32.gmra.mxu0 %v3286
      %v4271 = vpop.f32.mrf.mxu0
      %v4272 = vadd.f32 %v4159, %v4271
      %4273 = vmatmul.f32.gmra.mxu0 %v3295
      %v4274 = vpop.f32.mrf.mxu0
      %v4275 = vadd.f32 %v4162, %v4274
      %4276 = vmatmul.f32.gmra.mxu0 %v3304
      %v4277 = vpop.f32.mrf.mxu0
      %v4278 = vadd.f32 %v4165, %v4277
      %4279 = vmatmul.f32.gmra.mxu0 %v3313
      %v4280 = vpop.f32.mrf.mxu0
      %v4281 = vadd.f32 %v4168, %v4280
      %4282 = vmatmul.f32.gmra.mxu0 %v3322
      %v4283 = vpop.f32.mrf.mxu0
      %v4284 = vadd.f32 %v4171, %v4283
      %4285 = vmatmul.f32.gmra.mxu0 %v3331
      %v4286 = vpop.f32.mrf.mxu0
      %v4287 = vadd.f32 %v4174, %v4286
      %4288 = vmatmul.f32.gmra.mxu0 %v3340
      %v4289 = vpop.f32.mrf.mxu0
      %v4290 = vadd.f32 %v4177, %v4289
      %4291 = vmatmul.f32.gmra.mxu0 %v3349
      %v4292 = vpop.f32.mrf.mxu0
      %v4293 = vadd.f32 %v4180, %v4292
      %4294 = vmatmul.f32.gmra.mxu0 %v3358
      %v4295 = vpop.f32.mrf.mxu0
      %v4296 = vadd.f32 %v4183, %v4295
      %4297 = vmatmul.f32.gmra.mxu0 %v3367
      %v4298 = vpop.f32.mrf.mxu0
      %v4299 = vadd.f32 %v4186, %v4298
      %4300 = vmatmul.f32.gmra.mxu0 %v3376
      %v4301 = vpop.f32.mrf.mxu0
      %v4302 = vadd.f32 %v4189, %v4301
      %4303 = vmatmul.f32.gmra.mxu0 %v3385
      %v4304 = vpop.f32.mrf.mxu0
      %v4305 = vadd.f32 %v4192, %v4304
      %4306 = vmatmul.f32.gmra.mxu0 %v3394
      %v4307 = vpop.f32.mrf.mxu0
      %v4308 = vadd.f32 %v4195, %v4307
      %4309 = vmatmul.f32.gmra.mxu0 %v3403
      %v4310 = vpop.f32.mrf.mxu0
      %v4311 = vadd.f32 %v4198, %v4310
      %4312 = vmatmul.f32.gmra.mxu0 %v3412
      %v4313 = vpop.f32.mrf.mxu0
      %v4314 = vadd.f32 %v4201, %v4313
      %4315 = vmatmul.f32.gmra.mxu0 %v3421
      %v4316 = vpop.f32.mrf.mxu0
      %v4317 = vadd.f32 %v4204, %v4316
      %4318 = vmatmul.f32.gmra.mxu0 %v3430
      %v4319 = vpop.f32.mrf.mxu0
      %v4320 = vadd.f32 %v4207, %v4319
      %4321 = vmatmul.f32.gmra.mxu0 %v3439
      %v4322 = vpop.f32.mrf.mxu0
      %v4323 = vadd.f32 %v4210, %v4322
      %4324 = vmatmul.f32.gmra.mxu0 %v3448
      %v4325 = vpop.f32.mrf.mxu0
      %v4326 = vadd.f32 %v4213, %v4325
      %4327 = vmatmul.f32.gmra.mxu0 %v3457
      %v4328 = vpop.f32.mrf.mxu0
      %v4329 = vadd.f32 %v4216, %v4328
      %4330 = vmatmul.f32.gmra.mxu0 %v3466
      %v4331 = vpop.f32.mrf.mxu0
      %v4332 = vadd.f32 %v4219, %v4331
      %4333 = vmatmul.f32.gmra.mxu0 %v3475
      %v4334 = vpop.f32.mrf.mxu0
      %v4335 = vadd.f32 %v4222, %v4334
      %4336 = vmatmul.f32.gmra.mxu0 %v3484
      %v4337 = vpop.f32.mrf.mxu0
      %v4338 = vadd.f32 %v4225, %v4337
      %4339 = vmatmul.f32.gmra.mxu0 %v3493
      %v4340 = vpop.f32.mrf.mxu0
      %v4341 = vadd.f32 %v4228, %v4340
      %4342 = vmatmul.f32.gmra.mxu0 %v3502
      %v4343 = vpop.f32.mrf.mxu0
      %v4344 = vadd.f32 %v4231, %v4343
      %4345 = vmatmul.f32.gmra.mxu0 %v3511
      %v4346 = vpop.f32.mrf.mxu0
      %v4347 = vadd.f32 %v4234, %v4346
      %4348 = vmatmul.f32.gmra.mxu0 %v3520
      %v4349 = vpop.f32.mrf.mxu0
      %v4350 = vadd.f32 %v4237, %v4349
      %4351 = vmatmul.f32.gmra.mxu0 %v3529
      %v4352 = vpop.f32.mrf.mxu0
      %v4353 = vadd.f32 %v4240, %v4352
      %4354 = vdwg.mxu0
      %4355 = vmatpush.msra.mxu0 %v3644
      %4356 = vmatpush.msra.mxu0 %v3643
      %4357 = vmatpush.msra.mxu0 %v3642
      %4358 = vmatpush.msra.mxu0 %v3641
      %4359 = vmatpush.msra.mxu0 %v3640
      %4360 = vmatpush.msra.mxu0 %v3639
      %4361 = vmatpush.msra.mxu0 %v3638
      %4362 = vmatpush.msra.mxu0 %v3637
      %4363 = vmatpush.msra.mxu0 %v3636
      %4364 = vmatpush.msra.mxu0 %v3635
      %4365 = vmatpush.msra.mxu0 %v3634
      %4366 = vmatpush.msra.mxu0 %v3633
      %4367 = vmatpush.msra.mxu0 %v3632
      %4368 = vmatpush.msra.mxu0 %v3631
      %4369 = vmatpush.msra.mxu0 %v3630
      %4370 = vmatpush.msra.mxu0 %v3629
      %4371 = vmatmul.f32.gmra.mxu0 %v3251
      %v4372 = vpop.f32.mrf.mxu0
      %v4373 = vadd.f32 %v4260, %v4372
      %4374 = vmatmul.f32.gmra.mxu0 %v3260
      %v4375 = vpop.f32.mrf.mxu0
      %v4376 = vadd.f32 %v4263, %v4375
      %4377 = vmatmul.f32.gmra.mxu0 %v3269
      %v4378 = vpop.f32.mrf.mxu0
      %v4379 = vadd.f32 %v4266, %v4378
      %4380 = vmatmul.f32.gmra.mxu0 %v3278
      %v4381 = vpop.f32.mrf.mxu0
      %v4382 = vadd.f32 %v4269, %v4381
      %4383 = vmatmul.f32.gmra.mxu0 %v3287
      %v4384 = vpop.f32.mrf.mxu0
      %v4385 = vadd.f32 %v4272, %v4384
      %4386 = vmatmul.f32.gmra.mxu0 %v3296
      %v4387 = vpop.f32.mrf.mxu0
      %v4388 = vadd.f32 %v4275, %v4387
      %4389 = vmatmul.f32.gmra.mxu0 %v3305
      %v4390 = vpop.f32.mrf.mxu0
      %v4391 = vadd.f32 %v4278, %v4390
      %4392 = vmatmul.f32.gmra.mxu0 %v3314
      %v4393 = vpop.f32.mrf.mxu0
      %v4394 = vadd.f32 %v4281, %v4393
      %4395 = vmatmul.f32.gmra.mxu0 %v3323
      %v4396 = vpop.f32.mrf.mxu0
      %v4397 = vadd.f32 %v4284, %v4396
      %4398 = vmatmul.f32.gmra.mxu0 %v3332
      %v4399 = vpop.f32.mrf.mxu0
      %v4400 = vadd.f32 %v4287, %v4399
      %4401 = vmatmul.f32.gmra.mxu0 %v3341
      %v4402 = vpop.f32.mrf.mxu0
      %v4403 = vadd.f32 %v4290, %v4402
      %4404 = vmatmul.f32.gmra.mxu0 %v3350
      %v4405 = vpop.f32.mrf.mxu0
      %v4406 = vadd.f32 %v4293, %v4405
      %4407 = vmatmul.f32.gmra.mxu0 %v3359
      %v4408 = vpop.f32.mrf.mxu0
      %v4409 = vadd.f32 %v4296, %v4408
      %4410 = vmatmul.f32.gmra.mxu0 %v3368
      %v4411 = vpop.f32.mrf.mxu0
      %v4412 = vadd.f32 %v4299, %v4411
      %4413 = vmatmul.f32.gmra.mxu0 %v3377
      %v4414 = vpop.f32.mrf.mxu0
      %v4415 = vadd.f32 %v4302, %v4414
      %4416 = vmatmul.f32.gmra.mxu0 %v3386
      %v4417 = vpop.f32.mrf.mxu0
      %v4418 = vadd.f32 %v4305, %v4417
      %4419 = vmatmul.f32.gmra.mxu0 %v3395
      %v4420 = vpop.f32.mrf.mxu0
      %v4421 = vadd.f32 %v4308, %v4420
      %4422 = vmatmul.f32.gmra.mxu0 %v3404
      %v4423 = vpop.f32.mrf.mxu0
      %v4424 = vadd.f32 %v4311, %v4423
      %4425 = vmatmul.f32.gmra.mxu0 %v3413
      %v4426 = vpop.f32.mrf.mxu0
      %v4427 = vadd.f32 %v4314, %v4426
      %4428 = vmatmul.f32.gmra.mxu0 %v3422
      %v4429 = vpop.f32.mrf.mxu0
      %v4430 = vadd.f32 %v4317, %v4429
      %4431 = vmatmul.f32.gmra.mxu0 %v3431
      %v4432 = vpop.f32.mrf.mxu0
      %v4433 = vadd.f32 %v4320, %v4432
      %4434 = vmatmul.f32.gmra.mxu0 %v3440
      %v4435 = vpop.f32.mrf.mxu0
      %v4436 = vadd.f32 %v4323, %v4435
      %4437 = vmatmul.f32.gmra.mxu0 %v3449
      %v4438 = vpop.f32.mrf.mxu0
      %v4439 = vadd.f32 %v4326, %v4438
      %4440 = vmatmul.f32.gmra.mxu0 %v3458
      %v4441 = vpop.f32.mrf.mxu0
      %v4442 = vadd.f32 %v4329, %v4441
      %4443 = vmatmul.f32.gmra.mxu0 %v3467
      %v4444 = vpop.f32.mrf.mxu0
      %v4445 = vadd.f32 %v4332, %v4444
      %4446 = vmatmul.f32.gmra.mxu0 %v3476
      %v4447 = vpop.f32.mrf.mxu0
      %v4448 = vadd.f32 %v4335, %v4447
      %4449 = vmatmul.f32.gmra.mxu0 %v3485
      %v4450 = vpop.f32.mrf.mxu0
      %v4451 = vadd.f32 %v4338, %v4450
      %4452 = vmatmul.f32.gmra.mxu0 %v3494
      %v4453 = vpop.f32.mrf.mxu0
      %v4454 = vadd.f32 %v4341, %v4453
      %4455 = vmatmul.f32.gmra.mxu0 %v3503
      %v4456 = vpop.f32.mrf.mxu0
      %v4457 = vadd.f32 %v4344, %v4456
      %4458 = vmatmul.f32.gmra.mxu0 %v3512
      %v4459 = vpop.f32.mrf.mxu0
      %v4460 = vadd.f32 %v4347, %v4459
      %4461 = vmatmul.f32.gmra.mxu0 %v3521
      %v4462 = vpop.f32.mrf.mxu0
      %v4463 = vadd.f32 %v4350, %v4462
      %4464 = vmatmul.f32.gmra.mxu0 %v3530
      %v4465 = vpop.f32.mrf.mxu0
      %v4466 = vadd.f32 %v4353, %v4465
      %4467 = vdwg.mxu0
      %4468 = vmatpush.msra.mxu0 %v3660
      %4469 = vmatpush.msra.mxu0 %v3659
      %4470 = vmatpush.msra.mxu0 %v3658
      %4471 = vmatpush.msra.mxu0 %v3657
      %4472 = vmatpush.msra.mxu0 %v3656
      %4473 = vmatpush.msra.mxu0 %v3655
      %4474 = vmatpush.msra.mxu0 %v3654
      %4475 = vmatpush.msra.mxu0 %v3653
      %4476 = vmatpush.msra.mxu0 %v3652
      %4477 = vmatpush.msra.mxu0 %v3651
      %4478 = vmatpush.msra.mxu0 %v3650
      %4479 = vmatpush.msra.mxu0 %v3649
      %4480 = vmatpush.msra.mxu0 %v3648
      %4481 = vmatpush.msra.mxu0 %v3647
      %4482 = vmatpush.msra.mxu0 %v3646
      %4483 = vmatpush.msra.mxu0 %v3645
      %4484 = vmatmul.f32.gmra.mxu0 %v3252
      %v4485 = vpop.f32.mrf.mxu0
      %v4486 = vadd.f32 %v4373, %v4485
      %4487 = vmatmul.f32.gmra.mxu0 %v3261
      %v4488 = vpop.f32.mrf.mxu0
      %v4489 = vadd.f32 %v4376, %v4488
      %4490 = vmatmul.f32.gmra.mxu0 %v3270
      %v4491 = vpop.f32.mrf.mxu0
      %v4492 = vadd.f32 %v4379, %v4491
      %4493 = vmatmul.f32.gmra.mxu0 %v3279
      %v4494 = vpop.f32.mrf.mxu0
      %v4495 = vadd.f32 %v4382, %v4494
      %4496 = vmatmul.f32.gmra.mxu0 %v3288
      %v4497 = vpop.f32.mrf.mxu0
      %v4498 = vadd.f32 %v4385, %v4497
      %4499 = vmatmul.f32.gmra.mxu0 %v3297
      %v4500 = vpop.f32.mrf.mxu0
      %v4501 = vadd.f32 %v4388, %v4500
      %4502 = vmatmul.f32.gmra.mxu0 %v3306
      %v4503 = vpop.f32.mrf.mxu0
      %v4504 = vadd.f32 %v4391, %v4503
      %4505 = vmatmul.f32.gmra.mxu0 %v3315
      %v4506 = vpop.f32.mrf.mxu0
      %v4507 = vadd.f32 %v4394, %v4506
      %4508 = vmatmul.f32.gmra.mxu0 %v3324
      %v4509 = vpop.f32.mrf.mxu0
      %v4510 = vadd.f32 %v4397, %v4509
      %4511 = vmatmul.f32.gmra.mxu0 %v3333
      %v4512 = vpop.f32.mrf.mxu0
      %v4513 = vadd.f32 %v4400, %v4512
      %4514 = vmatmul.f32.gmra.mxu0 %v3342
      %v4515 = vpop.f32.mrf.mxu0
      %v4516 = vadd.f32 %v4403, %v4515
      %4517 = vmatmul.f32.gmra.mxu0 %v3351
      %v4518 = vpop.f32.mrf.mxu0
      %v4519 = vadd.f32 %v4406, %v4518
      %4520 = vmatmul.f32.gmra.mxu0 %v3360
      %v4521 = vpop.f32.mrf.mxu0
      %v4522 = vadd.f32 %v4409, %v4521
      %4523 = vmatmul.f32.gmra.mxu0 %v3369
      %v4524 = vpop.f32.mrf.mxu0
      %v4525 = vadd.f32 %v4412, %v4524
      %4526 = vmatmul.f32.gmra.mxu0 %v3378
      %v4527 = vpop.f32.mrf.mxu0
      %v4528 = vadd.f32 %v4415, %v4527
      %4529 = vmatmul.f32.gmra.mxu0 %v3387
      %v4530 = vpop.f32.mrf.mxu0
      %v4531 = vadd.f32 %v4418, %v4530
      %4532 = vmatmul.f32.gmra.mxu0 %v3396
      %v4533 = vpop.f32.mrf.mxu0
      %v4534 = vadd.f32 %v4421, %v4533
      %4535 = vmatmul.f32.gmra.mxu0 %v3405
      %v4536 = vpop.f32.mrf.mxu0
      %v4537 = vadd.f32 %v4424, %v4536
      %4538 = vmatmul.f32.gmra.mxu0 %v3414
      %v4539 = vpop.f32.mrf.mxu0
      %v4540 = vadd.f32 %v4427, %v4539
      %4541 = vmatmul.f32.gmra.mxu0 %v3423
      %v4542 = vpop.f32.mrf.mxu0
      %v4543 = vadd.f32 %v4430, %v4542
      %4544 = vmatmul.f32.gmra.mxu0 %v3432
      %v4545 = vpop.f32.mrf.mxu0
      %v4546 = vadd.f32 %v4433, %v4545
      %4547 = vmatmul.f32.gmra.mxu0 %v3441
      %v4548 = vpop.f32.mrf.mxu0
      %v4549 = vadd.f32 %v4436, %v4548
      %4550 = vmatmul.f32.gmra.mxu0 %v3450
      %v4551 = vpop.f32.mrf.mxu0
      %v4552 = vadd.f32 %v4439, %v4551
      %4553 = vmatmul.f32.gmra.mxu0 %v3459
      %v4554 = vpop.f32.mrf.mxu0
      %v4555 = vadd.f32 %v4442, %v4554
      %4556 = vmatmul.f32.gmra.mxu0 %v3468
      %v4557 = vpop.f32.mrf.mxu0
      %v4558 = vadd.f32 %v4445, %v4557
      %4559 = vmatmul.f32.gmra.mxu0 %v3477
      %v4560 = vpop.f32.mrf.mxu0
      %v4561 = vadd.f32 %v4448, %v4560
      %4562 = vmatmul.f32.gmra.mxu0 %v3486
      %v4563 = vpop.f32.mrf.mxu0
      %v4564 = vadd.f32 %v4451, %v4563
      %4565 = vmatmul.f32.gmra.mxu0 %v3495
      %v4566 = vpop.f32.mrf.mxu0
      %v4567 = vadd.f32 %v4454, %v4566
      %4568 = vmatmul.f32.gmra.mxu0 %v3504
      %v4569 = vpop.f32.mrf.mxu0
      %v4570 = vadd.f32 %v4457, %v4569
      %4571 = vmatmul.f32.gmra.mxu0 %v3513
      %v4572 = vpop.f32.mrf.mxu0
      %v4573 = vadd.f32 %v4460, %v4572
      %4574 = vmatmul.f32.gmra.mxu0 %v3522
      %v4575 = vpop.f32.mrf.mxu0
      %v4576 = vadd.f32 %v4463, %v4575
      %4577 = vmatmul.f32.gmra.mxu0 %v3531
      %v4578 = vpop.f32.mrf.mxu0
      %v4579 = vadd.f32 %v4466, %v4578
      %4580 = vdwg.mxu0
      %4581 = vmatpush.msra.mxu0 %v3676
      %4582 = vmatpush.msra.mxu0 %v3675
      %4583 = vmatpush.msra.mxu0 %v3674
      %4584 = vmatpush.msra.mxu0 %v3673
      %4585 = vmatpush.msra.mxu0 %v3672
      %4586 = vmatpush.msra.mxu0 %v3671
      %4587 = vmatpush.msra.mxu0 %v3670
      %4588 = vmatpush.msra.mxu0 %v3669
      %4589 = vmatpush.msra.mxu0 %v3668
      %4590 = vmatpush.msra.mxu0 %v3667
      %4591 = vmatpush.msra.mxu0 %v3666
      %4592 = vmatpush.msra.mxu0 %v3665
      %4593 = vmatpush.msra.mxu0 %v3664
      %4594 = vmatpush.msra.mxu0 %v3663
      %4595 = vmatpush.msra.mxu0 %v3662
      %4596 = vmatpush.msra.mxu0 %v3661
      %4597 = vmatmul.f32.gmra.mxu0 %v3253
      %v4598 = vpop.f32.mrf.mxu0
      %v4599 = vadd.f32 %v4486, %v4598
      %4600 = vmatmul.f32.gmra.mxu0 %v3262
      %v4601 = vpop.f32.mrf.mxu0
      %v4602 = vadd.f32 %v4489, %v4601
      %4603 = vmatmul.f32.gmra.mxu0 %v3271
      %v4604 = vpop.f32.mrf.mxu0
      %v4605 = vadd.f32 %v4492, %v4604
      %4606 = vmatmul.f32.gmra.mxu0 %v3280
      %v4607 = vpop.f32.mrf.mxu0
      %v4608 = vadd.f32 %v4495, %v4607
      %4609 = vmatmul.f32.gmra.mxu0 %v3289
      %v4610 = vpop.f32.mrf.mxu0
      %v4611 = vadd.f32 %v4498, %v4610
      %4612 = vmatmul.f32.gmra.mxu0 %v3298
      %v4613 = vpop.f32.mrf.mxu0
      %v4614 = vadd.f32 %v4501, %v4613
      %4615 = vmatmul.f32.gmra.mxu0 %v3307
      %v4616 = vpop.f32.mrf.mxu0
      %v4617 = vadd.f32 %v4504, %v4616
      %4618 = vmatmul.f32.gmra.mxu0 %v3316
      %v4619 = vpop.f32.mrf.mxu0
      %v4620 = vadd.f32 %v4507, %v4619
      %4621 = vmatmul.f32.gmra.mxu0 %v3325
      %v4622 = vpop.f32.mrf.mxu0
      %v4623 = vadd.f32 %v4510, %v4622
      %4624 = vmatmul.f32.gmra.mxu0 %v3334
      %v4625 = vpop.f32.mrf.mxu0
      %v4626 = vadd.f32 %v4513, %v4625
      %4627 = vmatmul.f32.gmra.mxu0 %v3343
      %v4628 = vpop.f32.mrf.mxu0
      %v4629 = vadd.f32 %v4516, %v4628
      %4630 = vmatmul.f32.gmra.mxu0 %v3352
      %v4631 = vpop.f32.mrf.mxu0
      %v4632 = vadd.f32 %v4519, %v4631
      %4633 = vmatmul.f32.gmra.mxu0 %v3361
      %v4634 = vpop.f32.mrf.mxu0
      %v4635 = vadd.f32 %v4522, %v4634
      %4636 = vmatmul.f32.gmra.mxu0 %v3370
      %v4637 = vpop.f32.mrf.mxu0
      %v4638 = vadd.f32 %v4525, %v4637
      %4639 = vmatmul.f32.gmra.mxu0 %v3379
      %v4640 = vpop.f32.mrf.mxu0
      %v4641 = vadd.f32 %v4528, %v4640
      %4642 = vmatmul.f32.gmra.mxu0 %v3388
      %v4643 = vpop.f32.mrf.mxu0
      %v4644 = vadd.f32 %v4531, %v4643
      %4645 = vmatmul.f32.gmra.mxu0 %v3397
      %v4646 = vpop.f32.mrf.mxu0
      %v4647 = vadd.f32 %v4534, %v4646
      %4648 = vmatmul.f32.gmra.mxu0 %v3406
      %v4649 = vpop.f32.mrf.mxu0
      %v4650 = vadd.f32 %v4537, %v4649
      %4651 = vmatmul.f32.gmra.mxu0 %v3415
      %v4652 = vpop.f32.mrf.mxu0
      %v4653 = vadd.f32 %v4540, %v4652
      %4654 = vmatmul.f32.gmra.mxu0 %v3424
      %v4655 = vpop.f32.mrf.mxu0
      %v4656 = vadd.f32 %v4543, %v4655
      %4657 = vmatmul.f32.gmra.mxu0 %v3433
      %v4658 = vpop.f32.mrf.mxu0
      %v4659 = vadd.f32 %v4546, %v4658
      %4660 = vmatmul.f32.gmra.mxu0 %v3442
      %v4661 = vpop.f32.mrf.mxu0
      %v4662 = vadd.f32 %v4549, %v4661
      %4663 = vmatmul.f32.gmra.mxu0 %v3451
      %v4664 = vpop.f32.mrf.mxu0
      %v4665 = vadd.f32 %v4552, %v4664
      %4666 = vmatmul.f32.gmra.mxu0 %v3460
      %v4667 = vpop.f32.mrf.mxu0
      %v4668 = vadd.f32 %v4555, %v4667
      %4669 = vmatmul.f32.gmra.mxu0 %v3469
      %v4670 = vpop.f32.mrf.mxu0
      %v4671 = vadd.f32 %v4558, %v4670
      %4672 = vmatmul.f32.gmra.mxu0 %v3478
      %v4673 = vpop.f32.mrf.mxu0
      %v4674 = vadd.f32 %v4561, %v4673
      %4675 = vmatmul.f32.gmra.mxu0 %v3487
      %v4676 = vpop.f32.mrf.mxu0
      %v4677 = vadd.f32 %v4564, %v4676
      %4678 = vmatmul.f32.gmra.mxu0 %v3496
      %v4679 = vpop.f32.mrf.mxu0
      %v4680 = vadd.f32 %v4567, %v4679
      %4681 = vmatmul.f32.gmra.mxu0 %v3505
      %v4682 = vpop.f32.mrf.mxu0
      %v4683 = vadd.f32 %v4570, %v4682
      %4684 = vmatmul.f32.gmra.mxu0 %v3514
      %v4685 = vpop.f32.mrf.mxu0
      %v4686 = vadd.f32 %v4573, %v4685
      %4687 = vmatmul.f32.gmra.mxu0 %v3523
      %v4688 = vpop.f32.mrf.mxu0
      %v4689 = vadd.f32 %v4576, %v4688
      %4690 = vmatmul.f32.gmra.mxu0 %v3532
      %v4691 = vpop.f32.mrf.mxu0
      %v4692 = vadd.f32 %v4579, %v4691
      %4693 = vdwg.mxu0
      %v4694 = vadd.f32 %v4599, %v4602
      %v4695 = vadd.f32 %v4694, %v4605
      %v4696 = vadd.f32 %v4695, %v4608
      %v4697 = vadd.f32 %v4696, %v4611
      %v4698 = vadd.f32 %v4697, %v4614
      %v4699 = vadd.f32 %v4698, %v4617
      %v4700 = vadd.f32 %v4699, %v4620
      %v4701 = vadd.f32 %v4700, %v4623
      %v4702 = vadd.f32 %v4701, %v4626
      %v4703 = vadd.f32 %v4702, %v4629
      %v4704 = vadd.f32 %v4703, %v4632
      %v4705 = vadd.f32 %v4704, %v4635
      %v4706 = vadd.f32 %v4705, %v4638
      %v4707 = vadd.f32 %v4706, %v4641
      %v4708 = vadd.f32 %v4707, %v4644
      %v4709 = vadd.f32 %v4708, %v4647
      %v4710 = vadd.f32 %v4709, %v4650
      %v4711 = vadd.f32 %v4710, %v4653
      %v4712 = vadd.f32 %v4711, %v4656
      %v4713 = vadd.f32 %v4712, %v4659
      %v4714 = vadd.f32 %v4713, %v4662
      %v4715 = vadd.f32 %v4714, %v4665
      %v4716 = vadd.f32 %v4715, %v4668
      %v4717 = vadd.f32 %v4716, %v4671
      %v4718 = vadd.f32 %v4717, %v4674
      %v4719 = vadd.f32 %v4718, %v4677
      %v4720 = vadd.f32 %v4719, %v4680
      %v4721 = vadd.f32 %v4720, %v4683
      %v4722 = vadd.f32 %v4721, %v4686
      %v4723 = vadd.f32 %v4722, %v4689
      %v4724 = vadd.f32 %v4723, %v4692
      %v4725 = vrot.slane %v4724, 4
      %v4726 = vadd.f32 %v4724, %v4725
      %v4727 = vrot.slane %v4726, 2
      %v4728 = vadd.f32 %v4726, %v4727
      %v4729 = vrot.slane %v4728, 1
      %v4730 = vadd.f32 %v4728, %v4729
      %v4731 = vmul.f32 %v4730, %v2382
      %v4732 = vsub.f32 %v4599, %v4731
      %v4733 = vsub.f32 %v4602, %v4731
      %v4734 = vsub.f32 %v4605, %v4731
      %v4735 = vsub.f32 %v4608, %v4731
      %v4736 = vsub.f32 %v4611, %v4731
      %v4737 = vsub.f32 %v4614, %v4731
      %v4738 = vsub.f32 %v4617, %v4731
      %v4739 = vsub.f32 %v4620, %v4731
      %v4740 = vsub.f32 %v4623, %v4731
      %v4741 = vsub.f32 %v4626, %v4731
      %v4742 = vsub.f32 %v4629, %v4731
      %v4743 = vsub.f32 %v4632, %v4731
      %v4744 = vsub.f32 %v4635, %v4731
      %v4745 = vsub.f32 %v4638, %v4731
      %v4746 = vsub.f32 %v4641, %v4731
      %v4747 = vsub.f32 %v4644, %v4731
      %v4748 = vsub.f32 %v4647, %v4731
      %v4749 = vsub.f32 %v4650, %v4731
      %v4750 = vsub.f32 %v4653, %v4731
      %v4751 = vsub.f32 %v4656, %v4731
      %v4752 = vsub.f32 %v4659, %v4731
      %v4753 = vsub.f32 %v4662, %v4731
      %v4754 = vsub.f32 %v4665, %v4731
      %v4755 = vsub.f32 %v4668, %v4731
      %v4756 = vsub.f32 %v4671, %v4731
      %v4757 = vsub.f32 %v4674, %v4731
      %v4758 = vsub.f32 %v4677, %v4731
      %v4759 = vsub.f32 %v4680, %v4731
      %v4760 = vsub.f32 %v4683, %v4731
      %v4761 = vsub.f32 %v4686, %v4731
      %v4762 = vsub.f32 %v4689, %v4731
      %v4763 = vsub.f32 %v4692, %v4731
      %v4764 = vmul.f32 %v4732, %v4732
      %v4765 = vmul.f32 %v4733, %v4733
      %v4766 = vmul.f32 %v4734, %v4734
      %v4767 = vmul.f32 %v4735, %v4735
      %v4768 = vmul.f32 %v4736, %v4736
      %v4769 = vmul.f32 %v4737, %v4737
      %v4770 = vmul.f32 %v4738, %v4738
      %v4771 = vmul.f32 %v4739, %v4739
      %v4772 = vmul.f32 %v4740, %v4740
      %v4773 = vmul.f32 %v4741, %v4741
      %v4774 = vmul.f32 %v4742, %v4742
      %v4775 = vmul.f32 %v4743, %v4743
      %v4776 = vmul.f32 %v4744, %v4744
      %v4777 = vmul.f32 %v4745, %v4745
      %v4778 = vmul.f32 %v4746, %v4746
      %v4779 = vmul.f32 %v4747, %v4747
      %v4780 = vmul.f32 %v4748, %v4748
      %v4781 = vmul.f32 %v4749, %v4749
      %v4782 = vmul.f32 %v4750, %v4750
      %v4783 = vmul.f32 %v4751, %v4751
      %v4784 = vmul.f32 %v4752, %v4752
      %v4785 = vmul.f32 %v4753, %v4753
      %v4786 = vmul.f32 %v4754, %v4754
      %v4787 = vmul.f32 %v4755, %v4755
      %v4788 = vmul.f32 %v4756, %v4756
      %v4789 = vmul.f32 %v4757, %v4757
      %v4790 = vmul.f32 %v4758, %v4758
      %v4791 = vmul.f32 %v4759, %v4759
      %v4792 = vmul.f32 %v4760, %v4760
      %v4793 = vmul.f32 %v4761, %v4761
      %v4794 = vmul.f32 %v4762, %v4762
      %v4795 = vmul.f32 %v4763, %v4763
      %v4796 = vadd.f32 %v4764, %v4765
      %v4797 = vadd.f32 %v4796, %v4766
      %v4798 = vadd.f32 %v4797, %v4767
      %v4799 = vadd.f32 %v4798, %v4768
      %v4800 = vadd.f32 %v4799, %v4769
      %v4801 = vadd.f32 %v4800, %v4770
      %v4802 = vadd.f32 %v4801, %v4771
      %v4803 = vadd.f32 %v4802, %v4772
      %v4804 = vadd.f32 %v4803, %v4773
      %v4805 = vadd.f32 %v4804, %v4774
      %v4806 = vadd.f32 %v4805, %v4775
      %v4807 = vadd.f32 %v4806, %v4776
      %v4808 = vadd.f32 %v4807, %v4777
      %v4809 = vadd.f32 %v4808, %v4778
      %v4810 = vadd.f32 %v4809, %v4779
      %v4811 = vadd.f32 %v4810, %v4780
      %v4812 = vadd.f32 %v4811, %v4781
      %v4813 = vadd.f32 %v4812, %v4782
      %v4814 = vadd.f32 %v4813, %v4783
      %v4815 = vadd.f32 %v4814, %v4784
      %v4816 = vadd.f32 %v4815, %v4785
      %v4817 = vadd.f32 %v4816, %v4786
      %v4818 = vadd.f32 %v4817, %v4787
      %v4819 = vadd.f32 %v4818, %v4788
      %v4820 = vadd.f32 %v4819, %v4789
      %v4821 = vadd.f32 %v4820, %v4790
      %v4822 = vadd.f32 %v4821, %v4791
      %v4823 = vadd.f32 %v4822, %v4792
      %v4824 = vadd.f32 %v4823, %v4793
      %v4825 = vadd.f32 %v4824, %v4794
      %v4826 = vadd.f32 %v4825, %v4795
      %v4827 = vrot.slane %v4826, 4
      %v4828 = vadd.f32 %v4826, %v4827
      %v4829 = vrot.slane %v4828, 2
      %v4830 = vadd.f32 %v4828, %v4829
      %v4831 = vrot.slane %v4830, 1
      %v4832 = vadd.f32 %v4830, %v4831
      %v4833 = vmul.f32 %v4832, %v2382
      %v4834 = vadd.f32 %v4833, 1e-05
      %v4835 = vrsqrt.pop %v4834
      %v4836 = vmul.f32 %v4835, %v4834
      %v4837 = vmul.f32 %v4836, %v4835
      %v4838 = vmul.f32 0.5, %v4837
      %v4839 = vsub.f32 1.5, %v4838
      %v4840 = vmul.f32 %v4835, %v4839
      %vm4841 = vweird.f32 %v4834
      %vm4842 = vweird.f32 %v4835
      %vm4843 = vmor %vm4841, %vm4842
      %v4844 = vsel %vm4843, %v4835, %v4840
      %v4845 = vmul.f32 %v4732, %v4844
      %v4846 = vmul.f32 %v4733, %v4844
      %v4847 = vmul.f32 %v4734, %v4844
      %v4848 = vmul.f32 %v4735, %v4844
      %v4849 = vmul.f32 %v4736, %v4844
      %v4850 = vmul.f32 %v4737, %v4844
      %v4851 = vmul.f32 %v4738, %v4844
      %v4852 = vmul.f32 %v4739, %v4844
      %v4853 = vmul.f32 %v4740, %v4844
      %v4854 = vmul.f32 %v4741, %v4844
      %v4855 = vmul.f32 %v4742, %v4844
      %v4856 = vmul.f32 %v4743, %v4844
      %v4857 = vmul.f32 %v4744, %v4844
      %v4858 = vmul.f32 %v4745, %v4844
      %v4859 = vmul.f32 %v4746, %v4844
      %v4860 = vmul.f32 %v4747, %v4844
      %v4861 = vmul.f32 %v4748, %v4844
      %v4862 = vmul.f32 %v4749, %v4844
      %v4863 = vmul.f32 %v4750, %v4844
      %v4864 = vmul.f32 %v4751, %v4844
      %v4865 = vmul.f32 %v4752, %v4844
      %v4866 = vmul.f32 %v4753, %v4844
      %v4867 = vmul.f32 %v4754, %v4844
      %v4868 = vmul.f32 %v4755, %v4844
      %v4869 = vmul.f32 %v4756, %v4844
      %v4870 = vmul.f32 %v4757, %v4844
      %v4871 = vmul.f32 %v4758, %v4844
      %v4872 = vmul.f32 %v4759, %v4844
      %v4873 = vmul.f32 %v4760, %v4844
      %v4874 = vmul.f32 %v4761, %v4844
      %v4875 = vmul.f32 %v4762, %v4844
      %v4876 = vmul.f32 %v4763, %v4844
      %v4877 = vadd.f32 %v171, %v4845
      %v4878 = vadd.f32 %v172, %v4846
      %v4879 = vadd.f32 %v173, %v4847
      %v4880 = vadd.f32 %v174, %v4848
      %v4881 = vadd.f32 %v175, %v4849
      %v4882 = vadd.f32 %v176, %v4850
      %v4883 = vadd.f32 %v177, %v4851
      %v4884 = vadd.f32 %v178, %v4852
      %v4885 = vadd.f32 %v179, %v4853
      %v4886 = vadd.f32 %v180, %v4854
      %v4887 = vadd.f32 %v181, %v4855
      %v4888 = vadd.f32 %v182, %v4856
      %v4889 = vadd.f32 %v183, %v4857
      %v4890 = vadd.f32 %v184, %v4858
      %v4891 = vadd.f32 %v185, %v4859
      %v4892 = vadd.f32 %v186, %v4860
      %v4893 = vadd.f32 %v187, %v4861
      %v4894 = vadd.f32 %v188, %v4862
      %v4895 = vadd.f32 %v189, %v4863
      %v4896 = vadd.f32 %v190, %v4864
      %v4897 = vadd.f32 %v191, %v4865
      %v4898 = vadd.f32 %v192, %v4866
      %v4899 = vadd.f32 %v193, %v4867
      %v4900 = vadd.f32 %v194, %v4868
      %v4901 = vadd.f32 %v195, %v4869
      %v4902 = vadd.f32 %v196, %v4870
      %v4903 = vadd.f32 %v197, %v4871
      %v4904 = vadd.f32 %v198, %v4872
      %v4905 = vadd.f32 %v199, %v4873
      %v4906 = vadd.f32 %v200, %v4874
      %v4907 = vadd.f32 %v201, %v4875
      %v4908 = vadd.f32 %v202, %v4876
      %4909 = vst [vmem:[%s170] sm:$0xff] %v4877
      %4910 = vst [vmem:[%s170 + $0x8] sm:$0xff] %v4878
      %4911 = vst [vmem:[%s170 + $0x10] sm:$0xff] %v4879
      %4912 = vst [vmem:[%s170 + $0x18] sm:$0xff] %v4880
      %4913 = vst [vmem:[%s170 + $0x20] sm:$0xff] %v4881
      %4914 = vst [vmem:[%s170 + $0x28] sm:$0xff] %v4882
      %4915 = vst [vmem:[%s170 + $0x30] sm:$0xff] %v4883
      %4916 = vst [vmem:[%s170 + $0x38] sm:$0xff] %v4884
      %4917 = vst [vmem:[%s170 + $0x40] sm:$0xff] %v4885
      %4918 = vst [vmem:[%s170 + $0x48] sm:$0xff] %v4886
      %4919 = vst [vmem:[%s170 + $0x50] sm:$0xff] %v4887
      %4920 = vst [vmem:[%s170 + $0x58] sm:$0xff] %v4888
      %4921 = vst [vmem:[%s170 + $0x60] sm:$0xff] %v4889
      %4922 = vst [vmem:[%s170 + $0x68] sm:$0xff] %v4890
      %4923 = vst [vmem:[%s170 + $0x70] sm:$0xff] %v4891
      %4924 = vst [vmem:[%s170 + $0x78] sm:$0xff] %v4892
      %4925 = vst [vmem:[%s170 + $0x80] sm:$0xff] %v4893
      %4926 = vst [vmem:[%s170 + $0x88] sm:$0xff] %v4894
      %4927 = vst [vmem:[%s170 + $0x90] sm:$0xff] %v4895
      %4928 = vst [vmem:[%s170 + $0x98] sm:$0xff] %v4896
      %4929 = vst [vmem:[%s170 + $0xa0] sm:$0xff] %v4897
      %4930 = vst [vmem:[%s170 + $0xa8] sm:$0xff] %v4898
      %4931 = vst [vmem:[%s170 + $0xb0] sm:$0xff] %v4899
      %4932 = vst [vmem:[%s170 + $0xb8] sm:$0xff] %v4900
      %4933 = vst [vmem:[%s170 + $0xc0] sm:$0xff] %v4901
      %4934 = vst [vmem:[%s170 + $0xc8] sm:$0xff] %v4902
      %4935 = vst [vmem:[%s170 + $0xd0] sm:$0xff] %v4903
      %4936 = vst [vmem:[%s170 + $0xd8] sm:$0xff] %v4904
      %4937 = vst [vmem:[%s170 + $0xe0] sm:$0xff] %v4905
      %4938 = vst [vmem:[%s170 + $0xe8] sm:$0xff] %v4906
      %4939 = vst [vmem:[%s170 + $0xf0] sm:$0xff] %v4907
      %4940 = vst [vmem:[%s170 + $0xf8] sm:$0xff] %v4908
      %p4941 = scmp.lt.s32.totalorder %s14, 1
      %s4942 = scalar_select %p4941, %s14, 1
      %s4943 = smul.addr %s4942, 32
      %s4944 = smul.addr %s4943, 8
      %s4945 = scalar_lea.vmem %s3, %s4944
      // Predicated region
      $region33: #{resnet_block_nhwc.1} parent=31 // pred_check
        %p4946 = pneg %p100
      $region34: #{resnet_block_nhwc.1} parent=31 // pred_check_branch
        %4948 = sbr.rel (%p4946) target = $region36
      $region35: #{resnet_block_nhwc.1} parent=31 // pred_region
        _
      $region36: #{resnet_block_nhwc.1} parent=31 // pred_fallthru
        _
    $region32: #{resnet_block_nhwc.1} parent=5 // pred_fallthru
      _
    %p4949 = scmp.le.s32.totalorder 2, %s9
    // Predicated region
    $region37: #{resnet_block_nhwc.1} parent=5 // pred_check
      %p4950 = pneg %p4949
    $region38: #{resnet_block_nhwc.1} parent=5 // pred_check_branch
      %4952 = sbr.rel (%p4950) target = $region40
    $region39: #{resnet_block_nhwc.1} parent=5 // pred_region
      %s4953 = ssub.s32 %s9, 2
      // Predicated region
      $region41: #{resnet_block_nhwc.1} parent=39 // pred_check
        %p4954 = pneg %p106
      $region42: #{resnet_block_nhwc.1} parent=39 // pred_check_branch
        %4956 = sbr.rel (%p4954) target = $region44
      $region43: #{resnet_block_nhwc.1} parent=39 // pred_region
        %p4957 = scmp.lt.s32.totalorder %s15, 1
        %s4958 = scalar_select %p4957, %s15, 1
        %s4959 = smul.addr %s4958, 32
        %s4960 = smul.addr %s4959, 8
        %s4961 = scalar_lea.vmem %s3, %s4960
      $region44: #{resnet_block_nhwc.1} parent=39 // pred_fallthru
        _
    $region40: #{resnet_block_nhwc.1} parent=5 // pred_fallthru
      _
  $region6: #{resnet_block_nhwc.1} parent=0 // loop_footer
    %s13 = sadd.s32 1, %s9
  $region7: #{resnet_block_nhwc.1} parent=0 // loop_footer_branch
    %8 = sbr.rel target = $region3
  $region8: #{resnet_block_nhwc.1} parent=0 // loop_exit
    _

</llo_original>
